<compile_context>
chip_gen: v7x
topology: tpu7x:2x2x1
jax: 0.10.0
libtpu: 0.0.40
codegen_flags: <defaults>
</compile_context>

<pallas_src>
import functools

import jax
import jax.numpy as jnp
from jax import lax
from jax.experimental import pallas as pl
from jax.experimental.pallas import tpu as pltpu


# ----------------------------------------------------------------------------
# Fused Pallas kernel: multi-layer LSTM over the full sequence + final FC
# ----------------------------------------------------------------------------
def _decoder_kernel(x_ref, wih_ref, whh_ref, b_ref, fcw_ref, fcb_ref,
                    out_ref, hseq_ref, gin_ref):
    """Fused decoder hot path.

    x_ref    : (T, Bp, P)      time-major padded inputs (P == Hp == 128)
    wih_ref  : (L, P, 4*Hp)    input->gates weights (pre-transposed, gate-padded)
    whh_ref  : (L, Hp, 4*Hp)   hidden->gates weights
    b_ref    : (L, 1, 4*Hp)    combined biases (b_ih + b_hh), gate-padded
    fcw_ref  : (Hp, Vp)        FC weight (pre-transposed, padded)
    fcb_ref  : (1, Vp)         FC bias (padded)
    out_ref  : (T, Bp, Vp)     logits, time-major, lane-dense (Vp % 128 == 0)
    hseq_ref : (T, Bp, Hp)     VMEM scratch: current layer's per-step hidden states
    gin_ref  : (T, Bp, 4*Hp)   VMEM scratch: hoisted input-gate projections
    Gate order follows PyTorch: i, f, g, o (each occupying a 128-lane block).
    """
    T, Bp, P = x_ref.shape
    L, Hp, G = whh_ref.shape          # G = 4 * Hp
    Vp = out_ref.shape[-1]

    # Seed the "current layer input" buffer with the (padded) embeddings/features.
    hseq_ref[...] = x_ref[...]

    for l in range(L):                                 # static layer loop
        wih = wih_ref[l]                               # (P,  G)
        whh = whh_ref[l]                               # (Hp, G)
        b = b_ref[l]                                   # (1,  G)

        # --- hoisted input projection: one big MXU matmul for all timesteps ---
        x2d = hseq_ref[...].reshape(T * Bp, Hp)        # (T*Bp, Hp)  [Hp == P]
        gin_ref[...] = (
            jnp.dot(x2d, wih, preferred_element_type=jnp.float32) + b
        ).reshape(T, Bp, G)

        # --- serial recurrence, fully unrolled (T static & small) ---
        h = jnp.zeros((Bp, Hp), jnp.float32)
        c = jnp.zeros((Bp, Hp), jnp.float32)
        for t in range(T):
            gates = gin_ref[t] + jnp.dot(h, whh,
                                         preferred_element_type=jnp.float32)
            i_g = jax.nn.sigmoid(gates[:, 0 * Hp:1 * Hp])   # whole-vreg slices
            f_g = jax.nn.sigmoid(gates[:, 1 * Hp:2 * Hp])
            g_g = jnp.tanh(gates[:, 2 * Hp:3 * Hp])
            o_g = jax.nn.sigmoid(gates[:, 3 * Hp:4 * Hp])
            c = f_g * c + i_g * g_g
            h = o_g * jnp.tanh(c)
            hseq_ref[t] = h                            # becomes next layer's input

    # --- final FC: one matmul over all timesteps, lane-dense output store ---
    h2d = hseq_ref[...].reshape(T * Bp, Hp)
    logits = jnp.dot(h2d, fcw_ref[...],
                     preferred_element_type=jnp.float32) + fcb_ref[...]
    out_ref[...] = logits.reshape(T, Bp, Vp)


def fused_decoder(x_p, wih, whh, bias, fcw, fcb):
    T, Bp, P = x_p.shape
    L, Hp, G = whh.shape
    Vp = fcw.shape[1]
    return pl.pallas_call(
        _decoder_kernel,
        out_shape=jax.ShapeDtypeStruct((T, Bp, Vp), jnp.float32),
        grid=(1,),
        in_specs=[
            pl.BlockSpec((T, Bp, P), lambda i: (0, 0, 0)),
            pl.BlockSpec((L, P, G), lambda i: (0, 0, 0)),
            pl.BlockSpec((L, Hp, G), lambda i: (0, 0, 0)),
            pl.BlockSpec((L, 1, G), lambda i: (0, 0, 0)),
            pl.BlockSpec((Hp, Vp), lambda i: (0, 0)),
            pl.BlockSpec((1, Vp), lambda i: (0, 0)),
        ],
        out_specs=pl.BlockSpec((T, Bp, Vp), lambda i: (0, 0, 0)),
        scratch_shapes=[
            pltpu.VMEM((T, Bp, Hp), jnp.float32),      # hidden-sequence buffer
            pltpu.VMEM((T, Bp, G), jnp.float32),       # hoisted gate projections
        ],
        compiler_params=pltpu.CompilerParams(
            dimension_semantics=("arbitrary",)),
    )(x_p, wih, whh, bias, fcw, fcb)


# ----------------------------------------------------------------------------
# Parameters (canonical PyTorch layout) + padded/pre-transposed kernel params
# ----------------------------------------------------------------------------
def init_params(key, embed_dim, num_embeds, hidden_size, num_layers=2):
    ks = jax.random.split(key, 3 + 4 * num_layers)
    params = {}
    params["embedding"] = jax.random.normal(
        ks[0], (num_embeds, embed_dim), jnp.float32)

    scale = 1.0 / jnp.sqrt(jnp.float32(hidden_size))
    lstm = []
    for l in range(num_layers):
        in_dim = embed_dim if l == 0 else hidden_size
        k_ih, k_hh, k_bih, k_bhh = ks[1 + 4 * l: 1 + 4 * (l + 1)]
        lstm.append({
            "w_ih": jax.random.uniform(k_ih, (4 * hidden_size, in_dim),
                                       jnp.float32, -scale, scale),
            "w_hh": jax.random.uniform(k_hh, (4 * hidden_size, hidden_size),
                                       jnp.float32, -scale, scale),
            "b_ih": jax.random.uniform(k_bih, (4 * hidden_size,),
                                       jnp.float32, -scale, scale),
            "b_hh": jax.random.uniform(k_bhh, (4 * hidden_size,),
                                       jnp.float32, -scale, scale),
        })
    params["lstm"] = lstm

    params["fc_w"] = jax.random.uniform(
        ks[-2], (num_embeds, hidden_size), jnp.float32, -scale, scale)
    params["fc_b"] = jax.random.uniform(
        ks[-1], (num_embeds,), jnp.float32, -scale, scale)
    return params


def _round_up(x, m):
    return ((x + m - 1) // m) * m


def prepare_params(params, *, lane=128):
    """Pad + pre-transpose weights into the tile-aligned layout the kernel expects.

    Padding is with zeros, so padded lanes of h/c stay exactly zero through the
    recurrence and padded FC outputs are exactly zero -> bit-for-bit identical
    results on the real lanes.
    """
    emb = params["embedding"]
    E = emb.shape[1]
    H = params["lstm"][0]["w_hh"].shape[1]
    V = params["fc_w"].shape[0]
    Hp = _round_up(H, lane)
    P = max(Hp, _round_up(E, lane))       # stacked layers require P == Hp
    assert P == Hp, "TODO(synk): support embed_dim padding != hidden padding"
    Vp = _round_up(V, lane)

    wih_l, whh_l, b_l = [], [], []
    for layer in params["lstm"]:
        in_dim = layer["w_ih"].shape[1]
        wih_t = layer["w_ih"].T.reshape(in_dim, 4, H)          # gate-major cols
        whh_t = layer["w_hh"].T.reshape(H, 4, H)
        bias = (layer["b_ih"] + layer["b_hh"]).reshape(4, H)
        wih_p = jnp.zeros((P, 4, Hp), jnp.float32).at[:in_dim, :, :H].set(wih_t)
        whh_p = jnp.zeros((Hp, 4, Hp), jnp.float32).at[:H, :, :H].set(whh_t)
        b_p = jnp.zeros((4, Hp), jnp.float32).at[:, :H].set(bias)
        wih_l.append(wih_p.reshape(P, 4 * Hp))
        whh_l.append(whh_p.reshape(Hp, 4 * Hp))
        b_l.append(b_p.reshape(1, 4 * Hp))

    fcw_p = jnp.zeros((Hp, Vp), jnp.float32).at[:H, :V].set(params["fc_w"].T)
    fcb_p = jnp.zeros((1, Vp), jnp.float32).at[0, :V].set(params["fc_b"])

    return {
        "embedding": emb,
        "wih": jnp.stack(wih_l),          # (L, P, 4*Hp)
        "whh": jnp.stack(whh_l),          # (L, Hp, 4*Hp)
        "bias": jnp.stack(b_l),           # (L, 1, 4*Hp)
        "fcw": fcw_p,                     # (Hp, Vp)
        "fcb": fcb_p,                     # (1, Vp)
    }


# ----------------------------------------------------------------------------
# Decoder forward (arch 1, LSTM cell)
# ----------------------------------------------------------------------------
@jax.jit
def decoder_forward(prep, features, captions):
    """arch1_forward with cell_type='LSTM'.

    features : (B, E) float32
    captions : (B, L) int32
    returns  : (B, L, num_embeds) float32
    """
    B, E = features.shape
    V = prep["embedding"].shape[0]
    P = prep["wih"].shape[1]

    # Glue (plain JAX): embedding gather + concat of the image feature step.
    word_embeds = jnp.take(prep["embedding"], captions[:, :-1], axis=0)
    input_seq = jnp.concatenate([features[:, None, :], word_embeds], axis=1)
    T = input_seq.shape[1]

    # Time-major + pad batch to a full sublane group and embed dim to 128 lanes.
    x = jnp.transpose(input_seq, (1, 0, 2))                       # (T, B, E)
    Bp = _round_up(max(B, 8), 8)
    x_p = jnp.zeros((T, Bp, P), jnp.float32).at[:, :B, :E].set(x)

    out = fused_decoder(x_p, prep["wih"], prep["whh"], prep["bias"],
                        prep["fcw"], prep["fcb"])                 # (T, Bp, Vp)

    # Tiny transpose/slice on the logits only.
    return jnp.transpose(out, (1, 0, 2))[:B, :, :V]               # (B, T, V)


# ----------------------------------------------------------------------------
# Pure-JAX reference (numerical sanity check)
# ----------------------------------------------------------------------------
def decoder_reference(params, features, captions):
    B, E = features.shape
    word_embeds = jnp.take(params["embedding"], captions[:, :-1], axis=0)
    x = jnp.concatenate([features[:, None, :], word_embeds], axis=1)  # (B,T,E)
    for layer in params["lstm"]:
        H = layer["w_hh"].shape[1]
        wih, whh = layer["w_ih"].T, layer["w_hh"].T
        b = (layer["b_ih"] + layer["b_hh"])[None, :]

        def step(carry, x_t):
            h, c = carry
            g = x_t @ wih + h @ whh + b
            i = jax.nn.sigmoid(g[:, 0:H])
            f = jax.nn.sigmoid(g[:, H:2 * H])
            gg = jnp.tanh(g[:, 2 * H:3 * H])
            o = jax.nn.sigmoid(g[:, 3 * H:4 * H])
            c = f * c + i * gg
            h = o * jnp.tanh(c)
            return (h, c), h

        h0 = jnp.zeros((B, H), jnp.float32)
        c0 = jnp.zeros((B, H), jnp.float32)
        _, hs = lax.scan(step, (h0, c0), jnp.transpose(x, (1, 0, 2)))
        x = jnp.transpose(hs, (1, 0, 2))
    return x @ params["fc_w"].T + params["fc_b"]


if __name__ == "__main__":
    embed_dim = 32
    num_embeds = 64
    hidden_size = 32
    num_layers = 2
    B, L = 2, 8          # captions length 8 -> sequence length T = 8

    key = jax.random.PRNGKey(0)
    k_p, k_f, k_c = jax.random.split(key, 3)
    params = init_params(k_p, embed_dim, num_embeds, hidden_size, num_layers)
    prep = prepare_params(params)
    features = jax.random.normal(k_f, (B, embed_dim), jnp.float32)
    captions = jax.random.randint(k_c, (B, L), 0, num_embeds, jnp.int32)

    out = decoder_forward(prep, features, captions)
    out = jax.block_until_ready(out)

    ref = decoder_reference(params, features, captions)
    assert out.shape == (B, L, num_embeds)
    assert jnp.allclose(out, ref, atol=1e-4, rtol=1e-4)

    print("KERNEL_OK")
</pallas_src>

<mosaic_0001>
module attributes {stable_mosaic.version = 11 : i64} {
  func.func @_decoder_kernel(%arg0: i32, %arg1: memref<8x8x128xf32, #tpu.memory_space<vmem>>, %arg2: memref<2x128x512xf32, #tpu.memory_space<vmem>>, %arg3: memref<2x128x512xf32, #tpu.memory_space<vmem>>, %arg4: memref<2x1x512xf32, #tpu.memory_space<vmem>>, %arg5: memref<128x128xf32, #tpu.memory_space<vmem>>, %arg6: memref<1x128xf32, #tpu.memory_space<vmem>>, %arg7: memref<8x8x128xf32, #tpu.memory_space<vmem>>, %arg8: memref<8x8x128xf32, #tpu.memory_space<vmem>>, %arg9: memref<8x8x512xf32, #tpu.memory_space<vmem>>) attributes {dimension_semantics = [#tpu.dimension_semantics<arbitrary>], iteration_bounds = array<i64: 1>, scalar_prefetch = 0 : i64, scratch_operands = 2 : i64, tpu.core_type = #tpu.core_type<tc>, window_params = [{pipeline_mode = #tpu.pipeline_mode<synchronous>, transform_indices = @transform_0, window_bounds = array<i64: 8, 8, 128>}, {pipeline_mode = #tpu.pipeline_mode<synchronous>, transform_indices = @transform_1, window_bounds = array<i64: 2, 128, 512>}, {pipeline_mode = #tpu.pipeline_mode<synchronous>, transform_indices = @transform_2, window_bounds = array<i64: 2, 128, 512>}, {pipeline_mode = #tpu.pipeline_mode<synchronous>, transform_indices = @transform_3, window_bounds = array<i64: 2, 1, 512>}, {pipeline_mode = #tpu.pipeline_mode<synchronous>, transform_indices = @transform_4, window_bounds = array<i64: 128, 128>}, {pipeline_mode = #tpu.pipeline_mode<synchronous>, transform_indices = @transform_5, window_bounds = array<i64: 1, 128>}, {pipeline_mode = #tpu.pipeline_mode<synchronous>, transform_indices = @transform_6, window_bounds = array<i64: 8, 8, 128>}]} {
    %c0 = arith.constant 0 : index
    %c0_0 = arith.constant 0 : index
    %c0_1 = arith.constant 0 : index
    %0 = vector.load %arg1[%c0, %c0_0, %c0_1] : memref<8x8x128xf32, #tpu.memory_space<vmem>>, vector<8x8x128xf32>
    %c0_2 = arith.constant 0 : index
    %c0_3 = arith.constant 0 : index
    %c0_4 = arith.constant 0 : index
    %1 = vector.load %arg8[%c0_2, %c0_3, %c0_4] : memref<8x8x128xf32, #tpu.memory_space<vmem>>, vector<8x8x128xf32>
    tpu.vector_store %arg8[%c0_2, %c0_3, %c0_4], %0 {strides = array<i32>} : memref<8x8x128xf32, #tpu.memory_space<vmem>>, vector<8x8x128xf32>,
    %c0_5 = arith.constant 0 : index
    %c0_6 = arith.constant 0 : index
    %c0_7 = arith.constant 0 : index
    %2 = vector.load %arg2[%c0_5, %c0_6, %c0_7] : memref<2x128x512xf32, #tpu.memory_space<vmem>>, vector<1x128x512xf32>
    %3 = vector.shape_cast %2 : vector<1x128x512xf32> to vector<128x512xf32>
    %c0_8 = arith.constant 0 : index
    %c0_9 = arith.constant 0 : index
    %c0_10 = arith.constant 0 : index
    %4 = vector.load %arg3[%c0_8, %c0_9, %c0_10] : memref<2x128x512xf32, #tpu.memory_space<vmem>>, vector<1x128x512xf32>
    %5 = vector.shape_cast %4 : vector<1x128x512xf32> to vector<128x512xf32>
    %c0_11 = arith.constant 0 : index
    %c0_12 = arith.constant 0 : index
    %c0_13 = arith.constant 0 : index
    %6 = vector.load %arg4[%c0_11, %c0_12, %c0_13] : memref<2x1x512xf32, #tpu.memory_space<vmem>>, vector<1x1x512xf32>
    %7 = vector.shape_cast %6 : vector<1x1x512xf32> to vector<1x512xf32>
    %c0_14 = arith.constant 0 : index
    %c0_15 = arith.constant 0 : index
    %c0_16 = arith.constant 0 : index
    %8 = vector.load %arg8[%c0_14, %c0_15, %c0_16] : memref<8x8x128xf32, #tpu.memory_space<vmem>>, vector<8x8x128xf32>
    %9 = vector.shape_cast %8 : vector<8x8x128xf32> to vector<64x128xf32>
    %cst = arith.constant dense<0.000000e+00> : vector<64x512xf32>
    %10 = tpu.matmul %9, %3, %cst {dimension_numbers = #tpu.dot_dimension_numbers<[1], [0], [0], [1], [0, 0, 1, 1], [], []>} : vector<64x128xf32>, vector<128x512xf32>, vector<64x512xf32> -> vector<64x512xf32>
    %11 = vector.broadcast %7 : vector<1x512xf32> to vector<64x512xf32>
    %12 = arith.addf %10, %11 : vector<64x512xf32>
    %13 = vector.shape_cast %12 : vector<64x512xf32> to vector<8x8x512xf32>
    %c0_17 = arith.constant 0 : index
    %c0_18 = arith.constant 0 : index
    %c0_19 = arith.constant 0 : index
    %14 = vector.load %arg9[%c0_17, %c0_18, %c0_19] : memref<8x8x512xf32, #tpu.memory_space<vmem>>, vector<8x8x512xf32>
    tpu.vector_store %arg9[%c0_17, %c0_18, %c0_19], %13 {strides = array<i32>} : memref<8x8x512xf32, #tpu.memory_space<vmem>>, vector<8x8x512xf32>,
    %cst_20 = arith.constant 0.000000e+00 : f32
    %15 = vector.broadcast %cst_20 : f32 to vector<8x128xf32>
    %cst_21 = arith.constant 0.000000e+00 : f32
    %16 = vector.broadcast %cst_21 : f32 to vector<8x128xf32>
    %c0_22 = arith.constant 0 : index
    %c0_23 = arith.constant 0 : index
    %c0_24 = arith.constant 0 : index
    %17 = vector.load %arg9[%c0_22, %c0_23, %c0_24] : memref<8x8x512xf32, #tpu.memory_space<vmem>>, vector<1x8x512xf32>
    %18 = vector.shape_cast %17 : vector<1x8x512xf32> to vector<8x512xf32>
    %cst_25 = arith.constant dense<0.000000e+00> : vector<8x512xf32>
    %19 = tpu.matmul %15, %5, %cst_25 {dimension_numbers = #tpu.dot_dimension_numbers<[1], [0], [0], [1], [0, 0, 1, 1], [], []>} : vector<8x128xf32>, vector<128x512xf32>, vector<8x512xf32> -> vector<8x512xf32>
    %20 = arith.addf %18, %19 : vector<8x512xf32>
    %21 = vector.extract_strided_slice %20 {offsets = [0, 0], sizes = [8, 128], strides = [1, 1]} : vector<8x512xf32> to vector<8x128xf32>
    %22 = arith.negf %21 : vector<8x128xf32>
    %23 = math.exp %22 : vector<8x128xf32>
    %cst_26 = arith.constant 1.000000e+00 : f32
    %24 = vector.broadcast %cst_26 : f32 to vector<8x128xf32>
    %25 = arith.addf %24, %23 : vector<8x128xf32>
    %26 = arith.divf %24, %25 : vector<8x128xf32>
    %27 = vector.extract_strided_slice %20 {offsets = [0, 128], sizes = [8, 128], strides = [1, 1]} : vector<8x512xf32> to vector<8x128xf32>
    %28 = arith.negf %27 : vector<8x128xf32>
    %29 = math.exp %28 : vector<8x128xf32>
    %cst_27 = arith.constant 1.000000e+00 : f32
    %30 = vector.broadcast %cst_27 : f32 to vector<8x128xf32>
    %31 = arith.addf %30, %29 : vector<8x128xf32>
    %32 = arith.divf %30, %31 : vector<8x128xf32>
    %33 = vector.extract_strided_slice %20 {offsets = [0, 256], sizes = [8, 128], strides = [1, 1]} : vector<8x512xf32> to vector<8x128xf32>
    %34 = math.tanh %33 : vector<8x128xf32>
    %35 = vector.extract_strided_slice %20 {offsets = [0, 384], sizes = [8, 128], strides = [1, 1]} : vector<8x512xf32> to vector<8x128xf32>
    %36 = arith.negf %35 : vector<8x128xf32>
    %37 = math.exp %36 : vector<8x128xf32>
    %cst_28 = arith.constant 1.000000e+00 : f32
    %38 = vector.broadcast %cst_28 : f32 to vector<8x128xf32>
    %39 = arith.addf %38, %37 : vector<8x128xf32>
    %40 = arith.divf %38, %39 : vector<8x128xf32>
    %41 = arith.mulf %32, %16 : vector<8x128xf32>
    %42 = arith.mulf %26, %34 : vector<8x128xf32>
    %43 = arith.addf %41, %42 : vector<8x128xf32>
    %44 = math.tanh %43 : vector<8x128xf32>
    %45 = arith.mulf %40, %44 : vector<8x128xf32>
    %c0_29 = arith.constant 0 : index
    %c0_30 = arith.constant 0 : index
    %c0_31 = arith.constant 0 : index
    %46 = vector.load %arg8[%c0_29, %c0_30, %c0_31] : memref<8x8x128xf32, #tpu.memory_space<vmem>>, vector<1x8x128xf32>
    %47 = vector.shape_cast %46 : vector<1x8x128xf32> to vector<8x128xf32>
    %48 = vector.shape_cast %45 : vector<8x128xf32> to vector<1x8x128xf32>
    tpu.vector_store %arg8[%c0_29, %c0_30, %c0_31], %48 {strides = array<i32>} : memref<8x8x128xf32, #tpu.memory_space<vmem>>, vector<1x8x128xf32>,
    %c1 = arith.constant 1 : index
    %c0_32 = arith.constant 0 : index
    %c0_33 = arith.constant 0 : index
    %49 = vector.load %arg9[%c1, %c0_32, %c0_33] : memref<8x8x512xf32, #tpu.memory_space<vmem>>, vector<1x8x512xf32>
    %50 = vector.shape_cast %49 : vector<1x8x512xf32> to vector<8x512xf32>
    %cst_34 = arith.constant dense<0.000000e+00> : vector<8x512xf32>
    %51 = tpu.matmul %45, %5, %cst_34 {dimension_numbers = #tpu.dot_dimension_numbers<[1], [0], [0], [1], [0, 0, 1, 1], [], []>} : vector<8x128xf32>, vector<128x512xf32>, vector<8x512xf32> -> vector<8x512xf32>
    %52 = arith.addf %50, %51 : vector<8x512xf32>
    %53 = vector.extract_strided_slice %52 {offsets = [0, 0], sizes = [8, 128], strides = [1, 1]} : vector<8x512xf32> to vector<8x128xf32>
    %54 = arith.negf %53 : vector<8x128xf32>
    %55 = math.exp %54 : vector<8x128xf32>
    %cst_35 = arith.constant 1.000000e+00 : f32
    %56 = vector.broadcast %cst_35 : f32 to vector<8x128xf32>
    %57 = arith.addf %56, %55 : vector<8x128xf32>
    %58 = arith.divf %56, %57 : vector<8x128xf32>
    %59 = vector.extract_strided_slice %52 {offsets = [0, 128], sizes = [8, 128], strides = [1, 1]} : vector<8x512xf32> to vector<8x128xf32>
    %60 = arith.negf %59 : vector<8x128xf32>
    %61 = math.exp %60 : vector<8x128xf32>
    %cst_36 = arith.constant 1.000000e+00 : f32
    %62 = vector.broadcast %cst_36 : f32 to vector<8x128xf32>
    %63 = arith.addf %62, %61 : vector<8x128xf32>
    %64 = arith.divf %62, %63 : vector<8x128xf32>
    %65 = vector.extract_strided_slice %52 {offsets = [0, 256], sizes = [8, 128], strides = [1, 1]} : vector<8x512xf32> to vector<8x128xf32>
    %66 = math.tanh %65 : vector<8x128xf32>
    %67 = vector.extract_strided_slice %52 {offsets = [0, 384], sizes = [8, 128], strides = [1, 1]} : vector<8x512xf32> to vector<8x128xf32>
    %68 = arith.negf %67 : vector<8x128xf32>
    %69 = math.exp %68 : vector<8x128xf32>
    %cst_37 = arith.constant 1.000000e+00 : f32
    %70 = vector.broadcast %cst_37 : f32 to vector<8x128xf32>
    %71 = arith.addf %70, %69 : vector<8x128xf32>
    %72 = arith.divf %70, %71 : vector<8x128xf32>
    %73 = arith.mulf %64, %43 : vector<8x128xf32>
    %74 = arith.mulf %58, %66 : vector<8x128xf32>
    %75 = arith.addf %73, %74 : vector<8x128xf32>
    %76 = math.tanh %75 : vector<8x128xf32>
    %77 = arith.mulf %72, %76 : vector<8x128xf32>
    %c1_38 = arith.constant 1 : index
    %c0_39 = arith.constant 0 : index
    %c0_40 = arith.constant 0 : index
    %78 = vector.load %arg8[%c1_38, %c0_39, %c0_40] : memref<8x8x128xf32, #tpu.memory_space<vmem>>, vector<1x8x128xf32>
    %79 = vector.shape_cast %78 : vector<1x8x128xf32> to vector<8x128xf32>
    %80 = vector.shape_cast %77 : vector<8x128xf32> to vector<1x8x128xf32>
    tpu.vector_store %arg8[%c1_38, %c0_39, %c0_40], %80 {strides = array<i32>} : memref<8x8x128xf32, #tpu.memory_space<vmem>>, vector<1x8x128xf32>,
    %c2 = arith.constant 2 : index
    %c0_41 = arith.constant 0 : index
    %c0_42 = arith.constant 0 : index
    %81 = vector.load %arg9[%c2, %c0_41, %c0_42] : memref<8x8x512xf32, #tpu.memory_space<vmem>>, vector<1x8x512xf32>
    %82 = vector.shape_cast %81 : vector<1x8x512xf32> to vector<8x512xf32>
    %cst_43 = arith.constant dense<0.000000e+00> : vector<8x512xf32>
    %83 = tpu.matmul %77, %5, %cst_43 {dimension_numbers = #tpu.dot_dimension_numbers<[1], [0], [0], [1], [0, 0, 1, 1], [], []>} : vector<8x128xf32>, vector<128x512xf32>, vector<8x512xf32> -> vector<8x512xf32>
    %84 = arith.addf %82, %83 : vector<8x512xf32>
    %85 = vector.extract_strided_slice %84 {offsets = [0, 0], sizes = [8, 128], strides = [1, 1]} : vector<8x512xf32> to vector<8x128xf32>
    %86 = arith.negf %85 : vector<8x128xf32>
    %87 = math.exp %86 : vector<8x128xf32>
    %cst_44 = arith.constant 1.000000e+00 : f32
    %88 = vector.broadcast %cst_44 : f32 to vector<8x128xf32>
    %89 = arith.addf %88, %87 : vector<8x128xf32>
    %90 = arith.divf %88, %89 : vector<8x128xf32>
    %91 = vector.extract_strided_slice %84 {offsets = [0, 128], sizes = [8, 128], strides = [1, 1]} : vector<8x512xf32> to vector<8x128xf32>
    %92 = arith.negf %91 : vector<8x128xf32>
    %93 = math.exp %92 : vector<8x128xf32>
    %cst_45 = arith.constant 1.000000e+00 : f32
    %94 = vector.broadcast %cst_45 : f32 to vector<8x128xf32>
    %95 = arith.addf %94, %93 : vector<8x128xf32>
    %96 = arith.divf %94, %95 : vector<8x128xf32>
    %97 = vector.extract_strided_slice %84 {offsets = [0, 256], sizes = [8, 128], strides = [1, 1]} : vector<8x512xf32> to vector<8x128xf32>
    %98 = math.tanh %97 : vector<8x128xf32>
    %99 = vector.extract_strided_slice %84 {offsets = [0, 384], sizes = [8, 128], strides = [1, 1]} : vector<8x512xf32> to vector<8x128xf32>
    %100 = arith.negf %99 : vector<8x128xf32>
    %101 = math.exp %100 : vector<8x128xf32>
    %cst_46 = arith.constant 1.000000e+00 : f32
    %102 = vector.broadcast %cst_46 : f32 to vector<8x128xf32>
    %103 = arith.addf %102, %101 : vector<8x128xf32>
    %104 = arith.divf %102, %103 : vector<8x128xf32>
    %105 = arith.mulf %96, %75 : vector<8x128xf32>
    %106 = arith.mulf %90, %98 : vector<8x128xf32>
    %107 = arith.addf %105, %106 : vector<8x128xf32>
    %108 = math.tanh %107 : vector<8x128xf32>
    %109 = arith.mulf %104, %108 : vector<8x128xf32>
    %c2_47 = arith.constant 2 : index
    %c0_48 = arith.constant 0 : index
    %c0_49 = arith.constant 0 : index
    %110 = vector.load %arg8[%c2_47, %c0_48, %c0_49] : memref<8x8x128xf32, #tpu.memory_space<vmem>>, vector<1x8x128xf32>
    %111 = vector.shape_cast %110 : vector<1x8x128xf32> to vector<8x128xf32>
    %112 = vector.shape_cast %109 : vector<8x128xf32> to vector<1x8x128xf32>
    tpu.vector_store %arg8[%c2_47, %c0_48, %c0_49], %112 {strides = array<i32>} : memref<8x8x128xf32, #tpu.memory_space<vmem>>, vector<1x8x128xf32>,
    %c3 = arith.constant 3 : index
    %c0_50 = arith.constant 0 : index
    %c0_51 = arith.constant 0 : index
    %113 = vector.load %arg9[%c3, %c0_50, %c0_51] : memref<8x8x512xf32, #tpu.memory_space<vmem>>, vector<1x8x512xf32>
    %114 = vector.shape_cast %113 : vector<1x8x512xf32> to vector<8x512xf32>
    %cst_52 = arith.constant dense<0.000000e+00> : vector<8x512xf32>
    %115 = tpu.matmul %109, %5, %cst_52 {dimension_numbers = #tpu.dot_dimension_numbers<[1], [0], [0], [1], [0, 0, 1, 1], [], []>} : vector<8x128xf32>, vector<128x512xf32>, vector<8x512xf32> -> vector<8x512xf32>
    %116 = arith.addf %114, %115 : vector<8x512xf32>
    %117 = vector.extract_strided_slice %116 {offsets = [0, 0], sizes = [8, 128], strides = [1, 1]} : vector<8x512xf32> to vector<8x128xf32>
    %118 = arith.negf %117 : vector<8x128xf32>
    %119 = math.exp %118 : vector<8x128xf32>
    %cst_53 = arith.constant 1.000000e+00 : f32
    %120 = vector.broadcast %cst_53 : f32 to vector<8x128xf32>
    %121 = arith.addf %120, %119 : vector<8x128xf32>
    %122 = arith.divf %120, %121 : vector<8x128xf32>
    %123 = vector.extract_strided_slice %116 {offsets = [0, 128], sizes = [8, 128], strides = [1, 1]} : vector<8x512xf32> to vector<8x128xf32>
    %124 = arith.negf %123 : vector<8x128xf32>
    %125 = math.exp %124 : vector<8x128xf32>
    %cst_54 = arith.constant 1.000000e+00 : f32
    %126 = vector.broadcast %cst_54 : f32 to vector<8x128xf32>
    %127 = arith.addf %126, %125 : vector<8x128xf32>
    %128 = arith.divf %126, %127 : vector<8x128xf32>
    %129 = vector.extract_strided_slice %116 {offsets = [0, 256], sizes = [8, 128], strides = [1, 1]} : vector<8x512xf32> to vector<8x128xf32>
    %130 = math.tanh %129 : vector<8x128xf32>
    %131 = vector.extract_strided_slice %116 {offsets = [0, 384], sizes = [8, 128], strides = [1, 1]} : vector<8x512xf32> to vector<8x128xf32>
    %132 = arith.negf %131 : vector<8x128xf32>
    %133 = math.exp %132 : vector<8x128xf32>
    %cst_55 = arith.constant 1.000000e+00 : f32
    %134 = vector.broadcast %cst_55 : f32 to vector<8x128xf32>
    %135 = arith.addf %134, %133 : vector<8x128xf32>
    %136 = arith.divf %134, %135 : vector<8x128xf32>
    %137 = arith.mulf %128, %107 : vector<8x128xf32>
    %138 = arith.mulf %122, %130 : vector<8x128xf32>
    %139 = arith.addf %137, %138 : vector<8x128xf32>
    %140 = math.tanh %139 : vector<8x128xf32>
    %141 = arith.mulf %136, %140 : vector<8x128xf32>
    %c3_56 = arith.constant 3 : index
    %c0_57 = arith.constant 0 : index
    %c0_58 = arith.constant 0 : index
    %142 = vector.load %arg8[%c3_56, %c0_57, %c0_58] : memref<8x8x128xf32, #tpu.memory_space<vmem>>, vector<1x8x128xf32>
    %143 = vector.shape_cast %142 : vector<1x8x128xf32> to vector<8x128xf32>
    %144 = vector.shape_cast %141 : vector<8x128xf32> to vector<1x8x128xf32>
    tpu.vector_store %arg8[%c3_56, %c0_57, %c0_58], %144 {strides = array<i32>} : memref<8x8x128xf32, #tpu.memory_space<vmem>>, vector<1x8x128xf32>,
    %c4 = arith.constant 4 : index
    %c0_59 = arith.constant 0 : index
    %c0_60 = arith.constant 0 : index
    %145 = vector.load %arg9[%c4, %c0_59, %c0_60] : memref<8x8x512xf32, #tpu.memory_space<vmem>>, vector<1x8x512xf32>
    %146 = vector.shape_cast %145 : vector<1x8x512xf32> to vector<8x512xf32>
    %cst_61 = arith.constant dense<0.000000e+00> : vector<8x512xf32>
    %147 = tpu.matmul %141, %5, %cst_61 {dimension_numbers = #tpu.dot_dimension_numbers<[1], [0], [0], [1], [0, 0, 1, 1], [], []>} : vector<8x128xf32>, vector<128x512xf32>, vector<8x512xf32> -> vector<8x512xf32>
    %148 = arith.addf %146, %147 : vector<8x512xf32>
    %149 = vector.extract_strided_slice %148 {offsets = [0, 0], sizes = [8, 128], strides = [1, 1]} : vector<8x512xf32> to vector<8x128xf32>
    %150 = arith.negf %149 : vector<8x128xf32>
    %151 = math.exp %150 : vector<8x128xf32>
    %cst_62 = arith.constant 1.000000e+00 : f32
    %152 = vector.broadcast %cst_62 : f32 to vector<8x128xf32>
    %153 = arith.addf %152, %151 : vector<8x128xf32>
    %154 = arith.divf %152, %153 : vector<8x128xf32>
    %155 = vector.extract_strided_slice %148 {offsets = [0, 128], sizes = [8, 128], strides = [1, 1]} : vector<8x512xf32> to vector<8x128xf32>
    %156 = arith.negf %155 : vector<8x128xf32>
    %157 = math.exp %156 : vector<8x128xf32>
    %cst_63 = arith.constant 1.000000e+00 : f32
    %158 = vector.broadcast %cst_63 : f32 to vector<8x128xf32>
    %159 = arith.addf %158, %157 : vector<8x128xf32>
    %160 = arith.divf %158, %159 : vector<8x128xf32>
    %161 = vector.extract_strided_slice %148 {offsets = [0, 256], sizes = [8, 128], strides = [1, 1]} : vector<8x512xf32> to vector<8x128xf32>
    %162 = math.tanh %161 : vector<8x128xf32>
    %163 = vector.extract_strided_slice %148 {offsets = [0, 384], sizes = [8, 128], strides = [1, 1]} : vector<8x512xf32> to vector<8x128xf32>
    %164 = arith.negf %163 : vector<8x128xf32>
    %165 = math.exp %164 : vector<8x128xf32>
    %cst_64 = arith.constant 1.000000e+00 : f32
    %166 = vector.broadcast %cst_64 : f32 to vector<8x128xf32>
    %167 = arith.addf %166, %165 : vector<8x128xf32>
    %168 = arith.divf %166, %167 : vector<8x128xf32>
    %169 = arith.mulf %160, %139 : vector<8x128xf32>
    %170 = arith.mulf %154, %162 : vector<8x128xf32>
    %171 = arith.addf %169, %170 : vector<8x128xf32>
    %172 = math.tanh %171 : vector<8x128xf32>
    %173 = arith.mulf %168, %172 : vector<8x128xf32>
    %c4_65 = arith.constant 4 : index
    %c0_66 = arith.constant 0 : index
    %c0_67 = arith.constant 0 : index
    %174 = vector.load %arg8[%c4_65, %c0_66, %c0_67] : memref<8x8x128xf32, #tpu.memory_space<vmem>>, vector<1x8x128xf32>
    %175 = vector.shape_cast %174 : vector<1x8x128xf32> to vector<8x128xf32>
    %176 = vector.shape_cast %173 : vector<8x128xf32> to vector<1x8x128xf32>
    tpu.vector_store %arg8[%c4_65, %c0_66, %c0_67], %176 {strides = array<i32>} : memref<8x8x128xf32, #tpu.memory_space<vmem>>, vector<1x8x128xf32>,
    %c5 = arith.constant 5 : index
    %c0_68 = arith.constant 0 : index
    %c0_69 = arith.constant 0 : index
    %177 = vector.load %arg9[%c5, %c0_68, %c0_69] : memref<8x8x512xf32, #tpu.memory_space<vmem>>, vector<1x8x512xf32>
    %178 = vector.shape_cast %177 : vector<1x8x512xf32> to vector<8x512xf32>
    %cst_70 = arith.constant dense<0.000000e+00> : vector<8x512xf32>
    %179 = tpu.matmul %173, %5, %cst_70 {dimension_numbers = #tpu.dot_dimension_numbers<[1], [0], [0], [1], [0, 0, 1, 1], [], []>} : vector<8x128xf32>, vector<128x512xf32>, vector<8x512xf32> -> vector<8x512xf32>
    %180 = arith.addf %178, %179 : vector<8x512xf32>
    %181 = vector.extract_strided_slice %180 {offsets = [0, 0], sizes = [8, 128], strides = [1, 1]} : vector<8x512xf32> to vector<8x128xf32>
    %182 = arith.negf %181 : vector<8x128xf32>
    %183 = math.exp %182 : vector<8x128xf32>
    %cst_71 = arith.constant 1.000000e+00 : f32
    %184 = vector.broadcast %cst_71 : f32 to vector<8x128xf32>
    %185 = arith.addf %184, %183 : vector<8x128xf32>
    %186 = arith.divf %184, %185 : vector<8x128xf32>
    %187 = vector.extract_strided_slice %180 {offsets = [0, 128], sizes = [8, 128], strides = [1, 1]} : vector<8x512xf32> to vector<8x128xf32>
    %188 = arith.negf %187 : vector<8x128xf32>
    %189 = math.exp %188 : vector<8x128xf32>
    %cst_72 = arith.constant 1.000000e+00 : f32
    %190 = vector.broadcast %cst_72 : f32 to vector<8x128xf32>
    %191 = arith.addf %190, %189 : vector<8x128xf32>
    %192 = arith.divf %190, %191 : vector<8x128xf32>
    %193 = vector.extract_strided_slice %180 {offsets = [0, 256], sizes = [8, 128], strides = [1, 1]} : vector<8x512xf32> to vector<8x128xf32>
    %194 = math.tanh %193 : vector<8x128xf32>
    %195 = vector.extract_strided_slice %180 {offsets = [0, 384], sizes = [8, 128], strides = [1, 1]} : vector<8x512xf32> to vector<8x128xf32>
    %196 = arith.negf %195 : vector<8x128xf32>
    %197 = math.exp %196 : vector<8x128xf32>
    %cst_73 = arith.constant 1.000000e+00 : f32
    %198 = vector.broadcast %cst_73 : f32 to vector<8x128xf32>
    %199 = arith.addf %198, %197 : vector<8x128xf32>
    %200 = arith.divf %198, %199 : vector<8x128xf32>
    %201 = arith.mulf %192, %171 : vector<8x128xf32>
    %202 = arith.mulf %186, %194 : vector<8x128xf32>
    %203 = arith.addf %201, %202 : vector<8x128xf32>
    %204 = math.tanh %203 : vector<8x128xf32>
    %205 = arith.mulf %200, %204 : vector<8x128xf32>
    %c5_74 = arith.constant 5 : index
    %c0_75 = arith.constant 0 : index
    %c0_76 = arith.constant 0 : index
    %206 = vector.load %arg8[%c5_74, %c0_75, %c0_76] : memref<8x8x128xf32, #tpu.memory_space<vmem>>, vector<1x8x128xf32>
    %207 = vector.shape_cast %206 : vector<1x8x128xf32> to vector<8x128xf32>
    %208 = vector.shape_cast %205 : vector<8x128xf32> to vector<1x8x128xf32>
    tpu.vector_store %arg8[%c5_74, %c0_75, %c0_76], %208 {strides = array<i32>} : memref<8x8x128xf32, #tpu.memory_space<vmem>>, vector<1x8x128xf32>,
    %c6 = arith.constant 6 : index
    %c0_77 = arith.constant 0 : index
    %c0_78 = arith.constant 0 : index
    %209 = vector.load %arg9[%c6, %c0_77, %c0_78] : memref<8x8x512xf32, #tpu.memory_space<vmem>>, vector<1x8x512xf32>
    %210 = vector.shape_cast %209 : vector<1x8x512xf32> to vector<8x512xf32>
    %cst_79 = arith.constant dense<0.000000e+00> : vector<8x512xf32>
    %211 = tpu.matmul %205, %5, %cst_79 {dimension_numbers = #tpu.dot_dimension_numbers<[1], [0], [0], [1], [0, 0, 1, 1], [], []>} : vector<8x128xf32>, vector<128x512xf32>, vector<8x512xf32> -> vector<8x512xf32>
    %212 = arith.addf %210, %211 : vector<8x512xf32>
    %213 = vector.extract_strided_slice %212 {offsets = [0, 0], sizes = [8, 128], strides = [1, 1]} : vector<8x512xf32> to vector<8x128xf32>
    %214 = arith.negf %213 : vector<8x128xf32>
    %215 = math.exp %214 : vector<8x128xf32>
    %cst_80 = arith.constant 1.000000e+00 : f32
    %216 = vector.broadcast %cst_80 : f32 to vector<8x128xf32>
    %217 = arith.addf %216, %215 : vector<8x128xf32>
    %218 = arith.divf %216, %217 : vector<8x128xf32>
    %219 = vector.extract_strided_slice %212 {offsets = [0, 128], sizes = [8, 128], strides = [1, 1]} : vector<8x512xf32> to vector<8x128xf32>
    %220 = arith.negf %219 : vector<8x128xf32>
    %221 = math.exp %220 : vector<8x128xf32>
    %cst_81 = arith.constant 1.000000e+00 : f32
    %222 = vector.broadcast %cst_81 : f32 to vector<8x128xf32>
    %223 = arith.addf %222, %221 : vector<8x128xf32>
    %224 = arith.divf %222, %223 : vector<8x128xf32>
    %225 = vector.extract_strided_slice %212 {offsets = [0, 256], sizes = [8, 128], strides = [1, 1]} : vector<8x512xf32> to vector<8x128xf32>
    %226 = math.tanh %225 : vector<8x128xf32>
    %227 = vector.extract_strided_slice %212 {offsets = [0, 384], sizes = [8, 128], strides = [1, 1]} : vector<8x512xf32> to vector<8x128xf32>
    %228 = arith.negf %227 : vector<8x128xf32>
    %229 = math.exp %228 : vector<8x128xf32>
    %cst_82 = arith.constant 1.000000e+00 : f32
    %230 = vector.broadcast %cst_82 : f32 to vector<8x128xf32>
    %231 = arith.addf %230, %229 : vector<8x128xf32>
    %232 = arith.divf %230, %231 : vector<8x128xf32>
    %233 = arith.mulf %224, %203 : vector<8x128xf32>
    %234 = arith.mulf %218, %226 : vector<8x128xf32>
    %235 = arith.addf %233, %234 : vector<8x128xf32>
    %236 = math.tanh %235 : vector<8x128xf32>
    %237 = arith.mulf %232, %236 : vector<8x128xf32>
    %c6_83 = arith.constant 6 : index
    %c0_84 = arith.constant 0 : index
    %c0_85 = arith.constant 0 : index
    %238 = vector.load %arg8[%c6_83, %c0_84, %c0_85] : memref<8x8x128xf32, #tpu.memory_space<vmem>>, vector<1x8x128xf32>
    %239 = vector.shape_cast %238 : vector<1x8x128xf32> to vector<8x128xf32>
    %240 = vector.shape_cast %237 : vector<8x128xf32> to vector<1x8x128xf32>
    tpu.vector_store %arg8[%c6_83, %c0_84, %c0_85], %240 {strides = array<i32>} : memref<8x8x128xf32, #tpu.memory_space<vmem>>, vector<1x8x128xf32>,
    %c7 = arith.constant 7 : index
    %c0_86 = arith.constant 0 : index
    %c0_87 = arith.constant 0 : index
    %241 = vector.load %arg9[%c7, %c0_86, %c0_87] : memref<8x8x512xf32, #tpu.memory_space<vmem>>, vector<1x8x512xf32>
    %242 = vector.shape_cast %241 : vector<1x8x512xf32> to vector<8x512xf32>
    %cst_88 = arith.constant dense<0.000000e+00> : vector<8x512xf32>
    %243 = tpu.matmul %237, %5, %cst_88 {dimension_numbers = #tpu.dot_dimension_numbers<[1], [0], [0], [1], [0, 0, 1, 1], [], []>} : vector<8x128xf32>, vector<128x512xf32>, vector<8x512xf32> -> vector<8x512xf32>
    %244 = arith.addf %242, %243 : vector<8x512xf32>
    %245 = vector.extract_strided_slice %244 {offsets = [0, 0], sizes = [8, 128], strides = [1, 1]} : vector<8x512xf32> to vector<8x128xf32>
    %246 = arith.negf %245 : vector<8x128xf32>
    %247 = math.exp %246 : vector<8x128xf32>
    %cst_89 = arith.constant 1.000000e+00 : f32
    %248 = vector.broadcast %cst_89 : f32 to vector<8x128xf32>
    %249 = arith.addf %248, %247 : vector<8x128xf32>
    %250 = arith.divf %248, %249 : vector<8x128xf32>
    %251 = vector.extract_strided_slice %244 {offsets = [0, 128], sizes = [8, 128], strides = [1, 1]} : vector<8x512xf32> to vector<8x128xf32>
    %252 = arith.negf %251 : vector<8x128xf32>
    %253 = math.exp %252 : vector<8x128xf32>
    %cst_90 = arith.constant 1.000000e+00 : f32
    %254 = vector.broadcast %cst_90 : f32 to vector<8x128xf32>
    %255 = arith.addf %254, %253 : vector<8x128xf32>
    %256 = arith.divf %254, %255 : vector<8x128xf32>
    %257 = vector.extract_strided_slice %244 {offsets = [0, 256], sizes = [8, 128], strides = [1, 1]} : vector<8x512xf32> to vector<8x128xf32>
    %258 = math.tanh %257 : vector<8x128xf32>
    %259 = vector.extract_strided_slice %244 {offsets = [0, 384], sizes = [8, 128], strides = [1, 1]} : vector<8x512xf32> to vector<8x128xf32>
    %260 = arith.negf %259 : vector<8x128xf32>
    %261 = math.exp %260 : vector<8x128xf32>
    %cst_91 = arith.constant 1.000000e+00 : f32
    %262 = vector.broadcast %cst_91 : f32 to vector<8x128xf32>
    %263 = arith.addf %262, %261 : vector<8x128xf32>
    %264 = arith.divf %262, %263 : vector<8x128xf32>
    %265 = arith.mulf %256, %235 : vector<8x128xf32>
    %266 = arith.mulf %250, %258 : vector<8x128xf32>
    %267 = arith.addf %265, %266 : vector<8x128xf32>
    %268 = math.tanh %267 : vector<8x128xf32>
    %269 = arith.mulf %264, %268 : vector<8x128xf32>
    %c7_92 = arith.constant 7 : index
    %c0_93 = arith.constant 0 : index
    %c0_94 = arith.constant 0 : index
    %270 = vector.load %arg8[%c7_92, %c0_93, %c0_94] : memref<8x8x128xf32, #tpu.memory_space<vmem>>, vector<1x8x128xf32>
    %271 = vector.shape_cast %270 : vector<1x8x128xf32> to vector<8x128xf32>
    %272 = vector.shape_cast %269 : vector<8x128xf32> to vector<1x8x128xf32>
    tpu.vector_store %arg8[%c7_92, %c0_93, %c0_94], %272 {strides = array<i32>} : memref<8x8x128xf32, #tpu.memory_space<vmem>>, vector<1x8x128xf32>,
    %c1_95 = arith.constant 1 : index
    %c0_96 = arith.constant 0 : index
    %c0_97 = arith.constant 0 : index
    %273 = vector.load %arg2[%c1_95, %c0_96, %c0_97] : memref<2x128x512xf32, #tpu.memory_space<vmem>>, vector<1x128x512xf32>
    %274 = vector.shape_cast %273 : vector<1x128x512xf32> to vector<128x512xf32>
    %c1_98 = arith.constant 1 : index
    %c0_99 = arith.constant 0 : index
    %c0_100 = arith.constant 0 : index
    %275 = vector.load %arg3[%c1_98, %c0_99, %c0_100] : memref<2x128x512xf32, #tpu.memory_space<vmem>>, vector<1x128x512xf32>
    %276 = vector.shape_cast %275 : vector<1x128x512xf32> to vector<128x512xf32>
    %c1_101 = arith.constant 1 : index
    %c0_102 = arith.constant 0 : index
    %c0_103 = arith.constant 0 : index
    %277 = vector.load %arg4[%c1_101, %c0_102, %c0_103] : memref<2x1x512xf32, #tpu.memory_space<vmem>>, vector<1x1x512xf32>
    %278 = vector.shape_cast %277 : vector<1x1x512xf32> to vector<1x512xf32>
    %c0_104 = arith.constant 0 : index
    %c0_105 = arith.constant 0 : index
    %c0_106 = arith.constant 0 : index
    %279 = vector.load %arg8[%c0_104, %c0_105, %c0_106] : memref<8x8x128xf32, #tpu.memory_space<vmem>>, vector<8x8x128xf32>
    %280 = vector.shape_cast %279 : vector<8x8x128xf32> to vector<64x128xf32>
    %cst_107 = arith.constant dense<0.000000e+00> : vector<64x512xf32>
    %281 = tpu.matmul %280, %274, %cst_107 {dimension_numbers = #tpu.dot_dimension_numbers<[1], [0], [0], [1], [0, 0, 1, 1], [], []>} : vector<64x128xf32>, vector<128x512xf32>, vector<64x512xf32> -> vector<64x512xf32>
    %282 = vector.broadcast %278 : vector<1x512xf32> to vector<64x512xf32>
    %283 = arith.addf %281, %282 : vector<64x512xf32>
    %284 = vector.shape_cast %283 : vector<64x512xf32> to vector<8x8x512xf32>
    %c0_108 = arith.constant 0 : index
    %c0_109 = arith.constant 0 : index
    %c0_110 = arith.constant 0 : index
    %285 = vector.load %arg9[%c0_108, %c0_109, %c0_110] : memref<8x8x512xf32, #tpu.memory_space<vmem>>, vector<8x8x512xf32>
    tpu.vector_store %arg9[%c0_108, %c0_109, %c0_110], %284 {strides = array<i32>} : memref<8x8x512xf32, #tpu.memory_space<vmem>>, vector<8x8x512xf32>,
    %cst_111 = arith.constant 0.000000e+00 : f32
    %286 = vector.broadcast %cst_111 : f32 to vector<8x128xf32>
    %cst_112 = arith.constant 0.000000e+00 : f32
    %287 = vector.broadcast %cst_112 : f32 to vector<8x128xf32>
    %c0_113 = arith.constant 0 : index
    %c0_114 = arith.constant 0 : index
    %c0_115 = arith.constant 0 : index
    %288 = vector.load %arg9[%c0_113, %c0_114, %c0_115] : memref<8x8x512xf32, #tpu.memory_space<vmem>>, vector<1x8x512xf32>
    %289 = vector.shape_cast %288 : vector<1x8x512xf32> to vector<8x512xf32>
    %cst_116 = arith.constant dense<0.000000e+00> : vector<8x512xf32>
    %290 = tpu.matmul %286, %276, %cst_116 {dimension_numbers = #tpu.dot_dimension_numbers<[1], [0], [0], [1], [0, 0, 1, 1], [], []>} : vector<8x128xf32>, vector<128x512xf32>, vector<8x512xf32> -> vector<8x512xf32>
    %291 = arith.addf %289, %290 : vector<8x512xf32>
    %292 = vector.extract_strided_slice %291 {offsets = [0, 0], sizes = [8, 128], strides = [1, 1]} : vector<8x512xf32> to vector<8x128xf32>
    %293 = arith.negf %292 : vector<8x128xf32>
    %294 = math.exp %293 : vector<8x128xf32>
    %cst_117 = arith.constant 1.000000e+00 : f32
    %295 = vector.broadcast %cst_117 : f32 to vector<8x128xf32>
    %296 = arith.addf %295, %294 : vector<8x128xf32>
    %297 = arith.divf %295, %296 : vector<8x128xf32>
    %298 = vector.extract_strided_slice %291 {offsets = [0, 128], sizes = [8, 128], strides = [1, 1]} : vector<8x512xf32> to vector<8x128xf32>
    %299 = arith.negf %298 : vector<8x128xf32>
    %300 = math.exp %299 : vector<8x128xf32>
    %cst_118 = arith.constant 1.000000e+00 : f32
    %301 = vector.broadcast %cst_118 : f32 to vector<8x128xf32>
    %302 = arith.addf %301, %300 : vector<8x128xf32>
    %303 = arith.divf %301, %302 : vector<8x128xf32>
    %304 = vector.extract_strided_slice %291 {offsets = [0, 256], sizes = [8, 128], strides = [1, 1]} : vector<8x512xf32> to vector<8x128xf32>
    %305 = math.tanh %304 : vector<8x128xf32>
    %306 = vector.extract_strided_slice %291 {offsets = [0, 384], sizes = [8, 128], strides = [1, 1]} : vector<8x512xf32> to vector<8x128xf32>
    %307 = arith.negf %306 : vector<8x128xf32>
    %308 = math.exp %307 : vector<8x128xf32>
    %cst_119 = arith.constant 1.000000e+00 : f32
    %309 = vector.broadcast %cst_119 : f32 to vector<8x128xf32>
    %310 = arith.addf %309, %308 : vector<8x128xf32>
    %311 = arith.divf %309, %310 : vector<8x128xf32>
    %312 = arith.mulf %303, %287 : vector<8x128xf32>
    %313 = arith.mulf %297, %305 : vector<8x128xf32>
    %314 = arith.addf %312, %313 : vector<8x128xf32>
    %315 = math.tanh %314 : vector<8x128xf32>
    %316 = arith.mulf %311, %315 : vector<8x128xf32>
    %c0_120 = arith.constant 0 : index
    %c0_121 = arith.constant 0 : index
    %c0_122 = arith.constant 0 : index
    %317 = vector.load %arg8[%c0_120, %c0_121, %c0_122] : memref<8x8x128xf32, #tpu.memory_space<vmem>>, vector<1x8x128xf32>
    %318 = vector.shape_cast %317 : vector<1x8x128xf32> to vector<8x128xf32>
    %319 = vector.shape_cast %316 : vector<8x128xf32> to vector<1x8x128xf32>
    tpu.vector_store %arg8[%c0_120, %c0_121, %c0_122], %319 {strides = array<i32>} : memref<8x8x128xf32, #tpu.memory_space<vmem>>, vector<1x8x128xf32>,
    %c1_123 = arith.constant 1 : index
    %c0_124 = arith.constant 0 : index
    %c0_125 = arith.constant 0 : index
    %320 = vector.load %arg9[%c1_123, %c0_124, %c0_125] : memref<8x8x512xf32, #tpu.memory_space<vmem>>, vector<1x8x512xf32>
    %321 = vector.shape_cast %320 : vector<1x8x512xf32> to vector<8x512xf32>
    %cst_126 = arith.constant dense<0.000000e+00> : vector<8x512xf32>
    %322 = tpu.matmul %316, %276, %cst_126 {dimension_numbers = #tpu.dot_dimension_numbers<[1], [0], [0], [1], [0, 0, 1, 1], [], []>} : vector<8x128xf32>, vector<128x512xf32>, vector<8x512xf32> -> vector<8x512xf32>
    %323 = arith.addf %321, %322 : vector<8x512xf32>
    %324 = vector.extract_strided_slice %323 {offsets = [0, 0], sizes = [8, 128], strides = [1, 1]} : vector<8x512xf32> to vector<8x128xf32>
    %325 = arith.negf %324 : vector<8x128xf32>
    %326 = math.exp %325 : vector<8x128xf32>
    %cst_127 = arith.constant 1.000000e+00 : f32
    %327 = vector.broadcast %cst_127 : f32 to vector<8x128xf32>
    %328 = arith.addf %327, %326 : vector<8x128xf32>
    %329 = arith.divf %327, %328 : vector<8x128xf32>
    %330 = vector.extract_strided_slice %323 {offsets = [0, 128], sizes = [8, 128], strides = [1, 1]} : vector<8x512xf32> to vector<8x128xf32>
    %331 = arith.negf %330 : vector<8x128xf32>
    %332 = math.exp %331 : vector<8x128xf32>
    %cst_128 = arith.constant 1.000000e+00 : f32
    %333 = vector.broadcast %cst_128 : f32 to vector<8x128xf32>
    %334 = arith.addf %333, %332 : vector<8x128xf32>
    %335 = arith.divf %333, %334 : vector<8x128xf32>
    %336 = vector.extract_strided_slice %323 {offsets = [0, 256], sizes = [8, 128], strides = [1, 1]} : vector<8x512xf32> to vector<8x128xf32>
    %337 = math.tanh %336 : vector<8x128xf32>
    %338 = vector.extract_strided_slice %323 {offsets = [0, 384], sizes = [8, 128], strides = [1, 1]} : vector<8x512xf32> to vector<8x128xf32>
    %339 = arith.negf %338 : vector<8x128xf32>
    %340 = math.exp %339 : vector<8x128xf32>
    %cst_129 = arith.constant 1.000000e+00 : f32
    %341 = vector.broadcast %cst_129 : f32 to vector<8x128xf32>
    %342 = arith.addf %341, %340 : vector<8x128xf32>
    %343 = arith.divf %341, %342 : vector<8x128xf32>
    %344 = arith.mulf %335, %314 : vector<8x128xf32>
    %345 = arith.mulf %329, %337 : vector<8x128xf32>
    %346 = arith.addf %344, %345 : vector<8x128xf32>
    %347 = math.tanh %346 : vector<8x128xf32>
    %348 = arith.mulf %343, %347 : vector<8x128xf32>
    %c1_130 = arith.constant 1 : index
    %c0_131 = arith.constant 0 : index
    %c0_132 = arith.constant 0 : index
    %349 = vector.load %arg8[%c1_130, %c0_131, %c0_132] : memref<8x8x128xf32, #tpu.memory_space<vmem>>, vector<1x8x128xf32>
    %350 = vector.shape_cast %349 : vector<1x8x128xf32> to vector<8x128xf32>
    %351 = vector.shape_cast %348 : vector<8x128xf32> to vector<1x8x128xf32>
    tpu.vector_store %arg8[%c1_130, %c0_131, %c0_132], %351 {strides = array<i32>} : memref<8x8x128xf32, #tpu.memory_space<vmem>>, vector<1x8x128xf32>,
    %c2_133 = arith.constant 2 : index
    %c0_134 = arith.constant 0 : index
    %c0_135 = arith.constant 0 : index
    %352 = vector.load %arg9[%c2_133, %c0_134, %c0_135] : memref<8x8x512xf32, #tpu.memory_space<vmem>>, vector<1x8x512xf32>
    %353 = vector.shape_cast %352 : vector<1x8x512xf32> to vector<8x512xf32>
    %cst_136 = arith.constant dense<0.000000e+00> : vector<8x512xf32>
    %354 = tpu.matmul %348, %276, %cst_136 {dimension_numbers = #tpu.dot_dimension_numbers<[1], [0], [0], [1], [0, 0, 1, 1], [], []>} : vector<8x128xf32>, vector<128x512xf32>, vector<8x512xf32> -> vector<8x512xf32>
    %355 = arith.addf %353, %354 : vector<8x512xf32>
    %356 = vector.extract_strided_slice %355 {offsets = [0, 0], sizes = [8, 128], strides = [1, 1]} : vector<8x512xf32> to vector<8x128xf32>
    %357 = arith.negf %356 : vector<8x128xf32>
    %358 = math.exp %357 : vector<8x128xf32>
    %cst_137 = arith.constant 1.000000e+00 : f32
    %359 = vector.broadcast %cst_137 : f32 to vector<8x128xf32>
    %360 = arith.addf %359, %358 : vector<8x128xf32>
    %361 = arith.divf %359, %360 : vector<8x128xf32>
    %362 = vector.extract_strided_slice %355 {offsets = [0, 128], sizes = [8, 128], strides = [1, 1]} : vector<8x512xf32> to vector<8x128xf32>
    %363 = arith.negf %362 : vector<8x128xf32>
    %364 = math.exp %363 : vector<8x128xf32>
    %cst_138 = arith.constant 1.000000e+00 : f32
    %365 = vector.broadcast %cst_138 : f32 to vector<8x128xf32>
    %366 = arith.addf %365, %364 : vector<8x128xf32>
    %367 = arith.divf %365, %366 : vector<8x128xf32>
    %368 = vector.extract_strided_slice %355 {offsets = [0, 256], sizes = [8, 128], strides = [1, 1]} : vector<8x512xf32> to vector<8x128xf32>
    %369 = math.tanh %368 : vector<8x128xf32>
    %370 = vector.extract_strided_slice %355 {offsets = [0, 384], sizes = [8, 128], strides = [1, 1]} : vector<8x512xf32> to vector<8x128xf32>
    %371 = arith.negf %370 : vector<8x128xf32>
    %372 = math.exp %371 : vector<8x128xf32>
    %cst_139 = arith.constant 1.000000e+00 : f32
    %373 = vector.broadcast %cst_139 : f32 to vector<8x128xf32>
    %374 = arith.addf %373, %372 : vector<8x128xf32>
    %375 = arith.divf %373, %374 : vector<8x128xf32>
    %376 = arith.mulf %367, %346 : vector<8x128xf32>
    %377 = arith.mulf %361, %369 : vector<8x128xf32>
    %378 = arith.addf %376, %377 : vector<8x128xf32>
    %379 = math.tanh %378 : vector<8x128xf32>
    %380 = arith.mulf %375, %379 : vector<8x128xf32>
    %c2_140 = arith.constant 2 : index
    %c0_141 = arith.constant 0 : index
    %c0_142 = arith.constant 0 : index
    %381 = vector.load %arg8[%c2_140, %c0_141, %c0_142] : memref<8x8x128xf32, #tpu.memory_space<vmem>>, vector<1x8x128xf32>
    %382 = vector.shape_cast %381 : vector<1x8x128xf32> to vector<8x128xf32>
    %383 = vector.shape_cast %380 : vector<8x128xf32> to vector<1x8x128xf32>
    tpu.vector_store %arg8[%c2_140, %c0_141, %c0_142], %383 {strides = array<i32>} : memref<8x8x128xf32, #tpu.memory_space<vmem>>, vector<1x8x128xf32>,
    %c3_143 = arith.constant 3 : index
    %c0_144 = arith.constant 0 : index
    %c0_145 = arith.constant 0 : index
    %384 = vector.load %arg9[%c3_143, %c0_144, %c0_145] : memref<8x8x512xf32, #tpu.memory_space<vmem>>, vector<1x8x512xf32>
    %385 = vector.shape_cast %384 : vector<1x8x512xf32> to vector<8x512xf32>
    %cst_146 = arith.constant dense<0.000000e+00> : vector<8x512xf32>
    %386 = tpu.matmul %380, %276, %cst_146 {dimension_numbers = #tpu.dot_dimension_numbers<[1], [0], [0], [1], [0, 0, 1, 1], [], []>} : vector<8x128xf32>, vector<128x512xf32>, vector<8x512xf32> -> vector<8x512xf32>
    %387 = arith.addf %385, %386 : vector<8x512xf32>
    %388 = vector.extract_strided_slice %387 {offsets = [0, 0], sizes = [8, 128], strides = [1, 1]} : vector<8x512xf32> to vector<8x128xf32>
    %389 = arith.negf %388 : vector<8x128xf32>
    %390 = math.exp %389 : vector<8x128xf32>
    %cst_147 = arith.constant 1.000000e+00 : f32
    %391 = vector.broadcast %cst_147 : f32 to vector<8x128xf32>
    %392 = arith.addf %391, %390 : vector<8x128xf32>
    %393 = arith.divf %391, %392 : vector<8x128xf32>
    %394 = vector.extract_strided_slice %387 {offsets = [0, 128], sizes = [8, 128], strides = [1, 1]} : vector<8x512xf32> to vector<8x128xf32>
    %395 = arith.negf %394 : vector<8x128xf32>
    %396 = math.exp %395 : vector<8x128xf32>
    %cst_148 = arith.constant 1.000000e+00 : f32
    %397 = vector.broadcast %cst_148 : f32 to vector<8x128xf32>
    %398 = arith.addf %397, %396 : vector<8x128xf32>
    %399 = arith.divf %397, %398 : vector<8x128xf32>
    %400 = vector.extract_strided_slice %387 {offsets = [0, 256], sizes = [8, 128], strides = [1, 1]} : vector<8x512xf32> to vector<8x128xf32>
    %401 = math.tanh %400 : vector<8x128xf32>
    %402 = vector.extract_strided_slice %387 {offsets = [0, 384], sizes = [8, 128], strides = [1, 1]} : vector<8x512xf32> to vector<8x128xf32>
    %403 = arith.negf %402 : vector<8x128xf32>
    %404 = math.exp %403 : vector<8x128xf32>
    %cst_149 = arith.constant 1.000000e+00 : f32
    %405 = vector.broadcast %cst_149 : f32 to vector<8x128xf32>
    %406 = arith.addf %405, %404 : vector<8x128xf32>
    %407 = arith.divf %405, %406 : vector<8x128xf32>
    %408 = arith.mulf %399, %378 : vector<8x128xf32>
    %409 = arith.mulf %393, %401 : vector<8x128xf32>
    %410 = arith.addf %408, %409 : vector<8x128xf32>
    %411 = math.tanh %410 : vector<8x128xf32>
    %412 = arith.mulf %407, %411 : vector<8x128xf32>
    %c3_150 = arith.constant 3 : index
    %c0_151 = arith.constant 0 : index
    %c0_152 = arith.constant 0 : index
    %413 = vector.load %arg8[%c3_150, %c0_151, %c0_152] : memref<8x8x128xf32, #tpu.memory_space<vmem>>, vector<1x8x128xf32>
    %414 = vector.shape_cast %413 : vector<1x8x128xf32> to vector<8x128xf32>
    %415 = vector.shape_cast %412 : vector<8x128xf32> to vector<1x8x128xf32>
    tpu.vector_store %arg8[%c3_150, %c0_151, %c0_152], %415 {strides = array<i32>} : memref<8x8x128xf32, #tpu.memory_space<vmem>>, vector<1x8x128xf32>,
    %c4_153 = arith.constant 4 : index
    %c0_154 = arith.constant 0 : index
    %c0_155 = arith.constant 0 : index
    %416 = vector.load %arg9[%c4_153, %c0_154, %c0_155] : memref<8x8x512xf32, #tpu.memory_space<vmem>>, vector<1x8x512xf32>
    %417 = vector.shape_cast %416 : vector<1x8x512xf32> to vector<8x512xf32>
    %cst_156 = arith.constant dense<0.000000e+00> : vector<8x512xf32>
    %418 = tpu.matmul %412, %276, %cst_156 {dimension_numbers = #tpu.dot_dimension_numbers<[1], [0], [0], [1], [0, 0, 1, 1], [], []>} : vector<8x128xf32>, vector<128x512xf32>, vector<8x512xf32> -> vector<8x512xf32>
    %419 = arith.addf %417, %418 : vector<8x512xf32>
    %420 = vector.extract_strided_slice %419 {offsets = [0, 0], sizes = [8, 128], strides = [1, 1]} : vector<8x512xf32> to vector<8x128xf32>
    %421 = arith.negf %420 : vector<8x128xf32>
    %422 = math.exp %421 : vector<8x128xf32>
    %cst_157 = arith.constant 1.000000e+00 : f32
    %423 = vector.broadcast %cst_157 : f32 to vector<8x128xf32>
    %424 = arith.addf %423, %422 : vector<8x128xf32>
    %425 = arith.divf %423, %424 : vector<8x128xf32>
    %426 = vector.extract_strided_slice %419 {offsets = [0, 128], sizes = [8, 128], strides = [1, 1]} : vector<8x512xf32> to vector<8x128xf32>
    %427 = arith.negf %426 : vector<8x128xf32>
    %428 = math.exp %427 : vector<8x128xf32>
    %cst_158 = arith.constant 1.000000e+00 : f32
    %429 = vector.broadcast %cst_158 : f32 to vector<8x128xf32>
    %430 = arith.addf %429, %428 : vector<8x128xf32>
    %431 = arith.divf %429, %430 : vector<8x128xf32>
    %432 = vector.extract_strided_slice %419 {offsets = [0, 256], sizes = [8, 128], strides = [1, 1]} : vector<8x512xf32> to vector<8x128xf32>
    %433 = math.tanh %432 : vector<8x128xf32>
    %434 = vector.extract_strided_slice %419 {offsets = [0, 384], sizes = [8, 128], strides = [1, 1]} : vector<8x512xf32> to vector<8x128xf32>
    %435 = arith.negf %434 : vector<8x128xf32>
    %436 = math.exp %435 : vector<8x128xf32>
    %cst_159 = arith.constant 1.000000e+00 : f32
    %437 = vector.broadcast %cst_159 : f32 to vector<8x128xf32>
    %438 = arith.addf %437, %436 : vector<8x128xf32>
    %439 = arith.divf %437, %438 : vector<8x128xf32>
    %440 = arith.mulf %431, %410 : vector<8x128xf32>
    %441 = arith.mulf %425, %433 : vector<8x128xf32>
    %442 = arith.addf %440, %441 : vector<8x128xf32>
    %443 = math.tanh %442 : vector<8x128xf32>
    %444 = arith.mulf %439, %443 : vector<8x128xf32>
    %c4_160 = arith.constant 4 : index
    %c0_161 = arith.constant 0 : index
    %c0_162 = arith.constant 0 : index
    %445 = vector.load %arg8[%c4_160, %c0_161, %c0_162] : memref<8x8x128xf32, #tpu.memory_space<vmem>>, vector<1x8x128xf32>
    %446 = vector.shape_cast %445 : vector<1x8x128xf32> to vector<8x128xf32>
    %447 = vector.shape_cast %444 : vector<8x128xf32> to vector<1x8x128xf32>
    tpu.vector_store %arg8[%c4_160, %c0_161, %c0_162], %447 {strides = array<i32>} : memref<8x8x128xf32, #tpu.memory_space<vmem>>, vector<1x8x128xf32>,
    %c5_163 = arith.constant 5 : index
    %c0_164 = arith.constant 0 : index
    %c0_165 = arith.constant 0 : index
    %448 = vector.load %arg9[%c5_163, %c0_164, %c0_165] : memref<8x8x512xf32, #tpu.memory_space<vmem>>, vector<1x8x512xf32>
    %449 = vector.shape_cast %448 : vector<1x8x512xf32> to vector<8x512xf32>
    %cst_166 = arith.constant dense<0.000000e+00> : vector<8x512xf32>
    %450 = tpu.matmul %444, %276, %cst_166 {dimension_numbers = #tpu.dot_dimension_numbers<[1], [0], [0], [1], [0, 0, 1, 1], [], []>} : vector<8x128xf32>, vector<128x512xf32>, vector<8x512xf32> -> vector<8x512xf32>
    %451 = arith.addf %449, %450 : vector<8x512xf32>
    %452 = vector.extract_strided_slice %451 {offsets = [0, 0], sizes = [8, 128], strides = [1, 1]} : vector<8x512xf32> to vector<8x128xf32>
    %453 = arith.negf %452 : vector<8x128xf32>
    %454 = math.exp %453 : vector<8x128xf32>
    %cst_167 = arith.constant 1.000000e+00 : f32
    %455 = vector.broadcast %cst_167 : f32 to vector<8x128xf32>
    %456 = arith.addf %455, %454 : vector<8x128xf32>
    %457 = arith.divf %455, %456 : vector<8x128xf32>
    %458 = vector.extract_strided_slice %451 {offsets = [0, 128], sizes = [8, 128], strides = [1, 1]} : vector<8x512xf32> to vector<8x128xf32>
    %459 = arith.negf %458 : vector<8x128xf32>
    %460 = math.exp %459 : vector<8x128xf32>
    %cst_168 = arith.constant 1.000000e+00 : f32
    %461 = vector.broadcast %cst_168 : f32 to vector<8x128xf32>
    %462 = arith.addf %461, %460 : vector<8x128xf32>
    %463 = arith.divf %461, %462 : vector<8x128xf32>
    %464 = vector.extract_strided_slice %451 {offsets = [0, 256], sizes = [8, 128], strides = [1, 1]} : vector<8x512xf32> to vector<8x128xf32>
    %465 = math.tanh %464 : vector<8x128xf32>
    %466 = vector.extract_strided_slice %451 {offsets = [0, 384], sizes = [8, 128], strides = [1, 1]} : vector<8x512xf32> to vector<8x128xf32>
    %467 = arith.negf %466 : vector<8x128xf32>
    %468 = math.exp %467 : vector<8x128xf32>
    %cst_169 = arith.constant 1.000000e+00 : f32
    %469 = vector.broadcast %cst_169 : f32 to vector<8x128xf32>
    %470 = arith.addf %469, %468 : vector<8x128xf32>
    %471 = arith.divf %469, %470 : vector<8x128xf32>
    %472 = arith.mulf %463, %442 : vector<8x128xf32>
    %473 = arith.mulf %457, %465 : vector<8x128xf32>
    %474 = arith.addf %472, %473 : vector<8x128xf32>
    %475 = math.tanh %474 : vector<8x128xf32>
    %476 = arith.mulf %471, %475 : vector<8x128xf32>
    %c5_170 = arith.constant 5 : index
    %c0_171 = arith.constant 0 : index
    %c0_172 = arith.constant 0 : index
    %477 = vector.load %arg8[%c5_170, %c0_171, %c0_172] : memref<8x8x128xf32, #tpu.memory_space<vmem>>, vector<1x8x128xf32>
    %478 = vector.shape_cast %477 : vector<1x8x128xf32> to vector<8x128xf32>
    %479 = vector.shape_cast %476 : vector<8x128xf32> to vector<1x8x128xf32>
    tpu.vector_store %arg8[%c5_170, %c0_171, %c0_172], %479 {strides = array<i32>} : memref<8x8x128xf32, #tpu.memory_space<vmem>>, vector<1x8x128xf32>,
    %c6_173 = arith.constant 6 : index
    %c0_174 = arith.constant 0 : index
    %c0_175 = arith.constant 0 : index
    %480 = vector.load %arg9[%c6_173, %c0_174, %c0_175] : memref<8x8x512xf32, #tpu.memory_space<vmem>>, vector<1x8x512xf32>
    %481 = vector.shape_cast %480 : vector<1x8x512xf32> to vector<8x512xf32>
    %cst_176 = arith.constant dense<0.000000e+00> : vector<8x512xf32>
    %482 = tpu.matmul %476, %276, %cst_176 {dimension_numbers = #tpu.dot_dimension_numbers<[1], [0], [0], [1], [0, 0, 1, 1], [], []>} : vector<8x128xf32>, vector<128x512xf32>, vector<8x512xf32> -> vector<8x512xf32>
    %483 = arith.addf %481, %482 : vector<8x512xf32>
    %484 = vector.extract_strided_slice %483 {offsets = [0, 0], sizes = [8, 128], strides = [1, 1]} : vector<8x512xf32> to vector<8x128xf32>
    %485 = arith.negf %484 : vector<8x128xf32>
    %486 = math.exp %485 : vector<8x128xf32>
    %cst_177 = arith.constant 1.000000e+00 : f32
    %487 = vector.broadcast %cst_177 : f32 to vector<8x128xf32>
    %488 = arith.addf %487, %486 : vector<8x128xf32>
    %489 = arith.divf %487, %488 : vector<8x128xf32>
    %490 = vector.extract_strided_slice %483 {offsets = [0, 128], sizes = [8, 128], strides = [1, 1]} : vector<8x512xf32> to vector<8x128xf32>
    %491 = arith.negf %490 : vector<8x128xf32>
    %492 = math.exp %491 : vector<8x128xf32>
    %cst_178 = arith.constant 1.000000e+00 : f32
    %493 = vector.broadcast %cst_178 : f32 to vector<8x128xf32>
    %494 = arith.addf %493, %492 : vector<8x128xf32>
    %495 = arith.divf %493, %494 : vector<8x128xf32>
    %496 = vector.extract_strided_slice %483 {offsets = [0, 256], sizes = [8, 128], strides = [1, 1]} : vector<8x512xf32> to vector<8x128xf32>
    %497 = math.tanh %496 : vector<8x128xf32>
    %498 = vector.extract_strided_slice %483 {offsets = [0, 384], sizes = [8, 128], strides = [1, 1]} : vector<8x512xf32> to vector<8x128xf32>
    %499 = arith.negf %498 : vector<8x128xf32>
    %500 = math.exp %499 : vector<8x128xf32>
    %cst_179 = arith.constant 1.000000e+00 : f32
    %501 = vector.broadcast %cst_179 : f32 to vector<8x128xf32>
    %502 = arith.addf %501, %500 : vector<8x128xf32>
    %503 = arith.divf %501, %502 : vector<8x128xf32>
    %504 = arith.mulf %495, %474 : vector<8x128xf32>
    %505 = arith.mulf %489, %497 : vector<8x128xf32>
    %506 = arith.addf %504, %505 : vector<8x128xf32>
    %507 = math.tanh %506 : vector<8x128xf32>
    %508 = arith.mulf %503, %507 : vector<8x128xf32>
    %c6_180 = arith.constant 6 : index
    %c0_181 = arith.constant 0 : index
    %c0_182 = arith.constant 0 : index
    %509 = vector.load %arg8[%c6_180, %c0_181, %c0_182] : memref<8x8x128xf32, #tpu.memory_space<vmem>>, vector<1x8x128xf32>
    %510 = vector.shape_cast %509 : vector<1x8x128xf32> to vector<8x128xf32>
    %511 = vector.shape_cast %508 : vector<8x128xf32> to vector<1x8x128xf32>
    tpu.vector_store %arg8[%c6_180, %c0_181, %c0_182], %511 {strides = array<i32>} : memref<8x8x128xf32, #tpu.memory_space<vmem>>, vector<1x8x128xf32>,
    %c7_183 = arith.constant 7 : index
    %c0_184 = arith.constant 0 : index
    %c0_185 = arith.constant 0 : index
    %512 = vector.load %arg9[%c7_183, %c0_184, %c0_185] : memref<8x8x512xf32, #tpu.memory_space<vmem>>, vector<1x8x512xf32>
    %513 = vector.shape_cast %512 : vector<1x8x512xf32> to vector<8x512xf32>
    %cst_186 = arith.constant dense<0.000000e+00> : vector<8x512xf32>
    %514 = tpu.matmul %508, %276, %cst_186 {dimension_numbers = #tpu.dot_dimension_numbers<[1], [0], [0], [1], [0, 0, 1, 1], [], []>} : vector<8x128xf32>, vector<128x512xf32>, vector<8x512xf32> -> vector<8x512xf32>
    %515 = arith.addf %513, %514 : vector<8x512xf32>
    %516 = vector.extract_strided_slice %515 {offsets = [0, 0], sizes = [8, 128], strides = [1, 1]} : vector<8x512xf32> to vector<8x128xf32>
    %517 = arith.negf %516 : vector<8x128xf32>
    %518 = math.exp %517 : vector<8x128xf32>
    %cst_187 = arith.constant 1.000000e+00 : f32
    %519 = vector.broadcast %cst_187 : f32 to vector<8x128xf32>
    %520 = arith.addf %519, %518 : vector<8x128xf32>
    %521 = arith.divf %519, %520 : vector<8x128xf32>
    %522 = vector.extract_strided_slice %515 {offsets = [0, 128], sizes = [8, 128], strides = [1, 1]} : vector<8x512xf32> to vector<8x128xf32>
    %523 = arith.negf %522 : vector<8x128xf32>
    %524 = math.exp %523 : vector<8x128xf32>
    %cst_188 = arith.constant 1.000000e+00 : f32
    %525 = vector.broadcast %cst_188 : f32 to vector<8x128xf32>
    %526 = arith.addf %525, %524 : vector<8x128xf32>
    %527 = arith.divf %525, %526 : vector<8x128xf32>
    %528 = vector.extract_strided_slice %515 {offsets = [0, 256], sizes = [8, 128], strides = [1, 1]} : vector<8x512xf32> to vector<8x128xf32>
    %529 = math.tanh %528 : vector<8x128xf32>
    %530 = vector.extract_strided_slice %515 {offsets = [0, 384], sizes = [8, 128], strides = [1, 1]} : vector<8x512xf32> to vector<8x128xf32>
    %531 = arith.negf %530 : vector<8x128xf32>
    %532 = math.exp %531 : vector<8x128xf32>
    %cst_189 = arith.constant 1.000000e+00 : f32
    %533 = vector.broadcast %cst_189 : f32 to vector<8x128xf32>
    %534 = arith.addf %533, %532 : vector<8x128xf32>
    %535 = arith.divf %533, %534 : vector<8x128xf32>
    %536 = arith.mulf %527, %506 : vector<8x128xf32>
    %537 = arith.mulf %521, %529 : vector<8x128xf32>
    %538 = arith.addf %536, %537 : vector<8x128xf32>
    %539 = math.tanh %538 : vector<8x128xf32>
    %540 = arith.mulf %535, %539 : vector<8x128xf32>
    %c7_190 = arith.constant 7 : index
    %c0_191 = arith.constant 0 : index
    %c0_192 = arith.constant 0 : index
    %541 = vector.load %arg8[%c7_190, %c0_191, %c0_192] : memref<8x8x128xf32, #tpu.memory_space<vmem>>, vector<1x8x128xf32>
    %542 = vector.shape_cast %541 : vector<1x8x128xf32> to vector<8x128xf32>
    %543 = vector.shape_cast %540 : vector<8x128xf32> to vector<1x8x128xf32>
    tpu.vector_store %arg8[%c7_190, %c0_191, %c0_192], %543 {strides = array<i32>} : memref<8x8x128xf32, #tpu.memory_space<vmem>>, vector<1x8x128xf32>,
    %c0_193 = arith.constant 0 : index
    %c0_194 = arith.constant 0 : index
    %c0_195 = arith.constant 0 : index
    %544 = vector.load %arg8[%c0_193, %c0_194, %c0_195] : memref<8x8x128xf32, #tpu.memory_space<vmem>>, vector<8x8x128xf32>
    %545 = vector.shape_cast %544 : vector<8x8x128xf32> to vector<64x128xf32>
    %c0_196 = arith.constant 0 : index
    %c0_197 = arith.constant 0 : index
    %546 = vector.load %arg5[%c0_196, %c0_197] : memref<128x128xf32, #tpu.memory_space<vmem>>, vector<128x128xf32>
    %cst_198 = arith.constant dense<0.000000e+00> : vector<64x128xf32>
    %547 = tpu.matmul %545, %546, %cst_198 {dimension_numbers = #tpu.dot_dimension_numbers<[1], [0], [0], [1], [0, 0, 1, 1], [], []>} : vector<64x128xf32>, vector<128x128xf32>, vector<64x128xf32> -> vector<64x128xf32>
    %c0_199 = arith.constant 0 : index
    %c0_200 = arith.constant 0 : index
    %548 = vector.load %arg6[%c0_199, %c0_200] : memref<1x128xf32, #tpu.memory_space<vmem>>, vector<1x128xf32>
    %549 = vector.broadcast %548 : vector<1x128xf32> to vector<64x128xf32>
    %550 = arith.addf %547, %549 : vector<64x128xf32>
    %551 = vector.shape_cast %550 : vector<64x128xf32> to vector<8x8x128xf32>
    %c0_201 = arith.constant 0 : index
    %c0_202 = arith.constant 0 : index
    %c0_203 = arith.constant 0 : index
    %552 = vector.load %arg7[%c0_201, %c0_202, %c0_203] : memref<8x8x128xf32, #tpu.memory_space<vmem>>, vector<8x8x128xf32>
    tpu.vector_store %arg7[%c0_201, %c0_202, %c0_203], %551 {strides = array<i32>} : memref<8x8x128xf32, #tpu.memory_space<vmem>>, vector<8x8x128xf32>,
    return
  }
  func.func @transform_0(%arg0: i32) -> (i32, i32, i32) {
    %c0_i32 = arith.constant 0 : i32
    %c0_i32_0 = arith.constant 0 : i32
    %c0_i32_1 = arith.constant 0 : i32
    %c0_i32_2 = arith.constant 0 : i32
    return %c0_i32, %c0_i32_0, %c0_i32_1 : i32, i32, i32
  }
  func.func @transform_1(%arg0: i32) -> (i32, i32, i32) {
    %c0_i32 = arith.constant 0 : i32
    %c0_i32_0 = arith.constant 0 : i32
    %c0_i32_1 = arith.constant 0 : i32
    %c0_i32_2 = arith.constant 0 : i32
    return %c0_i32, %c0_i32_0, %c0_i32_1 : i32, i32, i32
  }
  func.func @transform_2(%arg0: i32) -> (i32, i32, i32) {
    %c0_i32 = arith.constant 0 : i32
    %c0_i32_0 = arith.constant 0 : i32
    %c0_i32_1 = arith.constant 0 : i32
    %c0_i32_2 = arith.constant 0 : i32
    return %c0_i32, %c0_i32_0, %c0_i32_1 : i32, i32, i32
  }
  func.func @transform_3(%arg0: i32) -> (i32, i32, i32) {
    %c0_i32 = arith.constant 0 : i32
    %c0_i32_0 = arith.constant 0 : i32
    %c0_i32_1 = arith.constant 0 : i32
    %c0_i32_2 = arith.constant 0 : i32
    return %c0_i32, %c0_i32_0, %c0_i32_1 : i32, i32, i32
  }
  func.func @transform_4(%arg0: i32) -> (i32, i32) {
    %c0_i32 = arith.constant 0 : i32
    %c0_i32_0 = arith.constant 0 : i32
    %c0_i32_1 = arith.constant 0 : i32
    return %c0_i32, %c0_i32_0 : i32, i32
  }
  func.func @transform_5(%arg0: i32) -> (i32, i32) {
    %c0_i32 = arith.constant 0 : i32
    %c0_i32_0 = arith.constant 0 : i32
    %c0_i32_1 = arith.constant 0 : i32
    return %c0_i32, %c0_i32_0 : i32, i32
  }
  func.func @transform_6(%arg0: i32) -> (i32, i32, i32) {
    %c0_i32 = arith.constant 0 : i32
    %c0_i32_0 = arith.constant 0 : i32
    %c0_i32_1 = arith.constant 0 : i32
    %c0_i32_2 = arith.constant 0 : i32
    return %c0_i32, %c0_i32_0, %c0_i32_1 : i32, i32, i32
  }
}

</mosaic_0001>

<llo_original>
// kernel: decoder_forward.1
$region0: #{decoder_forward.1}
  #allocation0 [shape = 'u32[]', space=smem, size = 0x4, offset = 0x4, fixed_abs, tag = 'smem constant byte address 0x4 - core index']
  #allocation1 [shape = 'u32[144,128]{1,0:T(1,128)}', space=vmem, size = 0x12000, scoped, tag = 'internal scratch']
  #allocation2 [shape = 'f32[8,8,128]{2,1,0:T(8,128)}', space=vmem, size = 0x8000, scoped, tag = 'scratch operand']
  #allocation3 [shape = 'f32[8,8,512]{2,1,0:T(8,128)}', space=vmem, size = 0x20000, scoped, tag = 'scratch operand']
  %s0 = inlined_call_operand.vmem [shape: f32[8,8,128], index: 0, kind: input, shape index: {}]
  %s1 = inlined_call_operand.hbm [shape: f32[2,128,512], index: 1, kind: input, shape index: {}]
  %s2 = inlined_call_operand.hbm [shape: f32[2,128,512], index: 2, kind: input, shape index: {}]
  %s3 = inlined_call_operand.vmem [shape: f32[2,1,512], index: 3, kind: input, shape index: {}]
  %s4 = inlined_call_operand.vmem [shape: f32[128,128], index: 4, kind: input, shape index: {}]
  %s5 = inlined_call_operand.vmem [shape: f32[1,128], index: 5, kind: input, shape index: {}]
  %s6 = inlined_call_operand.vmem [shape: f32[8,8,128], index: 6, kind: output, shape index: {}]
  %s7 = sld [smem:[#allocation0]]
  $region42: #{decoder_forward.1} parent=0
    _
  %s9 = ssub.s32 1, %s7
  %s10 = scalar_select 0, %s9, %s7
  $region1: #{decoder_forward.1} parent=0
    #allocation4 [shape = 'u8[524288]{0}', space=vmem, size = 0x80000, scoped, tag = 'input window, operand 1, single buffered']
    #allocation5 [shape = 's32[1]{0}', space=sflag, size = 0x4, scoped, tag = 'scoped memory for decoder_forward.1']
    #allocation6 [shape = 'u8[524288]{0}', space=vmem, size = 0x80000, scoped, tag = 'input window, operand 2, single buffered']
    #allocation7 [shape = 's32[1]{0}', space=sflag, size = 0x4, scoped, tag = 'scoped memory for decoder_forward.1']
    %11 = vsyncpa [#allocation5], 0
    %12 = vsyncpa [#allocation7], 0
    // Predicated region
    $region2: #{decoder_forward.1} parent=1 // pred_check
      _
    $region3: #{decoder_forward.1} parent=1 // pred_check_branch
      %14 = sbr.rel (0) target = $region5
    $region4: #{decoder_forward.1} parent=1 // pred_region
      _
    $region5: #{decoder_forward.1} parent=1 // pred_fallthru
      _
    // Predicated region
    $region6: #{decoder_forward.1} parent=1 // pred_check
      _
    $region7: #{decoder_forward.1} parent=1 // pred_check_branch
      %16 = sbr.rel (0) target = $region9
    $region8: #{decoder_forward.1} parent=1 // pred_region
      %s18 = ssub.s32 16384, 16384
      %19 = vsyncadd [#allocation5], %s18
      %s20 = sshll.u32 [#allocation4], 4
      %s21 = int_to_ptr.vmem [resolvable:$true] %s20
      %26 = dma.hbm_to_vmem [thread:$0]  %s1, 16384, %s21, [#allocation5], 512, 512, 32
    $region9: #{decoder_forward.1} parent=1 // pred_fallthru
      _
    // Predicated region
    $region10: #{decoder_forward.1} parent=1 // pred_check
      _
    $region11: #{decoder_forward.1} parent=1 // pred_check_branch
      %28 = sbr.rel (0) target = $region13
    $region12: #{decoder_forward.1} parent=1 // pred_region
      %s30 = ssub.s32 16384, 16384
      %31 = vsyncadd [#allocation7], %s30
      %s32 = sshll.u32 [#allocation6], 4
      %s33 = int_to_ptr.vmem [resolvable:$true] %s32
      %38 = dma.hbm_to_vmem [thread:$0]  %s2, 16384, %s33, [#allocation7], 512, 512, 32
    $region13: #{decoder_forward.1} parent=1 // pred_fallthru
      _
    // Predicated region
    $region14: #{decoder_forward.1} parent=1 // pred_check
      _
    $region15: #{decoder_forward.1} parent=1 // pred_check_branch
      %40 = sbr.rel (0) target = $region17
    $region16: #{decoder_forward.1} parent=1 // pred_region
      _
    $region17: #{decoder_forward.1} parent=1 // pred_fallthru
      _
    // Predicated region
    $region18: #{decoder_forward.1} parent=1 // pred_check
      _
    $region19: #{decoder_forward.1} parent=1 // pred_check_branch
      %42 = sbr.rel (0) target = $region21
    $region20: #{decoder_forward.1} parent=1 // pred_region
      _
    $region21: #{decoder_forward.1} parent=1 // pred_fallthru
      _
    // Predicated region
    $region22: #{decoder_forward.1} parent=1 // pred_check
      _
    $region23: #{decoder_forward.1} parent=1 // pred_check_branch
      %44 = sbr.rel (0) target = $region25
    $region24: #{decoder_forward.1} parent=1 // pred_region
      _
    $region25: #{decoder_forward.1} parent=1 // pred_fallthru
      _
    // Predicated region
    $region26: #{decoder_forward.1} parent=1 // pred_check
      _
    $region27: #{decoder_forward.1} parent=1 // pred_check_branch
      %46 = sbr.rel (0) target = $region29
    $region28: #{decoder_forward.1} parent=1 // pred_region
      %47 = dma.done [#allocation5], 16384
    $region29: #{decoder_forward.1} parent=1 // pred_fallthru
      _
    // Predicated region
    $region30: #{decoder_forward.1} parent=1 // pred_check
      _
    $region31: #{decoder_forward.1} parent=1 // pred_check_branch
      %49 = sbr.rel (0) target = $region33
    $region32: #{decoder_forward.1} parent=1 // pred_region
      %50 = dma.done [#allocation7], 16384
    $region33: #{decoder_forward.1} parent=1 // pred_fallthru
      _
    %v51 = vld [vmem:[%s0] sm:$0xff]
    %v52 = vld [vmem:[%s0 + $0x8] sm:$0xff]
    %v53 = vld [vmem:[%s0 + $0x10] sm:$0xff]
    %v54 = vld [vmem:[%s0 + $0x18] sm:$0xff]
    %v55 = vld [vmem:[%s0 + $0x20] sm:$0xff]
    %v56 = vld [vmem:[%s0 + $0x28] sm:$0xff]
    %v57 = vld [vmem:[%s0 + $0x30] sm:$0xff]
    %v58 = vld [vmem:[%s0 + $0x38] sm:$0xff]
    %59 = vst [vmem:[#allocation2] sm:$0xff] %v51
    %60 = vst [vmem:[#allocation2 + $0x8] sm:$0xff] %v52
    %61 = vst [vmem:[#allocation2 + $0x10] sm:$0xff] %v53
    %62 = vst [vmem:[#allocation2 + $0x18] sm:$0xff] %v54
    %63 = vst [vmem:[#allocation2 + $0x20] sm:$0xff] %v55
    %64 = vst [vmem:[#allocation2 + $0x28] sm:$0xff] %v56
    %65 = vst [vmem:[#allocation2 + $0x30] sm:$0xff] %v57
    %66 = vst [vmem:[#allocation2 + $0x38] sm:$0xff] %v58
    %v67 = vld [vmem:[#allocation4] sm:$0xff]
    %v68 = vld [vmem:[#allocation4 + $0x8] sm:$0xff]
    %v69 = vld [vmem:[#allocation4 + $0x10] sm:$0xff]
    %v70 = vld [vmem:[#allocation4 + $0x18] sm:$0xff]
    %v71 = vld [vmem:[#allocation4 + $0x20] sm:$0xff]
    %v72 = vld [vmem:[#allocation4 + $0x28] sm:$0xff]
    %v73 = vld [vmem:[#allocation4 + $0x30] sm:$0xff]
    %v74 = vld [vmem:[#allocation4 + $0x38] sm:$0xff]
    %v75 = vld [vmem:[#allocation4 + $0x40] sm:$0xff]
    %v76 = vld [vmem:[#allocation4 + $0x48] sm:$0xff]
    %v77 = vld [vmem:[#allocation4 + $0x50] sm:$0xff]
    %v78 = vld [vmem:[#allocation4 + $0x58] sm:$0xff]
    %v79 = vld [vmem:[#allocation4 + $0x60] sm:$0xff]
    %v80 = vld [vmem:[#allocation4 + $0x68] sm:$0xff]
    %v81 = vld [vmem:[#allocation4 + $0x70] sm:$0xff]
    %v82 = vld [vmem:[#allocation4 + $0x78] sm:$0xff]
    %v83 = vld [vmem:[#allocation4 + $0x80] sm:$0xff]
    %v84 = vld [vmem:[#allocation4 + $0x88] sm:$0xff]
    %v85 = vld [vmem:[#allocation4 + $0x90] sm:$0xff]
    %v86 = vld [vmem:[#allocation4 + $0x98] sm:$0xff]
    %v87 = vld [vmem:[#allocation4 + $0xa0] sm:$0xff]
    %v88 = vld [vmem:[#allocation4 + $0xa8] sm:$0xff]
    %v89 = vld [vmem:[#allocation4 + $0xb0] sm:$0xff]
    %v90 = vld [vmem:[#allocation4 + $0xb8] sm:$0xff]
    %v91 = vld [vmem:[#allocation4 + $0xc0] sm:$0xff]
    %v92 = vld [vmem:[#allocation4 + $0xc8] sm:$0xff]
    %v93 = vld [vmem:[#allocation4 + $0xd0] sm:$0xff]
    %v94 = vld [vmem:[#allocation4 + $0xd8] sm:$0xff]
    %v95 = vld [vmem:[#allocation4 + $0xe0] sm:$0xff]
    %v96 = vld [vmem:[#allocation4 + $0xe8] sm:$0xff]
    %v97 = vld [vmem:[#allocation4 + $0xf0] sm:$0xff]
    %v98 = vld [vmem:[#allocation4 + $0xf8] sm:$0xff]
    %v99 = vld [vmem:[#allocation4 + $0x100] sm:$0xff]
    %v100 = vld [vmem:[#allocation4 + $0x108] sm:$0xff]
    %v101 = vld [vmem:[#allocation4 + $0x110] sm:$0xff]
    %v102 = vld [vmem:[#allocation4 + $0x118] sm:$0xff]
    %v103 = vld [vmem:[#allocation4 + $0x120] sm:$0xff]
    %v104 = vld [vmem:[#allocation4 + $0x128] sm:$0xff]
    %v105 = vld [vmem:[#allocation4 + $0x130] sm:$0xff]
    %v106 = vld [vmem:[#allocation4 + $0x138] sm:$0xff]
    %v107 = vld [vmem:[#allocation4 + $0x140] sm:$0xff]
    %v108 = vld [vmem:[#allocation4 + $0x148] sm:$0xff]
    %v109 = vld [vmem:[#allocation4 + $0x150] sm:$0xff]
    %v110 = vld [vmem:[#allocation4 + $0x158] sm:$0xff]
    %v111 = vld [vmem:[#allocation4 + $0x160] sm:$0xff]
    %v112 = vld [vmem:[#allocation4 + $0x168] sm:$0xff]
    %v113 = vld [vmem:[#allocation4 + $0x170] sm:$0xff]
    %v114 = vld [vmem:[#allocation4 + $0x178] sm:$0xff]
    %v115 = vld [vmem:[#allocation4 + $0x180] sm:$0xff]
    %v116 = vld [vmem:[#allocation4 + $0x188] sm:$0xff]
    %v117 = vld [vmem:[#allocation4 + $0x190] sm:$0xff]
    %v118 = vld [vmem:[#allocation4 + $0x198] sm:$0xff]
    %v119 = vld [vmem:[#allocation4 + $0x1a0] sm:$0xff]
    %v120 = vld [vmem:[#allocation4 + $0x1a8] sm:$0xff]
    %v121 = vld [vmem:[#allocation4 + $0x1b0] sm:$0xff]
    %v122 = vld [vmem:[#allocation4 + $0x1b8] sm:$0xff]
    %v123 = vld [vmem:[#allocation4 + $0x1c0] sm:$0xff]
    %v124 = vld [vmem:[#allocation4 + $0x1c8] sm:$0xff]
    %v125 = vld [vmem:[#allocation4 + $0x1d0] sm:$0xff]
    %v126 = vld [vmem:[#allocation4 + $0x1d8] sm:$0xff]
    %v127 = vld [vmem:[#allocation4 + $0x1e0] sm:$0xff]
    %v128 = vld [vmem:[#allocation4 + $0x1e8] sm:$0xff]
    %v129 = vld [vmem:[#allocation4 + $0x1f0] sm:$0xff]
    %v130 = vld [vmem:[#allocation4 + $0x1f8] sm:$0xff]
    %v131 = vld [vmem:[#allocation6] sm:$0xff]
    %v132 = vld [vmem:[#allocation6 + $0x8] sm:$0xff]
    %v133 = vld [vmem:[#allocation6 + $0x10] sm:$0xff]
    %v134 = vld [vmem:[#allocation6 + $0x18] sm:$0xff]
    %v135 = vld [vmem:[#allocation6 + $0x20] sm:$0xff]
    %v136 = vld [vmem:[#allocation6 + $0x28] sm:$0xff]
    %v137 = vld [vmem:[#allocation6 + $0x30] sm:$0xff]
    %v138 = vld [vmem:[#allocation6 + $0x38] sm:$0xff]
    %v139 = vld [vmem:[#allocation6 + $0x40] sm:$0xff]
    %v140 = vld [vmem:[#allocation6 + $0x48] sm:$0xff]
    %v141 = vld [vmem:[#allocation6 + $0x50] sm:$0xff]
    %v142 = vld [vmem:[#allocation6 + $0x58] sm:$0xff]
    %v143 = vld [vmem:[#allocation6 + $0x60] sm:$0xff]
    %v144 = vld [vmem:[#allocation6 + $0x68] sm:$0xff]
    %v145 = vld [vmem:[#allocation6 + $0x70] sm:$0xff]
    %v146 = vld [vmem:[#allocation6 + $0x78] sm:$0xff]
    %v147 = vld [vmem:[#allocation6 + $0x80] sm:$0xff]
    %v148 = vld [vmem:[#allocation6 + $0x88] sm:$0xff]
    %v149 = vld [vmem:[#allocation6 + $0x90] sm:$0xff]
    %v150 = vld [vmem:[#allocation6 + $0x98] sm:$0xff]
    %v151 = vld [vmem:[#allocation6 + $0xa0] sm:$0xff]
    %v152 = vld [vmem:[#allocation6 + $0xa8] sm:$0xff]
    %v153 = vld [vmem:[#allocation6 + $0xb0] sm:$0xff]
    %v154 = vld [vmem:[#allocation6 + $0xb8] sm:$0xff]
    %v155 = vld [vmem:[#allocation6 + $0xc0] sm:$0xff]
    %v156 = vld [vmem:[#allocation6 + $0xc8] sm:$0xff]
    %v157 = vld [vmem:[#allocation6 + $0xd0] sm:$0xff]
    %v158 = vld [vmem:[#allocation6 + $0xd8] sm:$0xff]
    %v159 = vld [vmem:[#allocation6 + $0xe0] sm:$0xff]
    %v160 = vld [vmem:[#allocation6 + $0xe8] sm:$0xff]
    %v161 = vld [vmem:[#allocation6 + $0xf0] sm:$0xff]
    %v162 = vld [vmem:[#allocation6 + $0xf8] sm:$0xff]
    %v163 = vld [vmem:[#allocation6 + $0x100] sm:$0xff]
    %v164 = vld [vmem:[#allocation6 + $0x108] sm:$0xff]
    %v165 = vld [vmem:[#allocation6 + $0x110] sm:$0xff]
    %v166 = vld [vmem:[#allocation6 + $0x118] sm:$0xff]
    %v167 = vld [vmem:[#allocation6 + $0x120] sm:$0xff]
    %v168 = vld [vmem:[#allocation6 + $0x128] sm:$0xff]
    %v169 = vld [vmem:[#allocation6 + $0x130] sm:$0xff]
    %v170 = vld [vmem:[#allocation6 + $0x138] sm:$0xff]
    %v171 = vld [vmem:[#allocation6 + $0x140] sm:$0xff]
    %v172 = vld [vmem:[#allocation6 + $0x148] sm:$0xff]
    %v173 = vld [vmem:[#allocation6 + $0x150] sm:$0xff]
    %v174 = vld [vmem:[#allocation6 + $0x158] sm:$0xff]
    %v175 = vld [vmem:[#allocation6 + $0x160] sm:$0xff]
    %v176 = vld [vmem:[#allocation6 + $0x168] sm:$0xff]
    %v177 = vld [vmem:[#allocation6 + $0x170] sm:$0xff]
    %v178 = vld [vmem:[#allocation6 + $0x178] sm:$0xff]
    %v179 = vld [vmem:[#allocation6 + $0x180] sm:$0xff]
    %v180 = vld [vmem:[#allocation6 + $0x188] sm:$0xff]
    %v181 = vld [vmem:[#allocation6 + $0x190] sm:$0xff]
    %v182 = vld [vmem:[#allocation6 + $0x198] sm:$0xff]
    %v183 = vld [vmem:[#allocation6 + $0x1a0] sm:$0xff]
    %v184 = vld [vmem:[#allocation6 + $0x1a8] sm:$0xff]
    %v185 = vld [vmem:[#allocation6 + $0x1b0] sm:$0xff]
    %v186 = vld [vmem:[#allocation6 + $0x1b8] sm:$0xff]
    %v187 = vld [vmem:[#allocation6 + $0x1c0] sm:$0xff]
    %v188 = vld [vmem:[#allocation6 + $0x1c8] sm:$0xff]
    %v189 = vld [vmem:[#allocation6 + $0x1d0] sm:$0xff]
    %v190 = vld [vmem:[#allocation6 + $0x1d8] sm:$0xff]
    %v191 = vld [vmem:[#allocation6 + $0x1e0] sm:$0xff]
    %v192 = vld [vmem:[#allocation6 + $0x1e8] sm:$0xff]
    %v193 = vld [vmem:[#allocation6 + $0x1f0] sm:$0xff]
    %v194 = vld [vmem:[#allocation6 + $0x1f8] sm:$0xff]
    %v195 = vld [vmem:[%s3] sm:$0xf]
    %v196 = vld [vmem:[#allocation2] sm:$0xff]
    %v197 = vld [vmem:[#allocation2 + $0x8] sm:$0xff]
    %v198 = vld [vmem:[#allocation2 + $0x10] sm:$0xff]
    %v199 = vld [vmem:[#allocation2 + $0x18] sm:$0xff]
    %v200 = vld [vmem:[#allocation2 + $0x20] sm:$0xff]
    %v201 = vld [vmem:[#allocation2 + $0x28] sm:$0xff]
    %v202 = vld [vmem:[#allocation2 + $0x30] sm:$0xff]
    %v203 = vld [vmem:[#allocation2 + $0x38] sm:$0xff]
    %v205 = vlaneseq
    %v206 = vshrl.u32 %v205, 7
    %v207 = vsub.s32 0, %v206
    %v208 = vrot.slane %v195, %v207
    %v209 = vlaneseq
    %v210 = vshrl.u32 %v209, 7
    %v211 = vsub.s32 1, %v210
    %v212 = vrot.slane %v195, %v211
    %v213 = vlaneseq
    %v214 = vshrl.u32 %v213, 7
    %v215 = vsub.s32 2, %v214
    %v216 = vrot.slane %v195, %v215
    %v217 = vlaneseq
    %v218 = vshrl.u32 %v217, 7
    %v219 = vsub.s32 3, %v218
    %v220 = vrot.slane %v195, %v219
    %225 = vmatprep.subr.mxu0 %v68
    %226 = vmatpush1.msra.mxu0 %v67
    %227 = vmatprep.subr.mxu0 %v72
    %228 = vmatpush1.msra.mxu0 %v71
    %229 = vmatprep.subr.mxu0 %v76
    %230 = vmatpush1.msra.mxu0 %v75
    %231 = vmatprep.subr.mxu0 %v80
    %232 = vmatpush1.msra.mxu0 %v79
    %233 = vmatprep.subr.mxu0 %v84
    %234 = vmatpush1.msra.mxu0 %v83
    %235 = vmatprep.subr.mxu0 %v88
    %236 = vmatpush1.msra.mxu0 %v87
    %237 = vmatprep.subr.mxu0 %v92
    %238 = vmatpush1.msra.mxu0 %v91
    %239 = vmatprep.subr.mxu0 %v96
    %240 = vmatpush1.msra.mxu0 %v95
    %241 = vmatprep.subr.mxu0 %v100
    %242 = vmatpush1.msra.mxu0 %v99
    %243 = vmatprep.subr.mxu0 %v104
    %244 = vmatpush1.msra.mxu0 %v103
    %245 = vmatprep.subr.mxu0 %v108
    %246 = vmatpush1.msra.mxu0 %v107
    %247 = vmatprep.subr.mxu0 %v112
    %248 = vmatpush1.msra.mxu0 %v111
    %249 = vmatprep.subr.mxu0 %v116
    %250 = vmatpush1.msra.mxu0 %v115
    %251 = vmatprep.subr.mxu0 %v120
    %252 = vmatpush1.msra.mxu0 %v119
    %253 = vmatprep.subr.mxu0 %v124
    %254 = vmatpush1.msra.mxu0 %v123
    %255 = vmatprep.subr.mxu0 %v128
    %256 = vmatpush1.msra.mxu0 %v127
    %257 = vmatprep.subr.mxu0 0.0
    %258 = vmatpush1.msra.mxu0 0.0
    %259 = vmatprep.subr.mxu0 0.0
    %260 = vmatpush1.msra.mxu0 0.0
    %261 = vmatprep.subr.mxu0 0.0
    %262 = vmatpush1.msra.mxu0 0.0
    %263 = vmatprep.subr.mxu0 0.0
    %264 = vmatpush1.msra.mxu0 0.0
    %265 = vmatprep.subr.mxu0 0.0
    %266 = vmatpush1.msra.mxu0 0.0
    %267 = vmatprep.subr.mxu0 0.0
    %268 = vmatpush1.msra.mxu0 0.0
    %269 = vmatprep.subr.mxu0 0.0
    %270 = vmatpush1.msra.mxu0 0.0
    %271 = vmatprep.subr.mxu0 0.0
    %272 = vmatpush1.msra.mxu0 0.0
    %273 = vmatprep.subr.mxu0 0.0
    %274 = vmatpush1.msra.mxu0 0.0
    %275 = vmatprep.subr.mxu0 0.0
    %276 = vmatpush1.msra.mxu0 0.0
    %277 = vmatprep.subr.mxu0 0.0
    %278 = vmatpush1.msra.mxu0 0.0
    %279 = vmatprep.subr.mxu0 0.0
    %280 = vmatpush1.msra.mxu0 0.0
    %281 = vmatprep.subr.mxu0 0.0
    %282 = vmatpush1.msra.mxu0 0.0
    %283 = vmatprep.subr.mxu0 0.0
    %284 = vmatpush1.msra.mxu0 0.0
    %285 = vmatprep.subr.mxu0 0.0
    %286 = vmatpush1.msra.mxu0 0.0
    %287 = vmatprep.subr.mxu0 0.0
    %288 = vmatpush1.msra.mxu0 0.0
    %289 = vmatprep.mubr.f32.mxu0 0.0
    %290 = vmatmul.mubr.f32.gmra.mrb[0].mxu0 %v196
    %v291 = vpop.f32.mrb[0].mxu0
    %v292 = vadd.f32 %v208, %v291
    %v293 = vpop.f32.mrb[0].mxu0
    %v294 = vadd.f32 %v212, %v293
    %295 = vmatprep.mubr.f32.mxu0 0.0
    %296 = vmatmul.mubr.f32.gmra.mrb[0].mxu0 %v197
    %v297 = vpop.f32.mrb[0].mxu0
    %v298 = vadd.f32 %v208, %v297
    %v299 = vpop.f32.mrb[0].mxu0
    %v300 = vadd.f32 %v212, %v299
    %301 = vmatprep.mubr.f32.mxu0 0.0
    %302 = vmatmul.mubr.f32.gmra.mrb[0].mxu0 %v198
    %v303 = vpop.f32.mrb[0].mxu0
    %v304 = vadd.f32 %v208, %v303
    %v305 = vpop.f32.mrb[0].mxu0
    %v306 = vadd.f32 %v212, %v305
    %307 = vmatprep.mubr.f32.mxu0 0.0
    %308 = vmatmul.mubr.f32.gmra.mrb[0].mxu0 %v199
    %v309 = vpop.f32.mrb[0].mxu0
    %v310 = vadd.f32 %v208, %v309
    %v311 = vpop.f32.mrb[0].mxu0
    %v312 = vadd.f32 %v212, %v311
    %313 = vmatprep.mubr.f32.mxu0 0.0
    %314 = vmatmul.mubr.f32.gmra.mrb[0].mxu0 %v200
    %v315 = vpop.f32.mrb[0].mxu0
    %v316 = vadd.f32 %v208, %v315
    %v317 = vpop.f32.mrb[0].mxu0
    %v318 = vadd.f32 %v212, %v317
    %319 = vmatprep.mubr.f32.mxu0 0.0
    %320 = vmatmul.mubr.f32.gmra.mrb[0].mxu0 %v201
    %v321 = vpop.f32.mrb[0].mxu0
    %v322 = vadd.f32 %v208, %v321
    %v323 = vpop.f32.mrb[0].mxu0
    %v324 = vadd.f32 %v212, %v323
    %325 = vmatprep.mubr.f32.mxu0 0.0
    %326 = vmatmul.mubr.f32.gmra.mrb[0].mxu0 %v202
    %v327 = vpop.f32.mrb[0].mxu0
    %v328 = vadd.f32 %v208, %v327
    %v329 = vpop.f32.mrb[0].mxu0
    %v330 = vadd.f32 %v212, %v329
    %331 = vmatprep.mubr.f32.mxu0 0.0
    %332 = vmatmul.mubr.f32.gmra.mrb[0].mxu0 %v203
    %v333 = vpop.f32.mrb[0].mxu0
    %v334 = vadd.f32 %v208, %v333
    %v335 = vpop.f32.mrb[0].mxu0
    %v336 = vadd.f32 %v212, %v335
    %337 = vdwg.mxu0
    %338 = vmatprep.subr.mxu0 %v70
    %339 = vmatpush1.msra.mxu0 %v69
    %340 = vmatprep.subr.mxu0 %v74
    %341 = vmatpush1.msra.mxu0 %v73
    %342 = vmatprep.subr.mxu0 %v78
    %343 = vmatpush1.msra.mxu0 %v77
    %344 = vmatprep.subr.mxu0 %v82
    %345 = vmatpush1.msra.mxu0 %v81
    %346 = vmatprep.subr.mxu0 %v86
    %347 = vmatpush1.msra.mxu0 %v85
    %348 = vmatprep.subr.mxu0 %v90
    %349 = vmatpush1.msra.mxu0 %v89
    %350 = vmatprep.subr.mxu0 %v94
    %351 = vmatpush1.msra.mxu0 %v93
    %352 = vmatprep.subr.mxu0 %v98
    %353 = vmatpush1.msra.mxu0 %v97
    %354 = vmatprep.subr.mxu0 %v102
    %355 = vmatpush1.msra.mxu0 %v101
    %356 = vmatprep.subr.mxu0 %v106
    %357 = vmatpush1.msra.mxu0 %v105
    %358 = vmatprep.subr.mxu0 %v110
    %359 = vmatpush1.msra.mxu0 %v109
    %360 = vmatprep.subr.mxu0 %v114
    %361 = vmatpush1.msra.mxu0 %v113
    %362 = vmatprep.subr.mxu0 %v118
    %363 = vmatpush1.msra.mxu0 %v117
    %364 = vmatprep.subr.mxu0 %v122
    %365 = vmatpush1.msra.mxu0 %v121
    %366 = vmatprep.subr.mxu0 %v126
    %367 = vmatpush1.msra.mxu0 %v125
    %368 = vmatprep.subr.mxu0 %v130
    %369 = vmatpush1.msra.mxu0 %v129
    %370 = vmatprep.subr.mxu0 0.0
    %371 = vmatpush1.msra.mxu0 0.0
    %372 = vmatprep.subr.mxu0 0.0
    %373 = vmatpush1.msra.mxu0 0.0
    %374 = vmatprep.subr.mxu0 0.0
    %375 = vmatpush1.msra.mxu0 0.0
    %376 = vmatprep.subr.mxu0 0.0
    %377 = vmatpush1.msra.mxu0 0.0
    %378 = vmatprep.subr.mxu0 0.0
    %379 = vmatpush1.msra.mxu0 0.0
    %380 = vmatprep.subr.mxu0 0.0
    %381 = vmatpush1.msra.mxu0 0.0
    %382 = vmatprep.subr.mxu0 0.0
    %383 = vmatpush1.msra.mxu0 0.0
    %384 = vmatprep.subr.mxu0 0.0
    %385 = vmatpush1.msra.mxu0 0.0
    %386 = vmatprep.subr.mxu0 0.0
    %387 = vmatpush1.msra.mxu0 0.0
    %388 = vmatprep.subr.mxu0 0.0
    %389 = vmatpush1.msra.mxu0 0.0
    %390 = vmatprep.subr.mxu0 0.0
    %391 = vmatpush1.msra.mxu0 0.0
    %392 = vmatprep.subr.mxu0 0.0
    %393 = vmatpush1.msra.mxu0 0.0
    %394 = vmatprep.subr.mxu0 0.0
    %395 = vmatpush1.msra.mxu0 0.0
    %396 = vmatprep.subr.mxu0 0.0
    %397 = vmatpush1.msra.mxu0 0.0
    %398 = vmatprep.subr.mxu0 0.0
    %399 = vmatpush1.msra.mxu0 0.0
    %400 = vmatprep.subr.mxu0 0.0
    %401 = vmatpush1.msra.mxu0 0.0
    %402 = vmatprep.mubr.f32.mxu0 0.0
    %403 = vmatmul.mubr.f32.gmra.mrb[0].mxu0 %v196
    %v404 = vpop.f32.mrb[0].mxu0
    %v405 = vadd.f32 %v216, %v404
    %v406 = vpop.f32.mrb[0].mxu0
    %v407 = vadd.f32 %v220, %v406
    %408 = vmatprep.mubr.f32.mxu0 0.0
    %409 = vmatmul.mubr.f32.gmra.mrb[0].mxu0 %v197
    %v410 = vpop.f32.mrb[0].mxu0
    %v411 = vadd.f32 %v216, %v410
    %v412 = vpop.f32.mrb[0].mxu0
    %v413 = vadd.f32 %v220, %v412
    %414 = vmatprep.mubr.f32.mxu0 0.0
    %415 = vmatmul.mubr.f32.gmra.mrb[0].mxu0 %v198
    %v416 = vpop.f32.mrb[0].mxu0
    %v417 = vadd.f32 %v216, %v416
    %v418 = vpop.f32.mrb[0].mxu0
    %v419 = vadd.f32 %v220, %v418
    %420 = vmatprep.mubr.f32.mxu0 0.0
    %421 = vmatmul.mubr.f32.gmra.mrb[0].mxu0 %v199
    %v422 = vpop.f32.mrb[0].mxu0
    %v423 = vadd.f32 %v216, %v422
    %v424 = vpop.f32.mrb[0].mxu0
    %v425 = vadd.f32 %v220, %v424
    %426 = vmatprep.mubr.f32.mxu0 0.0
    %427 = vmatmul.mubr.f32.gmra.mrb[0].mxu0 %v200
    %v428 = vpop.f32.mrb[0].mxu0
    %v429 = vadd.f32 %v216, %v428
    %v430 = vpop.f32.mrb[0].mxu0
    %v431 = vadd.f32 %v220, %v430
    %432 = vmatprep.mubr.f32.mxu0 0.0
    %433 = vmatmul.mubr.f32.gmra.mrb[0].mxu0 %v201
    %v434 = vpop.f32.mrb[0].mxu0
    %v435 = vadd.f32 %v216, %v434
    %v436 = vpop.f32.mrb[0].mxu0
    %v437 = vadd.f32 %v220, %v436
    %438 = vmatprep.mubr.f32.mxu0 0.0
    %439 = vmatmul.mubr.f32.gmra.mrb[0].mxu0 %v202
    %v440 = vpop.f32.mrb[0].mxu0
    %v441 = vadd.f32 %v216, %v440
    %v442 = vpop.f32.mrb[0].mxu0
    %v443 = vadd.f32 %v220, %v442
    %444 = vmatprep.mubr.f32.mxu0 0.0
    %445 = vmatmul.mubr.f32.gmra.mrb[0].mxu0 %v203
    %v446 = vpop.f32.mrb[0].mxu0
    %v447 = vadd.f32 %v216, %v446
    %v448 = vpop.f32.mrb[0].mxu0
    %v449 = vadd.f32 %v220, %v448
    %450 = vdwg.mxu0
    %451 = vst [vmem:[#allocation3] sm:$0xff] %v292
    %452 = vst [vmem:[#allocation3 + $0x8] sm:$0xff] %v294
    %453 = vst [vmem:[#allocation3 + $0x10] sm:$0xff] %v405
    %454 = vst [vmem:[#allocation3 + $0x18] sm:$0xff] %v407
    %455 = vst [vmem:[#allocation3 + $0x20] sm:$0xff] %v298
    %456 = vst [vmem:[#allocation3 + $0x28] sm:$0xff] %v300
    %457 = vst [vmem:[#allocation3 + $0x30] sm:$0xff] %v411
    %458 = vst [vmem:[#allocation3 + $0x38] sm:$0xff] %v413
    %459 = vst [vmem:[#allocation3 + $0x40] sm:$0xff] %v304
    %460 = vst [vmem:[#allocation3 + $0x48] sm:$0xff] %v306
    %461 = vst [vmem:[#allocation3 + $0x50] sm:$0xff] %v417
    %462 = vst [vmem:[#allocation3 + $0x58] sm:$0xff] %v419
    %463 = vst [vmem:[#allocation3 + $0x60] sm:$0xff] %v310
    %464 = vst [vmem:[#allocation3 + $0x68] sm:$0xff] %v312
    %465 = vst [vmem:[#allocation3 + $0x70] sm:$0xff] %v423
    %466 = vst [vmem:[#allocation3 + $0x78] sm:$0xff] %v425
    %467 = vst [vmem:[#allocation3 + $0x80] sm:$0xff] %v316
    %468 = vst [vmem:[#allocation3 + $0x88] sm:$0xff] %v318
    %469 = vst [vmem:[#allocation3 + $0x90] sm:$0xff] %v429
    %470 = vst [vmem:[#allocation3 + $0x98] sm:$0xff] %v431
    %471 = vst [vmem:[#allocation3 + $0xa0] sm:$0xff] %v322
    %472 = vst [vmem:[#allocation3 + $0xa8] sm:$0xff] %v324
    %473 = vst [vmem:[#allocation3 + $0xb0] sm:$0xff] %v435
    %474 = vst [vmem:[#allocation3 + $0xb8] sm:$0xff] %v437
    %475 = vst [vmem:[#allocation3 + $0xc0] sm:$0xff] %v328
    %476 = vst [vmem:[#allocation3 + $0xc8] sm:$0xff] %v330
    %477 = vst [vmem:[#allocation3 + $0xd0] sm:$0xff] %v441
    %478 = vst [vmem:[#allocation3 + $0xd8] sm:$0xff] %v443
    %479 = vst [vmem:[#allocation3 + $0xe0] sm:$0xff] %v334
    %480 = vst [vmem:[#allocation3 + $0xe8] sm:$0xff] %v336
    %481 = vst [vmem:[#allocation3 + $0xf0] sm:$0xff] %v447
    %482 = vst [vmem:[#allocation3 + $0xf8] sm:$0xff] %v449
    %v483 = vld [vmem:[#allocation3] sm:$0xff]
    %v484 = vld [vmem:[#allocation3 + $0x8] sm:$0xff]
    %v485 = vld [vmem:[#allocation3 + $0x10] sm:$0xff]
    %v486 = vld [vmem:[#allocation3 + $0x18] sm:$0xff]
    %487 = vmatprep.subr.mxu0 %v132
    %488 = vmatpush1.msra.mxu0 %v131
    %489 = vmatprep.subr.mxu0 %v136
    %490 = vmatpush1.msra.mxu0 %v135
    %491 = vmatprep.subr.mxu0 %v140
    %492 = vmatpush1.msra.mxu0 %v139
    %493 = vmatprep.subr.mxu0 %v144
    %494 = vmatpush1.msra.mxu0 %v143
    %495 = vmatprep.subr.mxu0 %v148
    %496 = vmatpush1.msra.mxu0 %v147
    %497 = vmatprep.subr.mxu0 %v152
    %498 = vmatpush1.msra.mxu0 %v151
    %499 = vmatprep.subr.mxu0 %v156
    %500 = vmatpush1.msra.mxu0 %v155
    %501 = vmatprep.subr.mxu0 %v160
    %502 = vmatpush1.msra.mxu0 %v159
    %503 = vmatprep.subr.mxu0 %v164
    %504 = vmatpush1.msra.mxu0 %v163
    %505 = vmatprep.subr.mxu0 %v168
    %506 = vmatpush1.msra.mxu0 %v167
    %507 = vmatprep.subr.mxu0 %v172
    %508 = vmatpush1.msra.mxu0 %v171
    %509 = vmatprep.subr.mxu0 %v176
    %510 = vmatpush1.msra.mxu0 %v175
    %511 = vmatprep.subr.mxu0 %v180
    %512 = vmatpush1.msra.mxu0 %v179
    %513 = vmatprep.subr.mxu0 %v184
    %514 = vmatpush1.msra.mxu0 %v183
    %515 = vmatprep.subr.mxu0 %v188
    %516 = vmatpush1.msra.mxu0 %v187
    %517 = vmatprep.subr.mxu0 %v192
    %518 = vmatpush1.msra.mxu0 %v191
    %519 = vmatprep.subr.mxu0 0.0
    %520 = vmatpush1.msra.mxu0 0.0
    %521 = vmatprep.subr.mxu0 0.0
    %522 = vmatpush1.msra.mxu0 0.0
    %523 = vmatprep.subr.mxu0 0.0
    %524 = vmatpush1.msra.mxu0 0.0
    %525 = vmatprep.subr.mxu0 0.0
    %526 = vmatpush1.msra.mxu0 0.0
    %527 = vmatprep.subr.mxu0 0.0
    %528 = vmatpush1.msra.mxu0 0.0
    %529 = vmatprep.subr.mxu0 0.0
    %530 = vmatpush1.msra.mxu0 0.0
    %531 = vmatprep.subr.mxu0 0.0
    %532 = vmatpush1.msra.mxu0 0.0
    %533 = vmatprep.subr.mxu0 0.0
    %534 = vmatpush1.msra.mxu0 0.0
    %535 = vmatprep.subr.mxu0 0.0
    %536 = vmatpush1.msra.mxu0 0.0
    %537 = vmatprep.subr.mxu0 0.0
    %538 = vmatpush1.msra.mxu0 0.0
    %539 = vmatprep.subr.mxu0 0.0
    %540 = vmatpush1.msra.mxu0 0.0
    %541 = vmatprep.subr.mxu0 0.0
    %542 = vmatpush1.msra.mxu0 0.0
    %543 = vmatprep.subr.mxu0 0.0
    %544 = vmatpush1.msra.mxu0 0.0
    %545 = vmatprep.subr.mxu0 0.0
    %546 = vmatpush1.msra.mxu0 0.0
    %547 = vmatprep.subr.mxu0 0.0
    %548 = vmatpush1.msra.mxu0 0.0
    %549 = vmatprep.subr.mxu0 0.0
    %550 = vmatpush1.msra.mxu0 0.0
    %551 = vmatprep.mubr.f32.mxu0 0.0
    %552 = vmatmul.mubr.f32.gmra.mrb[0].mxu0 0.0
    %v553 = vpop.f32.mrb[0].mxu0
    %v554 = vadd.f32 0.0, %v553
    %v555 = vpop.f32.mrb[0].mxu0
    %v556 = vadd.f32 0.0, %v555
    %557 = vdwg.mxu0
    %558 = vmatprep.subr.mxu0 %v134
    %559 = vmatpush1.msra.mxu0 %v133
    %560 = vmatprep.subr.mxu0 %v138
    %561 = vmatpush1.msra.mxu0 %v137
    %562 = vmatprep.subr.mxu0 %v142
    %563 = vmatpush1.msra.mxu0 %v141
    %564 = vmatprep.subr.mxu0 %v146
    %565 = vmatpush1.msra.mxu0 %v145
    %566 = vmatprep.subr.mxu0 %v150
    %567 = vmatpush1.msra.mxu0 %v149
    %568 = vmatprep.subr.mxu0 %v154
    %569 = vmatpush1.msra.mxu0 %v153
    %570 = vmatprep.subr.mxu0 %v158
    %571 = vmatpush1.msra.mxu0 %v157
    %572 = vmatprep.subr.mxu0 %v162
    %573 = vmatpush1.msra.mxu0 %v161
    %574 = vmatprep.subr.mxu0 %v166
    %575 = vmatpush1.msra.mxu0 %v165
    %576 = vmatprep.subr.mxu0 %v170
    %577 = vmatpush1.msra.mxu0 %v169
    %578 = vmatprep.subr.mxu0 %v174
    %579 = vmatpush1.msra.mxu0 %v173
    %580 = vmatprep.subr.mxu0 %v178
    %581 = vmatpush1.msra.mxu0 %v177
    %582 = vmatprep.subr.mxu0 %v182
    %583 = vmatpush1.msra.mxu0 %v181
    %584 = vmatprep.subr.mxu0 %v186
    %585 = vmatpush1.msra.mxu0 %v185
    %586 = vmatprep.subr.mxu0 %v190
    %587 = vmatpush1.msra.mxu0 %v189
    %588 = vmatprep.subr.mxu0 %v194
    %589 = vmatpush1.msra.mxu0 %v193
    %590 = vmatprep.subr.mxu0 0.0
    %591 = vmatpush1.msra.mxu0 0.0
    %592 = vmatprep.subr.mxu0 0.0
    %593 = vmatpush1.msra.mxu0 0.0
    %594 = vmatprep.subr.mxu0 0.0
    %595 = vmatpush1.msra.mxu0 0.0
    %596 = vmatprep.subr.mxu0 0.0
    %597 = vmatpush1.msra.mxu0 0.0
    %598 = vmatprep.subr.mxu0 0.0
    %599 = vmatpush1.msra.mxu0 0.0
    %600 = vmatprep.subr.mxu0 0.0
    %601 = vmatpush1.msra.mxu0 0.0
    %602 = vmatprep.subr.mxu0 0.0
    %603 = vmatpush1.msra.mxu0 0.0
    %604 = vmatprep.subr.mxu0 0.0
    %605 = vmatpush1.msra.mxu0 0.0
    %606 = vmatprep.subr.mxu0 0.0
    %607 = vmatpush1.msra.mxu0 0.0
    %608 = vmatprep.subr.mxu0 0.0
    %609 = vmatpush1.msra.mxu0 0.0
    %610 = vmatprep.subr.mxu0 0.0
    %611 = vmatpush1.msra.mxu0 0.0
    %612 = vmatprep.subr.mxu0 0.0
    %613 = vmatpush1.msra.mxu0 0.0
    %614 = vmatprep.subr.mxu0 0.0
    %615 = vmatpush1.msra.mxu0 0.0
    %616 = vmatprep.subr.mxu0 0.0
    %617 = vmatpush1.msra.mxu0 0.0
    %618 = vmatprep.subr.mxu0 0.0
    %619 = vmatpush1.msra.mxu0 0.0
    %620 = vmatprep.subr.mxu0 0.0
    %621 = vmatpush1.msra.mxu0 0.0
    %622 = vmatprep.mubr.f32.mxu0 0.0
    %623 = vmatmul.mubr.f32.gmra.mrb[0].mxu0 0.0
    %v624 = vpop.f32.mrb[0].mxu0
    %v625 = vadd.f32 0.0, %v624
    %v626 = vpop.f32.mrb[0].mxu0
    %v627 = vadd.f32 0.0, %v626
    %628 = vdwg.mxu0
    %v629 = vadd.f32 %v483, %v554
    %v630 = vadd.f32 %v484, %v556
    %v631 = vadd.f32 %v485, %v625
    %v632 = vadd.f32 %v486, %v627
    %v633 = vxor.u32 %v629, 2147483648
    %v634 = vmul.f32 %v633, 1.442695
    %v635 = vpow.pop %v634
    %v636 = vadd.f32 %v635, 1.0
    %v637 = vrcp.pop %v636
    %v638 = vmul.f32 1.0, %v637
    %v639 = vxor.u32 %v630, 2147483648
    %v640 = vmul.f32 %v639, 1.442695
    %v641 = vpow.pop %v640
    %v642 = vadd.f32 %v641, 1.0
    %v643 = vrcp.pop %v642
    %v644 = vmul.f32 1.0, %v643
    %v645 = vtanh.pop %v631
    %v646 = vxor.u32 %v632, 2147483648
    %v647 = vmul.f32 %v646, 1.442695
    %v648 = vpow.pop %v647
    %v649 = vadd.f32 %v648, 1.0
    %v650 = vrcp.pop %v649
    %v651 = vmul.f32 1.0, %v650
    %v652 = vmul.f32 %v644, 0.0
    %v653 = vmul.f32 %v638, %v645
    %v654 = vadd.f32 %v652, %v653
    %v655 = vtanh.pop %v654
    %v656 = vmul.f32 %v651, %v655
    %657 = vst [vmem:[#allocation2] sm:$0xff] %v656
    %s658 = scalar_lea.vmem [#allocation3], 32
    %v659 = vld [vmem:[%s658] sm:$0xff]
    %v660 = vld [vmem:[%s658 + $0x8] sm:$0xff]
    %v661 = vld [vmem:[%s658 + $0x10] sm:$0xff]
    %v662 = vld [vmem:[%s658 + $0x18] sm:$0xff]
    %663 = vmatprep.subr.mxu0 %v132
    %664 = vmatpush1.msra.mxu0 %v131
    %665 = vmatprep.subr.mxu0 %v136
    %666 = vmatpush1.msra.mxu0 %v135
    %667 = vmatprep.subr.mxu0 %v140
    %668 = vmatpush1.msra.mxu0 %v139
    %669 = vmatprep.subr.mxu0 %v144
    %670 = vmatpush1.msra.mxu0 %v143
    %671 = vmatprep.subr.mxu0 %v148
    %672 = vmatpush1.msra.mxu0 %v147
    %673 = vmatprep.subr.mxu0 %v152
    %674 = vmatpush1.msra.mxu0 %v151
    %675 = vmatprep.subr.mxu0 %v156
    %676 = vmatpush1.msra.mxu0 %v155
    %677 = vmatprep.subr.mxu0 %v160
    %678 = vmatpush1.msra.mxu0 %v159
    %679 = vmatprep.subr.mxu0 %v164
    %680 = vmatpush1.msra.mxu0 %v163
    %681 = vmatprep.subr.mxu0 %v168
    %682 = vmatpush1.msra.mxu0 %v167
    %683 = vmatprep.subr.mxu0 %v172
    %684 = vmatpush1.msra.mxu0 %v171
    %685 = vmatprep.subr.mxu0 %v176
    %686 = vmatpush1.msra.mxu0 %v175
    %687 = vmatprep.subr.mxu0 %v180
    %688 = vmatpush1.msra.mxu0 %v179
    %689 = vmatprep.subr.mxu0 %v184
    %690 = vmatpush1.msra.mxu0 %v183
    %691 = vmatprep.subr.mxu0 %v188
    %692 = vmatpush1.msra.mxu0 %v187
    %693 = vmatprep.subr.mxu0 %v192
    %694 = vmatpush1.msra.mxu0 %v191
    %695 = vmatprep.subr.mxu0 0.0
    %696 = vmatpush1.msra.mxu0 0.0
    %697 = vmatprep.subr.mxu0 0.0
    %698 = vmatpush1.msra.mxu0 0.0
    %699 = vmatprep.subr.mxu0 0.0
    %700 = vmatpush1.msra.mxu0 0.0
    %701 = vmatprep.subr.mxu0 0.0
    %702 = vmatpush1.msra.mxu0 0.0
    %703 = vmatprep.subr.mxu0 0.0
    %704 = vmatpush1.msra.mxu0 0.0
    %705 = vmatprep.subr.mxu0 0.0
    %706 = vmatpush1.msra.mxu0 0.0
    %707 = vmatprep.subr.mxu0 0.0
    %708 = vmatpush1.msra.mxu0 0.0
    %709 = vmatprep.subr.mxu0 0.0
    %710 = vmatpush1.msra.mxu0 0.0
    %711 = vmatprep.subr.mxu0 0.0
    %712 = vmatpush1.msra.mxu0 0.0
    %713 = vmatprep.subr.mxu0 0.0
    %714 = vmatpush1.msra.mxu0 0.0
    %715 = vmatprep.subr.mxu0 0.0
    %716 = vmatpush1.msra.mxu0 0.0
    %717 = vmatprep.subr.mxu0 0.0
    %718 = vmatpush1.msra.mxu0 0.0
    %719 = vmatprep.subr.mxu0 0.0
    %720 = vmatpush1.msra.mxu0 0.0
    %721 = vmatprep.subr.mxu0 0.0
    %722 = vmatpush1.msra.mxu0 0.0
    %723 = vmatprep.subr.mxu0 0.0
    %724 = vmatpush1.msra.mxu0 0.0
    %725 = vmatprep.subr.mxu0 0.0
    %726 = vmatpush1.msra.mxu0 0.0
    %727 = vmatprep.mubr.f32.mxu0 0.0
    %728 = vmatmul.mubr.f32.gmra.mrb[0].mxu0 %v656
    %v729 = vpop.f32.mrb[0].mxu0
    %v730 = vadd.f32 0.0, %v729
    %v731 = vpop.f32.mrb[0].mxu0
    %v732 = vadd.f32 0.0, %v731
    %733 = vdwg.mxu0
    %734 = vmatprep.subr.mxu0 %v134
    %735 = vmatpush1.msra.mxu0 %v133
    %736 = vmatprep.subr.mxu0 %v138
    %737 = vmatpush1.msra.mxu0 %v137
    %738 = vmatprep.subr.mxu0 %v142
    %739 = vmatpush1.msra.mxu0 %v141
    %740 = vmatprep.subr.mxu0 %v146
    %741 = vmatpush1.msra.mxu0 %v145
    %742 = vmatprep.subr.mxu0 %v150
    %743 = vmatpush1.msra.mxu0 %v149
    %744 = vmatprep.subr.mxu0 %v154
    %745 = vmatpush1.msra.mxu0 %v153
    %746 = vmatprep.subr.mxu0 %v158
    %747 = vmatpush1.msra.mxu0 %v157
    %748 = vmatprep.subr.mxu0 %v162
    %749 = vmatpush1.msra.mxu0 %v161
    %750 = vmatprep.subr.mxu0 %v166
    %751 = vmatpush1.msra.mxu0 %v165
    %752 = vmatprep.subr.mxu0 %v170
    %753 = vmatpush1.msra.mxu0 %v169
    %754 = vmatprep.subr.mxu0 %v174
    %755 = vmatpush1.msra.mxu0 %v173
    %756 = vmatprep.subr.mxu0 %v178
    %757 = vmatpush1.msra.mxu0 %v177
    %758 = vmatprep.subr.mxu0 %v182
    %759 = vmatpush1.msra.mxu0 %v181
    %760 = vmatprep.subr.mxu0 %v186
    %761 = vmatpush1.msra.mxu0 %v185
    %762 = vmatprep.subr.mxu0 %v190
    %763 = vmatpush1.msra.mxu0 %v189
    %764 = vmatprep.subr.mxu0 %v194
    %765 = vmatpush1.msra.mxu0 %v193
    %766 = vmatprep.subr.mxu0 0.0
    %767 = vmatpush1.msra.mxu0 0.0
    %768 = vmatprep.subr.mxu0 0.0
    %769 = vmatpush1.msra.mxu0 0.0
    %770 = vmatprep.subr.mxu0 0.0
    %771 = vmatpush1.msra.mxu0 0.0
    %772 = vmatprep.subr.mxu0 0.0
    %773 = vmatpush1.msra.mxu0 0.0
    %774 = vmatprep.subr.mxu0 0.0
    %775 = vmatpush1.msra.mxu0 0.0
    %776 = vmatprep.subr.mxu0 0.0
    %777 = vmatpush1.msra.mxu0 0.0
    %778 = vmatprep.subr.mxu0 0.0
    %779 = vmatpush1.msra.mxu0 0.0
    %780 = vmatprep.subr.mxu0 0.0
    %781 = vmatpush1.msra.mxu0 0.0
    %782 = vmatprep.subr.mxu0 0.0
    %783 = vmatpush1.msra.mxu0 0.0
    %784 = vmatprep.subr.mxu0 0.0
    %785 = vmatpush1.msra.mxu0 0.0
    %786 = vmatprep.subr.mxu0 0.0
    %787 = vmatpush1.msra.mxu0 0.0
    %788 = vmatprep.subr.mxu0 0.0
    %789 = vmatpush1.msra.mxu0 0.0
    %790 = vmatprep.subr.mxu0 0.0
    %791 = vmatpush1.msra.mxu0 0.0
    %792 = vmatprep.subr.mxu0 0.0
    %793 = vmatpush1.msra.mxu0 0.0
    %794 = vmatprep.subr.mxu0 0.0
    %795 = vmatpush1.msra.mxu0 0.0
    %796 = vmatprep.subr.mxu0 0.0
    %797 = vmatpush1.msra.mxu0 0.0
    %798 = vmatprep.mubr.f32.mxu0 0.0
    %799 = vmatmul.mubr.f32.gmra.mrb[0].mxu0 %v656
    %v800 = vpop.f32.mrb[0].mxu0
    %v801 = vadd.f32 0.0, %v800
    %v802 = vpop.f32.mrb[0].mxu0
    %v803 = vadd.f32 0.0, %v802
    %804 = vdwg.mxu0
    %v805 = vadd.f32 %v659, %v730
    %v806 = vadd.f32 %v660, %v732
    %v807 = vadd.f32 %v661, %v801
    %v808 = vadd.f32 %v662, %v803
    %v809 = vxor.u32 %v805, 2147483648
    %v810 = vmul.f32 %v809, 1.442695
    %v811 = vpow.pop %v810
    %v812 = vadd.f32 %v811, 1.0
    %v813 = vrcp.pop %v812
    %v814 = vmul.f32 1.0, %v813
    %v815 = vxor.u32 %v806, 2147483648
    %v816 = vmul.f32 %v815, 1.442695
    %v817 = vpow.pop %v816
    %v818 = vadd.f32 %v817, 1.0
    %v819 = vrcp.pop %v818
    %v820 = vmul.f32 1.0, %v819
    %v821 = vtanh.pop %v807
    %v822 = vxor.u32 %v808, 2147483648
    %v823 = vmul.f32 %v822, 1.442695
    %v824 = vpow.pop %v823
    %v825 = vadd.f32 %v824, 1.0
    %v826 = vrcp.pop %v825
    %v827 = vmul.f32 1.0, %v826
    %v828 = vmul.f32 %v820, %v654
    %v829 = vmul.f32 %v814, %v821
    %v830 = vadd.f32 %v828, %v829
    %v831 = vtanh.pop %v830
    %v832 = vmul.f32 %v827, %v831
    %s833 = scalar_lea.vmem [#allocation2], 8
    %834 = vst [vmem:[%s833] sm:$0xff] %v832
    %s835 = scalar_lea.vmem [#allocation3], 64
    %v836 = vld [vmem:[%s835] sm:$0xff]
    %v837 = vld [vmem:[%s835 + $0x8] sm:$0xff]
    %v838 = vld [vmem:[%s835 + $0x10] sm:$0xff]
    %v839 = vld [vmem:[%s835 + $0x18] sm:$0xff]
    %840 = vmatprep.subr.mxu0 %v132
    %841 = vmatpush1.msra.mxu0 %v131
    %842 = vmatprep.subr.mxu0 %v136
    %843 = vmatpush1.msra.mxu0 %v135
    %844 = vmatprep.subr.mxu0 %v140
    %845 = vmatpush1.msra.mxu0 %v139
    %846 = vmatprep.subr.mxu0 %v144
    %847 = vmatpush1.msra.mxu0 %v143
    %848 = vmatprep.subr.mxu0 %v148
    %849 = vmatpush1.msra.mxu0 %v147
    %850 = vmatprep.subr.mxu0 %v152
    %851 = vmatpush1.msra.mxu0 %v151
    %852 = vmatprep.subr.mxu0 %v156
    %853 = vmatpush1.msra.mxu0 %v155
    %854 = vmatprep.subr.mxu0 %v160
    %855 = vmatpush1.msra.mxu0 %v159
    %856 = vmatprep.subr.mxu0 %v164
    %857 = vmatpush1.msra.mxu0 %v163
    %858 = vmatprep.subr.mxu0 %v168
    %859 = vmatpush1.msra.mxu0 %v167
    %860 = vmatprep.subr.mxu0 %v172
    %861 = vmatpush1.msra.mxu0 %v171
    %862 = vmatprep.subr.mxu0 %v176
    %863 = vmatpush1.msra.mxu0 %v175
    %864 = vmatprep.subr.mxu0 %v180
    %865 = vmatpush1.msra.mxu0 %v179
    %866 = vmatprep.subr.mxu0 %v184
    %867 = vmatpush1.msra.mxu0 %v183
    %868 = vmatprep.subr.mxu0 %v188
    %869 = vmatpush1.msra.mxu0 %v187
    %870 = vmatprep.subr.mxu0 %v192
    %871 = vmatpush1.msra.mxu0 %v191
    %872 = vmatprep.subr.mxu0 0.0
    %873 = vmatpush1.msra.mxu0 0.0
    %874 = vmatprep.subr.mxu0 0.0
    %875 = vmatpush1.msra.mxu0 0.0
    %876 = vmatprep.subr.mxu0 0.0
    %877 = vmatpush1.msra.mxu0 0.0
    %878 = vmatprep.subr.mxu0 0.0
    %879 = vmatpush1.msra.mxu0 0.0
    %880 = vmatprep.subr.mxu0 0.0
    %881 = vmatpush1.msra.mxu0 0.0
    %882 = vmatprep.subr.mxu0 0.0
    %883 = vmatpush1.msra.mxu0 0.0
    %884 = vmatprep.subr.mxu0 0.0
    %885 = vmatpush1.msra.mxu0 0.0
    %886 = vmatprep.subr.mxu0 0.0
    %887 = vmatpush1.msra.mxu0 0.0
    %888 = vmatprep.subr.mxu0 0.0
    %889 = vmatpush1.msra.mxu0 0.0
    %890 = vmatprep.subr.mxu0 0.0
    %891 = vmatpush1.msra.mxu0 0.0
    %892 = vmatprep.subr.mxu0 0.0
    %893 = vmatpush1.msra.mxu0 0.0
    %894 = vmatprep.subr.mxu0 0.0
    %895 = vmatpush1.msra.mxu0 0.0
    %896 = vmatprep.subr.mxu0 0.0
    %897 = vmatpush1.msra.mxu0 0.0
    %898 = vmatprep.subr.mxu0 0.0
    %899 = vmatpush1.msra.mxu0 0.0
    %900 = vmatprep.subr.mxu0 0.0
    %901 = vmatpush1.msra.mxu0 0.0
    %902 = vmatprep.subr.mxu0 0.0
    %903 = vmatpush1.msra.mxu0 0.0
    %904 = vmatprep.mubr.f32.mxu0 0.0
    %905 = vmatmul.mubr.f32.gmra.mrb[0].mxu0 %v832
    %v906 = vpop.f32.mrb[0].mxu0
    %v907 = vadd.f32 0.0, %v906
    %v908 = vpop.f32.mrb[0].mxu0
    %v909 = vadd.f32 0.0, %v908
    %910 = vdwg.mxu0
    %911 = vmatprep.subr.mxu0 %v134
    %912 = vmatpush1.msra.mxu0 %v133
    %913 = vmatprep.subr.mxu0 %v138
    %914 = vmatpush1.msra.mxu0 %v137
    %915 = vmatprep.subr.mxu0 %v142
    %916 = vmatpush1.msra.mxu0 %v141
    %917 = vmatprep.subr.mxu0 %v146
    %918 = vmatpush1.msra.mxu0 %v145
    %919 = vmatprep.subr.mxu0 %v150
    %920 = vmatpush1.msra.mxu0 %v149
    %921 = vmatprep.subr.mxu0 %v154
    %922 = vmatpush1.msra.mxu0 %v153
    %923 = vmatprep.subr.mxu0 %v158
    %924 = vmatpush1.msra.mxu0 %v157
    %925 = vmatprep.subr.mxu0 %v162
    %926 = vmatpush1.msra.mxu0 %v161
    %927 = vmatprep.subr.mxu0 %v166
    %928 = vmatpush1.msra.mxu0 %v165
    %929 = vmatprep.subr.mxu0 %v170
    %930 = vmatpush1.msra.mxu0 %v169
    %931 = vmatprep.subr.mxu0 %v174
    %932 = vmatpush1.msra.mxu0 %v173
    %933 = vmatprep.subr.mxu0 %v178
    %934 = vmatpush1.msra.mxu0 %v177
    %935 = vmatprep.subr.mxu0 %v182
    %936 = vmatpush1.msra.mxu0 %v181
    %937 = vmatprep.subr.mxu0 %v186
    %938 = vmatpush1.msra.mxu0 %v185
    %939 = vmatprep.subr.mxu0 %v190
    %940 = vmatpush1.msra.mxu0 %v189
    %941 = vmatprep.subr.mxu0 %v194
    %942 = vmatpush1.msra.mxu0 %v193
    %943 = vmatprep.subr.mxu0 0.0
    %944 = vmatpush1.msra.mxu0 0.0
    %945 = vmatprep.subr.mxu0 0.0
    %946 = vmatpush1.msra.mxu0 0.0
    %947 = vmatprep.subr.mxu0 0.0
    %948 = vmatpush1.msra.mxu0 0.0
    %949 = vmatprep.subr.mxu0 0.0
    %950 = vmatpush1.msra.mxu0 0.0
    %951 = vmatprep.subr.mxu0 0.0
    %952 = vmatpush1.msra.mxu0 0.0
    %953 = vmatprep.subr.mxu0 0.0
    %954 = vmatpush1.msra.mxu0 0.0
    %955 = vmatprep.subr.mxu0 0.0
    %956 = vmatpush1.msra.mxu0 0.0
    %957 = vmatprep.subr.mxu0 0.0
    %958 = vmatpush1.msra.mxu0 0.0
    %959 = vmatprep.subr.mxu0 0.0
    %960 = vmatpush1.msra.mxu0 0.0
    %961 = vmatprep.subr.mxu0 0.0
    %962 = vmatpush1.msra.mxu0 0.0
    %963 = vmatprep.subr.mxu0 0.0
    %964 = vmatpush1.msra.mxu0 0.0
    %965 = vmatprep.subr.mxu0 0.0
    %966 = vmatpush1.msra.mxu0 0.0
    %967 = vmatprep.subr.mxu0 0.0
    %968 = vmatpush1.msra.mxu0 0.0
    %969 = vmatprep.subr.mxu0 0.0
    %970 = vmatpush1.msra.mxu0 0.0
    %971 = vmatprep.subr.mxu0 0.0
    %972 = vmatpush1.msra.mxu0 0.0
    %973 = vmatprep.subr.mxu0 0.0
    %974 = vmatpush1.msra.mxu0 0.0
    %975 = vmatprep.mubr.f32.mxu0 0.0
    %976 = vmatmul.mubr.f32.gmra.mrb[0].mxu0 %v832
    %v977 = vpop.f32.mrb[0].mxu0
    %v978 = vadd.f32 0.0, %v977
    %v979 = vpop.f32.mrb[0].mxu0
    %v980 = vadd.f32 0.0, %v979
    %981 = vdwg.mxu0
    %v982 = vadd.f32 %v836, %v907
    %v983 = vadd.f32 %v837, %v909
    %v984 = vadd.f32 %v838, %v978
    %v985 = vadd.f32 %v839, %v980
    %v986 = vxor.u32 %v982, 2147483648
    %v987 = vmul.f32 %v986, 1.442695
    %v988 = vpow.pop %v987
    %v989 = vadd.f32 %v988, 1.0
    %v990 = vrcp.pop %v989
    %v991 = vmul.f32 1.0, %v990
    %v992 = vxor.u32 %v983, 2147483648
    %v993 = vmul.f32 %v992, 1.442695
    %v994 = vpow.pop %v993
    %v995 = vadd.f32 %v994, 1.0
    %v996 = vrcp.pop %v995
    %v997 = vmul.f32 1.0, %v996
    %v998 = vtanh.pop %v984
    %v999 = vxor.u32 %v985, 2147483648
    %v1000 = vmul.f32 %v999, 1.442695
    %v1001 = vpow.pop %v1000
    %v1002 = vadd.f32 %v1001, 1.0
    %v1003 = vrcp.pop %v1002
    %v1004 = vmul.f32 1.0, %v1003
    %v1005 = vmul.f32 %v997, %v830
    %v1006 = vmul.f32 %v991, %v998
    %v1007 = vadd.f32 %v1005, %v1006
    %v1008 = vtanh.pop %v1007
    %v1009 = vmul.f32 %v1004, %v1008
    %s1010 = scalar_lea.vmem [#allocation2], 16
    %1011 = vst [vmem:[%s1010] sm:$0xff] %v1009
    %s1012 = scalar_lea.vmem [#allocation3], 96
    %v1013 = vld [vmem:[%s1012] sm:$0xff]
    %v1014 = vld [vmem:[%s1012 + $0x8] sm:$0xff]
    %v1015 = vld [vmem:[%s1012 + $0x10] sm:$0xff]
    %v1016 = vld [vmem:[%s1012 + $0x18] sm:$0xff]
    %1017 = vmatprep.subr.mxu0 %v132
    %1018 = vmatpush1.msra.mxu0 %v131
    %1019 = vmatprep.subr.mxu0 %v136
    %1020 = vmatpush1.msra.mxu0 %v135
    %1021 = vmatprep.subr.mxu0 %v140
    %1022 = vmatpush1.msra.mxu0 %v139
    %1023 = vmatprep.subr.mxu0 %v144
    %1024 = vmatpush1.msra.mxu0 %v143
    %1025 = vmatprep.subr.mxu0 %v148
    %1026 = vmatpush1.msra.mxu0 %v147
    %1027 = vmatprep.subr.mxu0 %v152
    %1028 = vmatpush1.msra.mxu0 %v151
    %1029 = vmatprep.subr.mxu0 %v156
    %1030 = vmatpush1.msra.mxu0 %v155
    %1031 = vmatprep.subr.mxu0 %v160
    %1032 = vmatpush1.msra.mxu0 %v159
    %1033 = vmatprep.subr.mxu0 %v164
    %1034 = vmatpush1.msra.mxu0 %v163
    %1035 = vmatprep.subr.mxu0 %v168
    %1036 = vmatpush1.msra.mxu0 %v167
    %1037 = vmatprep.subr.mxu0 %v172
    %1038 = vmatpush1.msra.mxu0 %v171
    %1039 = vmatprep.subr.mxu0 %v176
    %1040 = vmatpush1.msra.mxu0 %v175
    %1041 = vmatprep.subr.mxu0 %v180
    %1042 = vmatpush1.msra.mxu0 %v179
    %1043 = vmatprep.subr.mxu0 %v184
    %1044 = vmatpush1.msra.mxu0 %v183
    %1045 = vmatprep.subr.mxu0 %v188
    %1046 = vmatpush1.msra.mxu0 %v187
    %1047 = vmatprep.subr.mxu0 %v192
    %1048 = vmatpush1.msra.mxu0 %v191
    %1049 = vmatprep.subr.mxu0 0.0
    %1050 = vmatpush1.msra.mxu0 0.0
    %1051 = vmatprep.subr.mxu0 0.0
    %1052 = vmatpush1.msra.mxu0 0.0
    %1053 = vmatprep.subr.mxu0 0.0
    %1054 = vmatpush1.msra.mxu0 0.0
    %1055 = vmatprep.subr.mxu0 0.0
    %1056 = vmatpush1.msra.mxu0 0.0
    %1057 = vmatprep.subr.mxu0 0.0
    %1058 = vmatpush1.msra.mxu0 0.0
    %1059 = vmatprep.subr.mxu0 0.0
    %1060 = vmatpush1.msra.mxu0 0.0
    %1061 = vmatprep.subr.mxu0 0.0
    %1062 = vmatpush1.msra.mxu0 0.0
    %1063 = vmatprep.subr.mxu0 0.0
    %1064 = vmatpush1.msra.mxu0 0.0
    %1065 = vmatprep.subr.mxu0 0.0
    %1066 = vmatpush1.msra.mxu0 0.0
    %1067 = vmatprep.subr.mxu0 0.0
    %1068 = vmatpush1.msra.mxu0 0.0
    %1069 = vmatprep.subr.mxu0 0.0
    %1070 = vmatpush1.msra.mxu0 0.0
    %1071 = vmatprep.subr.mxu0 0.0
    %1072 = vmatpush1.msra.mxu0 0.0
    %1073 = vmatprep.subr.mxu0 0.0
    %1074 = vmatpush1.msra.mxu0 0.0
    %1075 = vmatprep.subr.mxu0 0.0
    %1076 = vmatpush1.msra.mxu0 0.0
    %1077 = vmatprep.subr.mxu0 0.0
    %1078 = vmatpush1.msra.mxu0 0.0
    %1079 = vmatprep.subr.mxu0 0.0
    %1080 = vmatpush1.msra.mxu0 0.0
    %1081 = vmatprep.mubr.f32.mxu0 0.0
    %1082 = vmatmul.mubr.f32.gmra.mrb[0].mxu0 %v1009
    %v1083 = vpop.f32.mrb[0].mxu0
    %v1084 = vadd.f32 0.0, %v1083
    %v1085 = vpop.f32.mrb[0].mxu0
    %v1086 = vadd.f32 0.0, %v1085
    %1087 = vdwg.mxu0
    %1088 = vmatprep.subr.mxu0 %v134
    %1089 = vmatpush1.msra.mxu0 %v133
    %1090 = vmatprep.subr.mxu0 %v138
    %1091 = vmatpush1.msra.mxu0 %v137
    %1092 = vmatprep.subr.mxu0 %v142
    %1093 = vmatpush1.msra.mxu0 %v141
    %1094 = vmatprep.subr.mxu0 %v146
    %1095 = vmatpush1.msra.mxu0 %v145
    %1096 = vmatprep.subr.mxu0 %v150
    %1097 = vmatpush1.msra.mxu0 %v149
    %1098 = vmatprep.subr.mxu0 %v154
    %1099 = vmatpush1.msra.mxu0 %v153
    %1100 = vmatprep.subr.mxu0 %v158
    %1101 = vmatpush1.msra.mxu0 %v157
    %1102 = vmatprep.subr.mxu0 %v162
    %1103 = vmatpush1.msra.mxu0 %v161
    %1104 = vmatprep.subr.mxu0 %v166
    %1105 = vmatpush1.msra.mxu0 %v165
    %1106 = vmatprep.subr.mxu0 %v170
    %1107 = vmatpush1.msra.mxu0 %v169
    %1108 = vmatprep.subr.mxu0 %v174
    %1109 = vmatpush1.msra.mxu0 %v173
    %1110 = vmatprep.subr.mxu0 %v178
    %1111 = vmatpush1.msra.mxu0 %v177
    %1112 = vmatprep.subr.mxu0 %v182
    %1113 = vmatpush1.msra.mxu0 %v181
    %1114 = vmatprep.subr.mxu0 %v186
    %1115 = vmatpush1.msra.mxu0 %v185
    %1116 = vmatprep.subr.mxu0 %v190
    %1117 = vmatpush1.msra.mxu0 %v189
    %1118 = vmatprep.subr.mxu0 %v194
    %1119 = vmatpush1.msra.mxu0 %v193
    %1120 = vmatprep.subr.mxu0 0.0
    %1121 = vmatpush1.msra.mxu0 0.0
    %1122 = vmatprep.subr.mxu0 0.0
    %1123 = vmatpush1.msra.mxu0 0.0
    %1124 = vmatprep.subr.mxu0 0.0
    %1125 = vmatpush1.msra.mxu0 0.0
    %1126 = vmatprep.subr.mxu0 0.0
    %1127 = vmatpush1.msra.mxu0 0.0
    %1128 = vmatprep.subr.mxu0 0.0
    %1129 = vmatpush1.msra.mxu0 0.0
    %1130 = vmatprep.subr.mxu0 0.0
    %1131 = vmatpush1.msra.mxu0 0.0
    %1132 = vmatprep.subr.mxu0 0.0
    %1133 = vmatpush1.msra.mxu0 0.0
    %1134 = vmatprep.subr.mxu0 0.0
    %1135 = vmatpush1.msra.mxu0 0.0
    %1136 = vmatprep.subr.mxu0 0.0
    %1137 = vmatpush1.msra.mxu0 0.0
    %1138 = vmatprep.subr.mxu0 0.0
    %1139 = vmatpush1.msra.mxu0 0.0
    %1140 = vmatprep.subr.mxu0 0.0
    %1141 = vmatpush1.msra.mxu0 0.0
    %1142 = vmatprep.subr.mxu0 0.0
    %1143 = vmatpush1.msra.mxu0 0.0
    %1144 = vmatprep.subr.mxu0 0.0
    %1145 = vmatpush1.msra.mxu0 0.0
    %1146 = vmatprep.subr.mxu0 0.0
    %1147 = vmatpush1.msra.mxu0 0.0
    %1148 = vmatprep.subr.mxu0 0.0
    %1149 = vmatpush1.msra.mxu0 0.0
    %1150 = vmatprep.subr.mxu0 0.0
    %1151 = vmatpush1.msra.mxu0 0.0
    %1152 = vmatprep.mubr.f32.mxu0 0.0
    %1153 = vmatmul.mubr.f32.gmra.mrb[0].mxu0 %v1009
    %v1154 = vpop.f32.mrb[0].mxu0
    %v1155 = vadd.f32 0.0, %v1154
    %v1156 = vpop.f32.mrb[0].mxu0
    %v1157 = vadd.f32 0.0, %v1156
    %1158 = vdwg.mxu0
    %v1159 = vadd.f32 %v1013, %v1084
    %v1160 = vadd.f32 %v1014, %v1086
    %v1161 = vadd.f32 %v1015, %v1155
    %v1162 = vadd.f32 %v1016, %v1157
    %v1163 = vxor.u32 %v1159, 2147483648
    %v1164 = vmul.f32 %v1163, 1.442695
    %v1165 = vpow.pop %v1164
    %v1166 = vadd.f32 %v1165, 1.0
    %v1167 = vrcp.pop %v1166
    %v1168 = vmul.f32 1.0, %v1167
    %v1169 = vxor.u32 %v1160, 2147483648
    %v1170 = vmul.f32 %v1169, 1.442695
    %v1171 = vpow.pop %v1170
    %v1172 = vadd.f32 %v1171, 1.0
    %v1173 = vrcp.pop %v1172
    %v1174 = vmul.f32 1.0, %v1173
    %v1175 = vtanh.pop %v1161
    %v1176 = vxor.u32 %v1162, 2147483648
    %v1177 = vmul.f32 %v1176, 1.442695
    %v1178 = vpow.pop %v1177
    %v1179 = vadd.f32 %v1178, 1.0
    %v1180 = vrcp.pop %v1179
    %v1181 = vmul.f32 1.0, %v1180
    %v1182 = vmul.f32 %v1174, %v1007
    %v1183 = vmul.f32 %v1168, %v1175
    %v1184 = vadd.f32 %v1182, %v1183
    %v1185 = vtanh.pop %v1184
    %v1186 = vmul.f32 %v1181, %v1185
    %s1187 = scalar_lea.vmem [#allocation2], 24
    %1188 = vst [vmem:[%s1187] sm:$0xff] %v1186
    %s1189 = scalar_lea.vmem [#allocation3], 128
    %v1190 = vld [vmem:[%s1189] sm:$0xff]
    %v1191 = vld [vmem:[%s1189 + $0x8] sm:$0xff]
    %v1192 = vld [vmem:[%s1189 + $0x10] sm:$0xff]
    %v1193 = vld [vmem:[%s1189 + $0x18] sm:$0xff]
    %1194 = vmatprep.subr.mxu0 %v132
    %1195 = vmatpush1.msra.mxu0 %v131
    %1196 = vmatprep.subr.mxu0 %v136
    %1197 = vmatpush1.msra.mxu0 %v135
    %1198 = vmatprep.subr.mxu0 %v140
    %1199 = vmatpush1.msra.mxu0 %v139
    %1200 = vmatprep.subr.mxu0 %v144
    %1201 = vmatpush1.msra.mxu0 %v143
    %1202 = vmatprep.subr.mxu0 %v148
    %1203 = vmatpush1.msra.mxu0 %v147
    %1204 = vmatprep.subr.mxu0 %v152
    %1205 = vmatpush1.msra.mxu0 %v151
    %1206 = vmatprep.subr.mxu0 %v156
    %1207 = vmatpush1.msra.mxu0 %v155
    %1208 = vmatprep.subr.mxu0 %v160
    %1209 = vmatpush1.msra.mxu0 %v159
    %1210 = vmatprep.subr.mxu0 %v164
    %1211 = vmatpush1.msra.mxu0 %v163
    %1212 = vmatprep.subr.mxu0 %v168
    %1213 = vmatpush1.msra.mxu0 %v167
    %1214 = vmatprep.subr.mxu0 %v172
    %1215 = vmatpush1.msra.mxu0 %v171
    %1216 = vmatprep.subr.mxu0 %v176
    %1217 = vmatpush1.msra.mxu0 %v175
    %1218 = vmatprep.subr.mxu0 %v180
    %1219 = vmatpush1.msra.mxu0 %v179
    %1220 = vmatprep.subr.mxu0 %v184
    %1221 = vmatpush1.msra.mxu0 %v183
    %1222 = vmatprep.subr.mxu0 %v188
    %1223 = vmatpush1.msra.mxu0 %v187
    %1224 = vmatprep.subr.mxu0 %v192
    %1225 = vmatpush1.msra.mxu0 %v191
    %1226 = vmatprep.subr.mxu0 0.0
    %1227 = vmatpush1.msra.mxu0 0.0
    %1228 = vmatprep.subr.mxu0 0.0
    %1229 = vmatpush1.msra.mxu0 0.0
    %1230 = vmatprep.subr.mxu0 0.0
    %1231 = vmatpush1.msra.mxu0 0.0
    %1232 = vmatprep.subr.mxu0 0.0
    %1233 = vmatpush1.msra.mxu0 0.0
    %1234 = vmatprep.subr.mxu0 0.0
    %1235 = vmatpush1.msra.mxu0 0.0
    %1236 = vmatprep.subr.mxu0 0.0
    %1237 = vmatpush1.msra.mxu0 0.0
    %1238 = vmatprep.subr.mxu0 0.0
    %1239 = vmatpush1.msra.mxu0 0.0
    %1240 = vmatprep.subr.mxu0 0.0
    %1241 = vmatpush1.msra.mxu0 0.0
    %1242 = vmatprep.subr.mxu0 0.0
    %1243 = vmatpush1.msra.mxu0 0.0
    %1244 = vmatprep.subr.mxu0 0.0
    %1245 = vmatpush1.msra.mxu0 0.0
    %1246 = vmatprep.subr.mxu0 0.0
    %1247 = vmatpush1.msra.mxu0 0.0
    %1248 = vmatprep.subr.mxu0 0.0
    %1249 = vmatpush1.msra.mxu0 0.0
    %1250 = vmatprep.subr.mxu0 0.0
    %1251 = vmatpush1.msra.mxu0 0.0
    %1252 = vmatprep.subr.mxu0 0.0
    %1253 = vmatpush1.msra.mxu0 0.0
    %1254 = vmatprep.subr.mxu0 0.0
    %1255 = vmatpush1.msra.mxu0 0.0
    %1256 = vmatprep.subr.mxu0 0.0
    %1257 = vmatpush1.msra.mxu0 0.0
    %1258 = vmatprep.mubr.f32.mxu0 0.0
    %1259 = vmatmul.mubr.f32.gmra.mrb[0].mxu0 %v1186
    %v1260 = vpop.f32.mrb[0].mxu0
    %v1261 = vadd.f32 0.0, %v1260
    %v1262 = vpop.f32.mrb[0].mxu0
    %v1263 = vadd.f32 0.0, %v1262
    %1264 = vdwg.mxu0
    %1265 = vmatprep.subr.mxu0 %v134
    %1266 = vmatpush1.msra.mxu0 %v133
    %1267 = vmatprep.subr.mxu0 %v138
    %1268 = vmatpush1.msra.mxu0 %v137
    %1269 = vmatprep.subr.mxu0 %v142
    %1270 = vmatpush1.msra.mxu0 %v141
    %1271 = vmatprep.subr.mxu0 %v146
    %1272 = vmatpush1.msra.mxu0 %v145
    %1273 = vmatprep.subr.mxu0 %v150
    %1274 = vmatpush1.msra.mxu0 %v149
    %1275 = vmatprep.subr.mxu0 %v154
    %1276 = vmatpush1.msra.mxu0 %v153
    %1277 = vmatprep.subr.mxu0 %v158
    %1278 = vmatpush1.msra.mxu0 %v157
    %1279 = vmatprep.subr.mxu0 %v162
    %1280 = vmatpush1.msra.mxu0 %v161
    %1281 = vmatprep.subr.mxu0 %v166
    %1282 = vmatpush1.msra.mxu0 %v165
    %1283 = vmatprep.subr.mxu0 %v170
    %1284 = vmatpush1.msra.mxu0 %v169
    %1285 = vmatprep.subr.mxu0 %v174
    %1286 = vmatpush1.msra.mxu0 %v173
    %1287 = vmatprep.subr.mxu0 %v178
    %1288 = vmatpush1.msra.mxu0 %v177
    %1289 = vmatprep.subr.mxu0 %v182
    %1290 = vmatpush1.msra.mxu0 %v181
    %1291 = vmatprep.subr.mxu0 %v186
    %1292 = vmatpush1.msra.mxu0 %v185
    %1293 = vmatprep.subr.mxu0 %v190
    %1294 = vmatpush1.msra.mxu0 %v189
    %1295 = vmatprep.subr.mxu0 %v194
    %1296 = vmatpush1.msra.mxu0 %v193
    %1297 = vmatprep.subr.mxu0 0.0
    %1298 = vmatpush1.msra.mxu0 0.0
    %1299 = vmatprep.subr.mxu0 0.0
    %1300 = vmatpush1.msra.mxu0 0.0
    %1301 = vmatprep.subr.mxu0 0.0
    %1302 = vmatpush1.msra.mxu0 0.0
    %1303 = vmatprep.subr.mxu0 0.0
    %1304 = vmatpush1.msra.mxu0 0.0
    %1305 = vmatprep.subr.mxu0 0.0
    %1306 = vmatpush1.msra.mxu0 0.0
    %1307 = vmatprep.subr.mxu0 0.0
    %1308 = vmatpush1.msra.mxu0 0.0
    %1309 = vmatprep.subr.mxu0 0.0
    %1310 = vmatpush1.msra.mxu0 0.0
    %1311 = vmatprep.subr.mxu0 0.0
    %1312 = vmatpush1.msra.mxu0 0.0
    %1313 = vmatprep.subr.mxu0 0.0
    %1314 = vmatpush1.msra.mxu0 0.0
    %1315 = vmatprep.subr.mxu0 0.0
    %1316 = vmatpush1.msra.mxu0 0.0
    %1317 = vmatprep.subr.mxu0 0.0
    %1318 = vmatpush1.msra.mxu0 0.0
    %1319 = vmatprep.subr.mxu0 0.0
    %1320 = vmatpush1.msra.mxu0 0.0
    %1321 = vmatprep.subr.mxu0 0.0
    %1322 = vmatpush1.msra.mxu0 0.0
    %1323 = vmatprep.subr.mxu0 0.0
    %1324 = vmatpush1.msra.mxu0 0.0
    %1325 = vmatprep.subr.mxu0 0.0
    %1326 = vmatpush1.msra.mxu0 0.0
    %1327 = vmatprep.subr.mxu0 0.0
    %1328 = vmatpush1.msra.mxu0 0.0
    %1329 = vmatprep.mubr.f32.mxu0 0.0
    %1330 = vmatmul.mubr.f32.gmra.mrb[0].mxu0 %v1186
    %v1331 = vpop.f32.mrb[0].mxu0
    %v1332 = vadd.f32 0.0, %v1331
    %v1333 = vpop.f32.mrb[0].mxu0
    %v1334 = vadd.f32 0.0, %v1333
    %1335 = vdwg.mxu0
    %v1336 = vadd.f32 %v1190, %v1261
    %v1337 = vadd.f32 %v1191, %v1263
    %v1338 = vadd.f32 %v1192, %v1332
    %v1339 = vadd.f32 %v1193, %v1334
    %v1340 = vxor.u32 %v1336, 2147483648
    %v1341 = vmul.f32 %v1340, 1.442695
    %v1342 = vpow.pop %v1341
    %v1343 = vadd.f32 %v1342, 1.0
    %v1344 = vrcp.pop %v1343
    %v1345 = vmul.f32 1.0, %v1344
    %v1346 = vxor.u32 %v1337, 2147483648
    %v1347 = vmul.f32 %v1346, 1.442695
    %v1348 = vpow.pop %v1347
    %v1349 = vadd.f32 %v1348, 1.0
    %v1350 = vrcp.pop %v1349
    %v1351 = vmul.f32 1.0, %v1350
    %v1352 = vtanh.pop %v1338
    %v1353 = vxor.u32 %v1339, 2147483648
    %v1354 = vmul.f32 %v1353, 1.442695
    %v1355 = vpow.pop %v1354
    %v1356 = vadd.f32 %v1355, 1.0
    %v1357 = vrcp.pop %v1356
    %v1358 = vmul.f32 1.0, %v1357
    %v1359 = vmul.f32 %v1351, %v1184
    %v1360 = vmul.f32 %v1345, %v1352
    %v1361 = vadd.f32 %v1359, %v1360
    %v1362 = vtanh.pop %v1361
    %v1363 = vmul.f32 %v1358, %v1362
    %s1364 = scalar_lea.vmem [#allocation2], 32
    %1365 = vst [vmem:[%s1364] sm:$0xff] %v1363
    %s1366 = scalar_lea.vmem [#allocation3], 160
    %v1367 = vld [vmem:[%s1366] sm:$0xff]
    %v1368 = vld [vmem:[%s1366 + $0x8] sm:$0xff]
    %v1369 = vld [vmem:[%s1366 + $0x10] sm:$0xff]
    %v1370 = vld [vmem:[%s1366 + $0x18] sm:$0xff]
    %1371 = vmatprep.subr.mxu0 %v132
    %1372 = vmatpush1.msra.mxu0 %v131
    %1373 = vmatprep.subr.mxu0 %v136
    %1374 = vmatpush1.msra.mxu0 %v135
    %1375 = vmatprep.subr.mxu0 %v140
    %1376 = vmatpush1.msra.mxu0 %v139
    %1377 = vmatprep.subr.mxu0 %v144
    %1378 = vmatpush1.msra.mxu0 %v143
    %1379 = vmatprep.subr.mxu0 %v148
    %1380 = vmatpush1.msra.mxu0 %v147
    %1381 = vmatprep.subr.mxu0 %v152
    %1382 = vmatpush1.msra.mxu0 %v151
    %1383 = vmatprep.subr.mxu0 %v156
    %1384 = vmatpush1.msra.mxu0 %v155
    %1385 = vmatprep.subr.mxu0 %v160
    %1386 = vmatpush1.msra.mxu0 %v159
    %1387 = vmatprep.subr.mxu0 %v164
    %1388 = vmatpush1.msra.mxu0 %v163
    %1389 = vmatprep.subr.mxu0 %v168
    %1390 = vmatpush1.msra.mxu0 %v167
    %1391 = vmatprep.subr.mxu0 %v172
    %1392 = vmatpush1.msra.mxu0 %v171
    %1393 = vmatprep.subr.mxu0 %v176
    %1394 = vmatpush1.msra.mxu0 %v175
    %1395 = vmatprep.subr.mxu0 %v180
    %1396 = vmatpush1.msra.mxu0 %v179
    %1397 = vmatprep.subr.mxu0 %v184
    %1398 = vmatpush1.msra.mxu0 %v183
    %1399 = vmatprep.subr.mxu0 %v188
    %1400 = vmatpush1.msra.mxu0 %v187
    %1401 = vmatprep.subr.mxu0 %v192
    %1402 = vmatpush1.msra.mxu0 %v191
    %1403 = vmatprep.subr.mxu0 0.0
    %1404 = vmatpush1.msra.mxu0 0.0
    %1405 = vmatprep.subr.mxu0 0.0
    %1406 = vmatpush1.msra.mxu0 0.0
    %1407 = vmatprep.subr.mxu0 0.0
    %1408 = vmatpush1.msra.mxu0 0.0
    %1409 = vmatprep.subr.mxu0 0.0
    %1410 = vmatpush1.msra.mxu0 0.0
    %1411 = vmatprep.subr.mxu0 0.0
    %1412 = vmatpush1.msra.mxu0 0.0
    %1413 = vmatprep.subr.mxu0 0.0
    %1414 = vmatpush1.msra.mxu0 0.0
    %1415 = vmatprep.subr.mxu0 0.0
    %1416 = vmatpush1.msra.mxu0 0.0
    %1417 = vmatprep.subr.mxu0 0.0
    %1418 = vmatpush1.msra.mxu0 0.0
    %1419 = vmatprep.subr.mxu0 0.0
    %1420 = vmatpush1.msra.mxu0 0.0
    %1421 = vmatprep.subr.mxu0 0.0
    %1422 = vmatpush1.msra.mxu0 0.0
    %1423 = vmatprep.subr.mxu0 0.0
    %1424 = vmatpush1.msra.mxu0 0.0
    %1425 = vmatprep.subr.mxu0 0.0
    %1426 = vmatpush1.msra.mxu0 0.0
    %1427 = vmatprep.subr.mxu0 0.0
    %1428 = vmatpush1.msra.mxu0 0.0
    %1429 = vmatprep.subr.mxu0 0.0
    %1430 = vmatpush1.msra.mxu0 0.0
    %1431 = vmatprep.subr.mxu0 0.0
    %1432 = vmatpush1.msra.mxu0 0.0
    %1433 = vmatprep.subr.mxu0 0.0
    %1434 = vmatpush1.msra.mxu0 0.0
    %1435 = vmatprep.mubr.f32.mxu0 0.0
    %1436 = vmatmul.mubr.f32.gmra.mrb[0].mxu0 %v1363
    %v1437 = vpop.f32.mrb[0].mxu0
    %v1438 = vadd.f32 0.0, %v1437
    %v1439 = vpop.f32.mrb[0].mxu0
    %v1440 = vadd.f32 0.0, %v1439
    %1441 = vdwg.mxu0
    %1442 = vmatprep.subr.mxu0 %v134
    %1443 = vmatpush1.msra.mxu0 %v133
    %1444 = vmatprep.subr.mxu0 %v138
    %1445 = vmatpush1.msra.mxu0 %v137
    %1446 = vmatprep.subr.mxu0 %v142
    %1447 = vmatpush1.msra.mxu0 %v141
    %1448 = vmatprep.subr.mxu0 %v146
    %1449 = vmatpush1.msra.mxu0 %v145
    %1450 = vmatprep.subr.mxu0 %v150
    %1451 = vmatpush1.msra.mxu0 %v149
    %1452 = vmatprep.subr.mxu0 %v154
    %1453 = vmatpush1.msra.mxu0 %v153
    %1454 = vmatprep.subr.mxu0 %v158
    %1455 = vmatpush1.msra.mxu0 %v157
    %1456 = vmatprep.subr.mxu0 %v162
    %1457 = vmatpush1.msra.mxu0 %v161
    %1458 = vmatprep.subr.mxu0 %v166
    %1459 = vmatpush1.msra.mxu0 %v165
    %1460 = vmatprep.subr.mxu0 %v170
    %1461 = vmatpush1.msra.mxu0 %v169
    %1462 = vmatprep.subr.mxu0 %v174
    %1463 = vmatpush1.msra.mxu0 %v173
    %1464 = vmatprep.subr.mxu0 %v178
    %1465 = vmatpush1.msra.mxu0 %v177
    %1466 = vmatprep.subr.mxu0 %v182
    %1467 = vmatpush1.msra.mxu0 %v181
    %1468 = vmatprep.subr.mxu0 %v186
    %1469 = vmatpush1.msra.mxu0 %v185
    %1470 = vmatprep.subr.mxu0 %v190
    %1471 = vmatpush1.msra.mxu0 %v189
    %1472 = vmatprep.subr.mxu0 %v194
    %1473 = vmatpush1.msra.mxu0 %v193
    %1474 = vmatprep.subr.mxu0 0.0
    %1475 = vmatpush1.msra.mxu0 0.0
    %1476 = vmatprep.subr.mxu0 0.0
    %1477 = vmatpush1.msra.mxu0 0.0
    %1478 = vmatprep.subr.mxu0 0.0
    %1479 = vmatpush1.msra.mxu0 0.0
    %1480 = vmatprep.subr.mxu0 0.0
    %1481 = vmatpush1.msra.mxu0 0.0
    %1482 = vmatprep.subr.mxu0 0.0
    %1483 = vmatpush1.msra.mxu0 0.0
    %1484 = vmatprep.subr.mxu0 0.0
    %1485 = vmatpush1.msra.mxu0 0.0
    %1486 = vmatprep.subr.mxu0 0.0
    %1487 = vmatpush1.msra.mxu0 0.0
    %1488 = vmatprep.subr.mxu0 0.0
    %1489 = vmatpush1.msra.mxu0 0.0
    %1490 = vmatprep.subr.mxu0 0.0
    %1491 = vmatpush1.msra.mxu0 0.0
    %1492 = vmatprep.subr.mxu0 0.0
    %1493 = vmatpush1.msra.mxu0 0.0
    %1494 = vmatprep.subr.mxu0 0.0
    %1495 = vmatpush1.msra.mxu0 0.0
    %1496 = vmatprep.subr.mxu0 0.0
    %1497 = vmatpush1.msra.mxu0 0.0
    %1498 = vmatprep.subr.mxu0 0.0
    %1499 = vmatpush1.msra.mxu0 0.0
    %1500 = vmatprep.subr.mxu0 0.0
    %1501 = vmatpush1.msra.mxu0 0.0
    %1502 = vmatprep.subr.mxu0 0.0
    %1503 = vmatpush1.msra.mxu0 0.0
    %1504 = vmatprep.subr.mxu0 0.0
    %1505 = vmatpush1.msra.mxu0 0.0
    %1506 = vmatprep.mubr.f32.mxu0 0.0
    %1507 = vmatmul.mubr.f32.gmra.mrb[0].mxu0 %v1363
    %v1508 = vpop.f32.mrb[0].mxu0
    %v1509 = vadd.f32 0.0, %v1508
    %v1510 = vpop.f32.mrb[0].mxu0
    %v1511 = vadd.f32 0.0, %v1510
    %1512 = vdwg.mxu0
    %v1513 = vadd.f32 %v1367, %v1438
    %v1514 = vadd.f32 %v1368, %v1440
    %v1515 = vadd.f32 %v1369, %v1509
    %v1516 = vadd.f32 %v1370, %v1511
    %v1517 = vxor.u32 %v1513, 2147483648
    %v1518 = vmul.f32 %v1517, 1.442695
    %v1519 = vpow.pop %v1518
    %v1520 = vadd.f32 %v1519, 1.0
    %v1521 = vrcp.pop %v1520
    %v1522 = vmul.f32 1.0, %v1521
    %v1523 = vxor.u32 %v1514, 2147483648
    %v1524 = vmul.f32 %v1523, 1.442695
    %v1525 = vpow.pop %v1524
    %v1526 = vadd.f32 %v1525, 1.0
    %v1527 = vrcp.pop %v1526
    %v1528 = vmul.f32 1.0, %v1527
    %v1529 = vtanh.pop %v1515
    %v1530 = vxor.u32 %v1516, 2147483648
    %v1531 = vmul.f32 %v1530, 1.442695
    %v1532 = vpow.pop %v1531
    %v1533 = vadd.f32 %v1532, 1.0
    %v1534 = vrcp.pop %v1533
    %v1535 = vmul.f32 1.0, %v1534
    %v1536 = vmul.f32 %v1528, %v1361
    %v1537 = vmul.f32 %v1522, %v1529
    %v1538 = vadd.f32 %v1536, %v1537
    %v1539 = vtanh.pop %v1538
    %v1540 = vmul.f32 %v1535, %v1539
    %s1541 = scalar_lea.vmem [#allocation2], 40
    %1542 = vst [vmem:[%s1541] sm:$0xff] %v1540
    %s1543 = scalar_lea.vmem [#allocation3], 192
    %v1544 = vld [vmem:[%s1543] sm:$0xff]
    %v1545 = vld [vmem:[%s1543 + $0x8] sm:$0xff]
    %v1546 = vld [vmem:[%s1543 + $0x10] sm:$0xff]
    %v1547 = vld [vmem:[%s1543 + $0x18] sm:$0xff]
    %1548 = vmatprep.subr.mxu0 %v132
    %1549 = vmatpush1.msra.mxu0 %v131
    %1550 = vmatprep.subr.mxu0 %v136
    %1551 = vmatpush1.msra.mxu0 %v135
    %1552 = vmatprep.subr.mxu0 %v140
    %1553 = vmatpush1.msra.mxu0 %v139
    %1554 = vmatprep.subr.mxu0 %v144
    %1555 = vmatpush1.msra.mxu0 %v143
    %1556 = vmatprep.subr.mxu0 %v148
    %1557 = vmatpush1.msra.mxu0 %v147
    %1558 = vmatprep.subr.mxu0 %v152
    %1559 = vmatpush1.msra.mxu0 %v151
    %1560 = vmatprep.subr.mxu0 %v156
    %1561 = vmatpush1.msra.mxu0 %v155
    %1562 = vmatprep.subr.mxu0 %v160
    %1563 = vmatpush1.msra.mxu0 %v159
    %1564 = vmatprep.subr.mxu0 %v164
    %1565 = vmatpush1.msra.mxu0 %v163
    %1566 = vmatprep.subr.mxu0 %v168
    %1567 = vmatpush1.msra.mxu0 %v167
    %1568 = vmatprep.subr.mxu0 %v172
    %1569 = vmatpush1.msra.mxu0 %v171
    %1570 = vmatprep.subr.mxu0 %v176
    %1571 = vmatpush1.msra.mxu0 %v175
    %1572 = vmatprep.subr.mxu0 %v180
    %1573 = vmatpush1.msra.mxu0 %v179
    %1574 = vmatprep.subr.mxu0 %v184
    %1575 = vmatpush1.msra.mxu0 %v183
    %1576 = vmatprep.subr.mxu0 %v188
    %1577 = vmatpush1.msra.mxu0 %v187
    %1578 = vmatprep.subr.mxu0 %v192
    %1579 = vmatpush1.msra.mxu0 %v191
    %1580 = vmatprep.subr.mxu0 0.0
    %1581 = vmatpush1.msra.mxu0 0.0
    %1582 = vmatprep.subr.mxu0 0.0
    %1583 = vmatpush1.msra.mxu0 0.0
    %1584 = vmatprep.subr.mxu0 0.0
    %1585 = vmatpush1.msra.mxu0 0.0
    %1586 = vmatprep.subr.mxu0 0.0
    %1587 = vmatpush1.msra.mxu0 0.0
    %1588 = vmatprep.subr.mxu0 0.0
    %1589 = vmatpush1.msra.mxu0 0.0
    %1590 = vmatprep.subr.mxu0 0.0
    %1591 = vmatpush1.msra.mxu0 0.0
    %1592 = vmatprep.subr.mxu0 0.0
    %1593 = vmatpush1.msra.mxu0 0.0
    %1594 = vmatprep.subr.mxu0 0.0
    %1595 = vmatpush1.msra.mxu0 0.0
    %1596 = vmatprep.subr.mxu0 0.0
    %1597 = vmatpush1.msra.mxu0 0.0
    %1598 = vmatprep.subr.mxu0 0.0
    %1599 = vmatpush1.msra.mxu0 0.0
    %1600 = vmatprep.subr.mxu0 0.0
    %1601 = vmatpush1.msra.mxu0 0.0
    %1602 = vmatprep.subr.mxu0 0.0
    %1603 = vmatpush1.msra.mxu0 0.0
    %1604 = vmatprep.subr.mxu0 0.0
    %1605 = vmatpush1.msra.mxu0 0.0
    %1606 = vmatprep.subr.mxu0 0.0
    %1607 = vmatpush1.msra.mxu0 0.0
    %1608 = vmatprep.subr.mxu0 0.0
    %1609 = vmatpush1.msra.mxu0 0.0
    %1610 = vmatprep.subr.mxu0 0.0
    %1611 = vmatpush1.msra.mxu0 0.0
    %1612 = vmatprep.mubr.f32.mxu0 0.0
    %1613 = vmatmul.mubr.f32.gmra.mrb[0].mxu0 %v1540
    %v1614 = vpop.f32.mrb[0].mxu0
    %v1615 = vadd.f32 0.0, %v1614
    %v1616 = vpop.f32.mrb[0].mxu0
    %v1617 = vadd.f32 0.0, %v1616
    %1618 = vdwg.mxu0
    %1619 = vmatprep.subr.mxu0 %v134
    %1620 = vmatpush1.msra.mxu0 %v133
    %1621 = vmatprep.subr.mxu0 %v138
    %1622 = vmatpush1.msra.mxu0 %v137
    %1623 = vmatprep.subr.mxu0 %v142
    %1624 = vmatpush1.msra.mxu0 %v141
    %1625 = vmatprep.subr.mxu0 %v146
    %1626 = vmatpush1.msra.mxu0 %v145
    %1627 = vmatprep.subr.mxu0 %v150
    %1628 = vmatpush1.msra.mxu0 %v149
    %1629 = vmatprep.subr.mxu0 %v154
    %1630 = vmatpush1.msra.mxu0 %v153
    %1631 = vmatprep.subr.mxu0 %v158
    %1632 = vmatpush1.msra.mxu0 %v157
    %1633 = vmatprep.subr.mxu0 %v162
    %1634 = vmatpush1.msra.mxu0 %v161
    %1635 = vmatprep.subr.mxu0 %v166
    %1636 = vmatpush1.msra.mxu0 %v165
    %1637 = vmatprep.subr.mxu0 %v170
    %1638 = vmatpush1.msra.mxu0 %v169
    %1639 = vmatprep.subr.mxu0 %v174
    %1640 = vmatpush1.msra.mxu0 %v173
    %1641 = vmatprep.subr.mxu0 %v178
    %1642 = vmatpush1.msra.mxu0 %v177
    %1643 = vmatprep.subr.mxu0 %v182
    %1644 = vmatpush1.msra.mxu0 %v181
    %1645 = vmatprep.subr.mxu0 %v186
    %1646 = vmatpush1.msra.mxu0 %v185
    %1647 = vmatprep.subr.mxu0 %v190
    %1648 = vmatpush1.msra.mxu0 %v189
    %1649 = vmatprep.subr.mxu0 %v194
    %1650 = vmatpush1.msra.mxu0 %v193
    %1651 = vmatprep.subr.mxu0 0.0
    %1652 = vmatpush1.msra.mxu0 0.0
    %1653 = vmatprep.subr.mxu0 0.0
    %1654 = vmatpush1.msra.mxu0 0.0
    %1655 = vmatprep.subr.mxu0 0.0
    %1656 = vmatpush1.msra.mxu0 0.0
    %1657 = vmatprep.subr.mxu0 0.0
    %1658 = vmatpush1.msra.mxu0 0.0
    %1659 = vmatprep.subr.mxu0 0.0
    %1660 = vmatpush1.msra.mxu0 0.0
    %1661 = vmatprep.subr.mxu0 0.0
    %1662 = vmatpush1.msra.mxu0 0.0
    %1663 = vmatprep.subr.mxu0 0.0
    %1664 = vmatpush1.msra.mxu0 0.0
    %1665 = vmatprep.subr.mxu0 0.0
    %1666 = vmatpush1.msra.mxu0 0.0
    %1667 = vmatprep.subr.mxu0 0.0
    %1668 = vmatpush1.msra.mxu0 0.0
    %1669 = vmatprep.subr.mxu0 0.0
    %1670 = vmatpush1.msra.mxu0 0.0
    %1671 = vmatprep.subr.mxu0 0.0
    %1672 = vmatpush1.msra.mxu0 0.0
    %1673 = vmatprep.subr.mxu0 0.0
    %1674 = vmatpush1.msra.mxu0 0.0
    %1675 = vmatprep.subr.mxu0 0.0
    %1676 = vmatpush1.msra.mxu0 0.0
    %1677 = vmatprep.subr.mxu0 0.0
    %1678 = vmatpush1.msra.mxu0 0.0
    %1679 = vmatprep.subr.mxu0 0.0
    %1680 = vmatpush1.msra.mxu0 0.0
    %1681 = vmatprep.subr.mxu0 0.0
    %1682 = vmatpush1.msra.mxu0 0.0
    %1683 = vmatprep.mubr.f32.mxu0 0.0
    %1684 = vmatmul.mubr.f32.gmra.mrb[0].mxu0 %v1540
    %v1685 = vpop.f32.mrb[0].mxu0
    %v1686 = vadd.f32 0.0, %v1685
    %v1687 = vpop.f32.mrb[0].mxu0
    %v1688 = vadd.f32 0.0, %v1687
    %1689 = vdwg.mxu0
    %v1690 = vadd.f32 %v1544, %v1615
    %v1691 = vadd.f32 %v1545, %v1617
    %v1692 = vadd.f32 %v1546, %v1686
    %v1693 = vadd.f32 %v1547, %v1688
    %v1694 = vxor.u32 %v1690, 2147483648
    %v1695 = vmul.f32 %v1694, 1.442695
    %v1696 = vpow.pop %v1695
    %v1697 = vadd.f32 %v1696, 1.0
    %v1698 = vrcp.pop %v1697
    %v1699 = vmul.f32 1.0, %v1698
    %v1700 = vxor.u32 %v1691, 2147483648
    %v1701 = vmul.f32 %v1700, 1.442695
    %v1702 = vpow.pop %v1701
    %v1703 = vadd.f32 %v1702, 1.0
    %v1704 = vrcp.pop %v1703
    %v1705 = vmul.f32 1.0, %v1704
    %v1706 = vtanh.pop %v1692
    %v1707 = vxor.u32 %v1693, 2147483648
    %v1708 = vmul.f32 %v1707, 1.442695
    %v1709 = vpow.pop %v1708
    %v1710 = vadd.f32 %v1709, 1.0
    %v1711 = vrcp.pop %v1710
    %v1712 = vmul.f32 1.0, %v1711
    %v1713 = vmul.f32 %v1705, %v1538
    %v1714 = vmul.f32 %v1699, %v1706
    %v1715 = vadd.f32 %v1713, %v1714
    %v1716 = vtanh.pop %v1715
    %v1717 = vmul.f32 %v1712, %v1716
    %s1718 = scalar_lea.vmem [#allocation2], 48
    %1719 = vst [vmem:[%s1718] sm:$0xff] %v1717
    %s1720 = scalar_lea.vmem [#allocation3], 224
    %v1721 = vld [vmem:[%s1720] sm:$0xff]
    %v1722 = vld [vmem:[%s1720 + $0x8] sm:$0xff]
    %v1723 = vld [vmem:[%s1720 + $0x10] sm:$0xff]
    %v1724 = vld [vmem:[%s1720 + $0x18] sm:$0xff]
    %1725 = vmatprep.subr.mxu0 %v132
    %1726 = vmatpush1.msra.mxu0 %v131
    %1727 = vmatprep.subr.mxu0 %v136
    %1728 = vmatpush1.msra.mxu0 %v135
    %1729 = vmatprep.subr.mxu0 %v140
    %1730 = vmatpush1.msra.mxu0 %v139
    %1731 = vmatprep.subr.mxu0 %v144
    %1732 = vmatpush1.msra.mxu0 %v143
    %1733 = vmatprep.subr.mxu0 %v148
    %1734 = vmatpush1.msra.mxu0 %v147
    %1735 = vmatprep.subr.mxu0 %v152
    %1736 = vmatpush1.msra.mxu0 %v151
    %1737 = vmatprep.subr.mxu0 %v156
    %1738 = vmatpush1.msra.mxu0 %v155
    %1739 = vmatprep.subr.mxu0 %v160
    %1740 = vmatpush1.msra.mxu0 %v159
    %1741 = vmatprep.subr.mxu0 %v164
    %1742 = vmatpush1.msra.mxu0 %v163
    %1743 = vmatprep.subr.mxu0 %v168
    %1744 = vmatpush1.msra.mxu0 %v167
    %1745 = vmatprep.subr.mxu0 %v172
    %1746 = vmatpush1.msra.mxu0 %v171
    %1747 = vmatprep.subr.mxu0 %v176
    %1748 = vmatpush1.msra.mxu0 %v175
    %1749 = vmatprep.subr.mxu0 %v180
    %1750 = vmatpush1.msra.mxu0 %v179
    %1751 = vmatprep.subr.mxu0 %v184
    %1752 = vmatpush1.msra.mxu0 %v183
    %1753 = vmatprep.subr.mxu0 %v188
    %1754 = vmatpush1.msra.mxu0 %v187
    %1755 = vmatprep.subr.mxu0 %v192
    %1756 = vmatpush1.msra.mxu0 %v191
    %1757 = vmatprep.subr.mxu0 0.0
    %1758 = vmatpush1.msra.mxu0 0.0
    %1759 = vmatprep.subr.mxu0 0.0
    %1760 = vmatpush1.msra.mxu0 0.0
    %1761 = vmatprep.subr.mxu0 0.0
    %1762 = vmatpush1.msra.mxu0 0.0
    %1763 = vmatprep.subr.mxu0 0.0
    %1764 = vmatpush1.msra.mxu0 0.0
    %1765 = vmatprep.subr.mxu0 0.0
    %1766 = vmatpush1.msra.mxu0 0.0
    %1767 = vmatprep.subr.mxu0 0.0
    %1768 = vmatpush1.msra.mxu0 0.0
    %1769 = vmatprep.subr.mxu0 0.0
    %1770 = vmatpush1.msra.mxu0 0.0
    %1771 = vmatprep.subr.mxu0 0.0
    %1772 = vmatpush1.msra.mxu0 0.0
    %1773 = vmatprep.subr.mxu0 0.0
    %1774 = vmatpush1.msra.mxu0 0.0
    %1775 = vmatprep.subr.mxu0 0.0
    %1776 = vmatpush1.msra.mxu0 0.0
    %1777 = vmatprep.subr.mxu0 0.0
    %1778 = vmatpush1.msra.mxu0 0.0
    %1779 = vmatprep.subr.mxu0 0.0
    %1780 = vmatpush1.msra.mxu0 0.0
    %1781 = vmatprep.subr.mxu0 0.0
    %1782 = vmatpush1.msra.mxu0 0.0
    %1783 = vmatprep.subr.mxu0 0.0
    %1784 = vmatpush1.msra.mxu0 0.0
    %1785 = vmatprep.subr.mxu0 0.0
    %1786 = vmatpush1.msra.mxu0 0.0
    %1787 = vmatprep.subr.mxu0 0.0
    %1788 = vmatpush1.msra.mxu0 0.0
    %1789 = vmatprep.mubr.f32.mxu0 0.0
    %1790 = vmatmul.mubr.f32.gmra.mrb[0].mxu0 %v1717
    %v1791 = vpop.f32.mrb[0].mxu0
    %v1792 = vadd.f32 0.0, %v1791
    %v1793 = vpop.f32.mrb[0].mxu0
    %v1794 = vadd.f32 0.0, %v1793
    %1795 = vdwg.mxu0
    %1796 = vmatprep.subr.mxu0 %v134
    %1797 = vmatpush1.msra.mxu0 %v133
    %1798 = vmatprep.subr.mxu0 %v138
    %1799 = vmatpush1.msra.mxu0 %v137
    %1800 = vmatprep.subr.mxu0 %v142
    %1801 = vmatpush1.msra.mxu0 %v141
    %1802 = vmatprep.subr.mxu0 %v146
    %1803 = vmatpush1.msra.mxu0 %v145
    %1804 = vmatprep.subr.mxu0 %v150
    %1805 = vmatpush1.msra.mxu0 %v149
    %1806 = vmatprep.subr.mxu0 %v154
    %1807 = vmatpush1.msra.mxu0 %v153
    %1808 = vmatprep.subr.mxu0 %v158
    %1809 = vmatpush1.msra.mxu0 %v157
    %1810 = vmatprep.subr.mxu0 %v162
    %1811 = vmatpush1.msra.mxu0 %v161
    %1812 = vmatprep.subr.mxu0 %v166
    %1813 = vmatpush1.msra.mxu0 %v165
    %1814 = vmatprep.subr.mxu0 %v170
    %1815 = vmatpush1.msra.mxu0 %v169
    %1816 = vmatprep.subr.mxu0 %v174
    %1817 = vmatpush1.msra.mxu0 %v173
    %1818 = vmatprep.subr.mxu0 %v178
    %1819 = vmatpush1.msra.mxu0 %v177
    %1820 = vmatprep.subr.mxu0 %v182
    %1821 = vmatpush1.msra.mxu0 %v181
    %1822 = vmatprep.subr.mxu0 %v186
    %1823 = vmatpush1.msra.mxu0 %v185
    %1824 = vmatprep.subr.mxu0 %v190
    %1825 = vmatpush1.msra.mxu0 %v189
    %1826 = vmatprep.subr.mxu0 %v194
    %1827 = vmatpush1.msra.mxu0 %v193
    %1828 = vmatprep.subr.mxu0 0.0
    %1829 = vmatpush1.msra.mxu0 0.0
    %1830 = vmatprep.subr.mxu0 0.0
    %1831 = vmatpush1.msra.mxu0 0.0
    %1832 = vmatprep.subr.mxu0 0.0
    %1833 = vmatpush1.msra.mxu0 0.0
    %1834 = vmatprep.subr.mxu0 0.0
    %1835 = vmatpush1.msra.mxu0 0.0
    %1836 = vmatprep.subr.mxu0 0.0
    %1837 = vmatpush1.msra.mxu0 0.0
    %1838 = vmatprep.subr.mxu0 0.0
    %1839 = vmatpush1.msra.mxu0 0.0
    %1840 = vmatprep.subr.mxu0 0.0
    %1841 = vmatpush1.msra.mxu0 0.0
    %1842 = vmatprep.subr.mxu0 0.0
    %1843 = vmatpush1.msra.mxu0 0.0
    %1844 = vmatprep.subr.mxu0 0.0
    %1845 = vmatpush1.msra.mxu0 0.0
    %1846 = vmatprep.subr.mxu0 0.0
    %1847 = vmatpush1.msra.mxu0 0.0
    %1848 = vmatprep.subr.mxu0 0.0
    %1849 = vmatpush1.msra.mxu0 0.0
    %1850 = vmatprep.subr.mxu0 0.0
    %1851 = vmatpush1.msra.mxu0 0.0
    %1852 = vmatprep.subr.mxu0 0.0
    %1853 = vmatpush1.msra.mxu0 0.0
    %1854 = vmatprep.subr.mxu0 0.0
    %1855 = vmatpush1.msra.mxu0 0.0
    %1856 = vmatprep.subr.mxu0 0.0
    %1857 = vmatpush1.msra.mxu0 0.0
    %1858 = vmatprep.subr.mxu0 0.0
    %1859 = vmatpush1.msra.mxu0 0.0
    %1860 = vmatprep.mubr.f32.mxu0 0.0
    %1861 = vmatmul.mubr.f32.gmra.mrb[0].mxu0 %v1717
    %v1862 = vpop.f32.mrb[0].mxu0
    %v1863 = vadd.f32 0.0, %v1862
    %v1864 = vpop.f32.mrb[0].mxu0
    %v1865 = vadd.f32 0.0, %v1864
    %1866 = vdwg.mxu0
    %v1867 = vadd.f32 %v1721, %v1792
    %v1868 = vadd.f32 %v1722, %v1794
    %v1869 = vadd.f32 %v1723, %v1863
    %v1870 = vadd.f32 %v1724, %v1865
    %v1871 = vxor.u32 %v1867, 2147483648
    %v1872 = vmul.f32 %v1871, 1.442695
    %v1873 = vpow.pop %v1872
    %v1874 = vadd.f32 %v1873, 1.0
    %v1875 = vrcp.pop %v1874
    %v1876 = vmul.f32 1.0, %v1875
    %v1877 = vxor.u32 %v1868, 2147483648
    %v1878 = vmul.f32 %v1877, 1.442695
    %v1879 = vpow.pop %v1878
    %v1880 = vadd.f32 %v1879, 1.0
    %v1881 = vrcp.pop %v1880
    %v1882 = vmul.f32 1.0, %v1881
    %v1883 = vtanh.pop %v1869
    %v1884 = vxor.u32 %v1870, 2147483648
    %v1885 = vmul.f32 %v1884, 1.442695
    %v1886 = vpow.pop %v1885
    %v1887 = vadd.f32 %v1886, 1.0
    %v1888 = vrcp.pop %v1887
    %v1889 = vmul.f32 1.0, %v1888
    %v1890 = vmul.f32 %v1882, %v1715
    %v1891 = vmul.f32 %v1876, %v1883
    %v1892 = vadd.f32 %v1890, %v1891
    %v1893 = vtanh.pop %v1892
    %v1894 = vmul.f32 %v1889, %v1893
    %s1895 = scalar_lea.vmem [#allocation2], 56
    %1896 = vst [vmem:[%s1895] sm:$0xff] %v1894
    %s1897 = scalar_lea.vmem [#allocation4], 512
    %v1898 = vld [vmem:[%s1897] sm:$0xff]
    %v1899 = vld [vmem:[%s1897 + $0x8] sm:$0xff]
    %v1900 = vld [vmem:[%s1897 + $0x10] sm:$0xff]
    %v1901 = vld [vmem:[%s1897 + $0x18] sm:$0xff]
    %v1902 = vld [vmem:[%s1897 + $0x20] sm:$0xff]
    %v1903 = vld [vmem:[%s1897 + $0x28] sm:$0xff]
    %v1904 = vld [vmem:[%s1897 + $0x30] sm:$0xff]
    %v1905 = vld [vmem:[%s1897 + $0x38] sm:$0xff]
    %v1906 = vld [vmem:[%s1897 + $0x40] sm:$0xff]
    %v1907 = vld [vmem:[%s1897 + $0x48] sm:$0xff]
    %v1908 = vld [vmem:[%s1897 + $0x50] sm:$0xff]
    %v1909 = vld [vmem:[%s1897 + $0x58] sm:$0xff]
    %v1910 = vld [vmem:[%s1897 + $0x60] sm:$0xff]
    %v1911 = vld [vmem:[%s1897 + $0x68] sm:$0xff]
    %v1912 = vld [vmem:[%s1897 + $0x70] sm:$0xff]
    %v1913 = vld [vmem:[%s1897 + $0x78] sm:$0xff]
    %v1914 = vld [vmem:[%s1897 + $0x80] sm:$0xff]
    %v1915 = vld [vmem:[%s1897 + $0x88] sm:$0xff]
    %v1916 = vld [vmem:[%s1897 + $0x90] sm:$0xff]
    %v1917 = vld [vmem:[%s1897 + $0x98] sm:$0xff]
    %v1918 = vld [vmem:[%s1897 + $0xa0] sm:$0xff]
    %v1919 = vld [vmem:[%s1897 + $0xa8] sm:$0xff]
    %v1920 = vld [vmem:[%s1897 + $0xb0] sm:$0xff]
    %v1921 = vld [vmem:[%s1897 + $0xb8] sm:$0xff]
    %v1922 = vld [vmem:[%s1897 + $0xc0] sm:$0xff]
    %v1923 = vld [vmem:[%s1897 + $0xc8] sm:$0xff]
    %v1924 = vld [vmem:[%s1897 + $0xd0] sm:$0xff]
    %v1925 = vld [vmem:[%s1897 + $0xd8] sm:$0xff]
    %v1926 = vld [vmem:[%s1897 + $0xe0] sm:$0xff]
    %v1927 = vld [vmem:[%s1897 + $0xe8] sm:$0xff]
    %v1928 = vld [vmem:[%s1897 + $0xf0] sm:$0xff]
    %v1929 = vld [vmem:[%s1897 + $0xf8] sm:$0xff]
    %v1930 = vld [vmem:[%s1897 + $0x100] sm:$0xff]
    %v1931 = vld [vmem:[%s1897 + $0x108] sm:$0xff]
    %v1932 = vld [vmem:[%s1897 + $0x110] sm:$0xff]
    %v1933 = vld [vmem:[%s1897 + $0x118] sm:$0xff]
    %v1934 = vld [vmem:[%s1897 + $0x120] sm:$0xff]
    %v1935 = vld [vmem:[%s1897 + $0x128] sm:$0xff]
    %v1936 = vld [vmem:[%s1897 + $0x130] sm:$0xff]
    %v1937 = vld [vmem:[%s1897 + $0x138] sm:$0xff]
    %v1938 = vld [vmem:[%s1897 + $0x140] sm:$0xff]
    %v1939 = vld [vmem:[%s1897 + $0x148] sm:$0xff]
    %v1940 = vld [vmem:[%s1897 + $0x150] sm:$0xff]
    %v1941 = vld [vmem:[%s1897 + $0x158] sm:$0xff]
    %v1942 = vld [vmem:[%s1897 + $0x160] sm:$0xff]
    %v1943 = vld [vmem:[%s1897 + $0x168] sm:$0xff]
    %v1944 = vld [vmem:[%s1897 + $0x170] sm:$0xff]
    %v1945 = vld [vmem:[%s1897 + $0x178] sm:$0xff]
    %v1946 = vld [vmem:[%s1897 + $0x180] sm:$0xff]
    %v1947 = vld [vmem:[%s1897 + $0x188] sm:$0xff]
    %v1948 = vld [vmem:[%s1897 + $0x190] sm:$0xff]
    %v1949 = vld [vmem:[%s1897 + $0x198] sm:$0xff]
    %v1950 = vld [vmem:[%s1897 + $0x1a0] sm:$0xff]
    %v1951 = vld [vmem:[%s1897 + $0x1a8] sm:$0xff]
    %v1952 = vld [vmem:[%s1897 + $0x1b0] sm:$0xff]
    %v1953 = vld [vmem:[%s1897 + $0x1b8] sm:$0xff]
    %v1954 = vld [vmem:[%s1897 + $0x1c0] sm:$0xff]
    %v1955 = vld [vmem:[%s1897 + $0x1c8] sm:$0xff]
    %v1956 = vld [vmem:[%s1897 + $0x1d0] sm:$0xff]
    %v1957 = vld [vmem:[%s1897 + $0x1d8] sm:$0xff]
    %v1958 = vld [vmem:[%s1897 + $0x1e0] sm:$0xff]
    %v1959 = vld [vmem:[%s1897 + $0x1e8] sm:$0xff]
    %v1960 = vld [vmem:[%s1897 + $0x1f0] sm:$0xff]
    %v1961 = vld [vmem:[%s1897 + $0x1f8] sm:$0xff]
    %s1962 = scalar_lea.vmem [#allocation6], 512
    %v1963 = vld [vmem:[%s1962] sm:$0xff]
    %v1964 = vld [vmem:[%s1962 + $0x8] sm:$0xff]
    %v1965 = vld [vmem:[%s1962 + $0x10] sm:$0xff]
    %v1966 = vld [vmem:[%s1962 + $0x18] sm:$0xff]
    %v1967 = vld [vmem:[%s1962 + $0x20] sm:$0xff]
    %v1968 = vld [vmem:[%s1962 + $0x28] sm:$0xff]
    %v1969 = vld [vmem:[%s1962 + $0x30] sm:$0xff]
    %v1970 = vld [vmem:[%s1962 + $0x38] sm:$0xff]
    %v1971 = vld [vmem:[%s1962 + $0x40] sm:$0xff]
    %v1972 = vld [vmem:[%s1962 + $0x48] sm:$0xff]
    %v1973 = vld [vmem:[%s1962 + $0x50] sm:$0xff]
    %v1974 = vld [vmem:[%s1962 + $0x58] sm:$0xff]
    %v1975 = vld [vmem:[%s1962 + $0x60] sm:$0xff]
    %v1976 = vld [vmem:[%s1962 + $0x68] sm:$0xff]
    %v1977 = vld [vmem:[%s1962 + $0x70] sm:$0xff]
    %v1978 = vld [vmem:[%s1962 + $0x78] sm:$0xff]
    %v1979 = vld [vmem:[%s1962 + $0x80] sm:$0xff]
    %v1980 = vld [vmem:[%s1962 + $0x88] sm:$0xff]
    %v1981 = vld [vmem:[%s1962 + $0x90] sm:$0xff]
    %v1982 = vld [vmem:[%s1962 + $0x98] sm:$0xff]
    %v1983 = vld [vmem:[%s1962 + $0xa0] sm:$0xff]
    %v1984 = vld [vmem:[%s1962 + $0xa8] sm:$0xff]
    %v1985 = vld [vmem:[%s1962 + $0xb0] sm:$0xff]
    %v1986 = vld [vmem:[%s1962 + $0xb8] sm:$0xff]
    %v1987 = vld [vmem:[%s1962 + $0xc0] sm:$0xff]
    %v1988 = vld [vmem:[%s1962 + $0xc8] sm:$0xff]
    %v1989 = vld [vmem:[%s1962 + $0xd0] sm:$0xff]
    %v1990 = vld [vmem:[%s1962 + $0xd8] sm:$0xff]
    %v1991 = vld [vmem:[%s1962 + $0xe0] sm:$0xff]
    %v1992 = vld [vmem:[%s1962 + $0xe8] sm:$0xff]
    %v1993 = vld [vmem:[%s1962 + $0xf0] sm:$0xff]
    %v1994 = vld [vmem:[%s1962 + $0xf8] sm:$0xff]
    %v1995 = vld [vmem:[%s1962 + $0x100] sm:$0xff]
    %v1996 = vld [vmem:[%s1962 + $0x108] sm:$0xff]
    %v1997 = vld [vmem:[%s1962 + $0x110] sm:$0xff]
    %v1998 = vld [vmem:[%s1962 + $0x118] sm:$0xff]
    %v1999 = vld [vmem:[%s1962 + $0x120] sm:$0xff]
    %v2000 = vld [vmem:[%s1962 + $0x128] sm:$0xff]
    %v2001 = vld [vmem:[%s1962 + $0x130] sm:$0xff]
    %v2002 = vld [vmem:[%s1962 + $0x138] sm:$0xff]
    %v2003 = vld [vmem:[%s1962 + $0x140] sm:$0xff]
    %v2004 = vld [vmem:[%s1962 + $0x148] sm:$0xff]
    %v2005 = vld [vmem:[%s1962 + $0x150] sm:$0xff]
    %v2006 = vld [vmem:[%s1962 + $0x158] sm:$0xff]
    %v2007 = vld [vmem:[%s1962 + $0x160] sm:$0xff]
    %v2008 = vld [vmem:[%s1962 + $0x168] sm:$0xff]
    %v2009 = vld [vmem:[%s1962 + $0x170] sm:$0xff]
    %v2010 = vld [vmem:[%s1962 + $0x178] sm:$0xff]
    %v2011 = vld [vmem:[%s1962 + $0x180] sm:$0xff]
    %v2012 = vld [vmem:[%s1962 + $0x188] sm:$0xff]
    %v2013 = vld [vmem:[%s1962 + $0x190] sm:$0xff]
    %v2014 = vld [vmem:[%s1962 + $0x198] sm:$0xff]
    %v2015 = vld [vmem:[%s1962 + $0x1a0] sm:$0xff]
    %v2016 = vld [vmem:[%s1962 + $0x1a8] sm:$0xff]
    %v2017 = vld [vmem:[%s1962 + $0x1b0] sm:$0xff]
    %v2018 = vld [vmem:[%s1962 + $0x1b8] sm:$0xff]
    %v2019 = vld [vmem:[%s1962 + $0x1c0] sm:$0xff]
    %v2020 = vld [vmem:[%s1962 + $0x1c8] sm:$0xff]
    %v2021 = vld [vmem:[%s1962 + $0x1d0] sm:$0xff]
    %v2022 = vld [vmem:[%s1962 + $0x1d8] sm:$0xff]
    %v2023 = vld [vmem:[%s1962 + $0x1e0] sm:$0xff]
    %v2024 = vld [vmem:[%s1962 + $0x1e8] sm:$0xff]
    %v2025 = vld [vmem:[%s1962 + $0x1f0] sm:$0xff]
    %v2026 = vld [vmem:[%s1962 + $0x1f8] sm:$0xff]
    %s2027 = scalar_lea.vmem %s3, 4
    %v2028 = vld [vmem:[%s2027] sm:$0xf]
    %v2029 = vld [vmem:[#allocation2] sm:$0xff]
    %v2030 = vld [vmem:[#allocation2 + $0x8] sm:$0xff]
    %v2031 = vld [vmem:[#allocation2 + $0x10] sm:$0xff]
    %v2032 = vld [vmem:[#allocation2 + $0x18] sm:$0xff]
    %v2033 = vld [vmem:[#allocation2 + $0x20] sm:$0xff]
    %v2034 = vld [vmem:[#allocation2 + $0x28] sm:$0xff]
    %v2035 = vld [vmem:[#allocation2 + $0x30] sm:$0xff]
    %v2036 = vld [vmem:[#allocation2 + $0x38] sm:$0xff]
    %v2038 = vlaneseq
    %v2039 = vshrl.u32 %v2038, 7
    %v2040 = vsub.s32 0, %v2039
    %v2041 = vrot.slane %v2028, %v2040
    %v2042 = vlaneseq
    %v2043 = vshrl.u32 %v2042, 7
    %v2044 = vsub.s32 1, %v2043
    %v2045 = vrot.slane %v2028, %v2044
    %v2046 = vlaneseq
    %v2047 = vshrl.u32 %v2046, 7
    %v2048 = vsub.s32 2, %v2047
    %v2049 = vrot.slane %v2028, %v2048
    %v2050 = vlaneseq
    %v2051 = vshrl.u32 %v2050, 7
    %v2052 = vsub.s32 3, %v2051
    %v2053 = vrot.slane %v2028, %v2052
    %2058 = vmatprep.subr.mxu0 %v1899
    %2059 = vmatpush1.msra.mxu0 %v1898
    %2060 = vmatprep.subr.mxu0 %v1903
    %2061 = vmatpush1.msra.mxu0 %v1902
    %2062 = vmatprep.subr.mxu0 %v1907
    %2063 = vmatpush1.msra.mxu0 %v1906
    %2064 = vmatprep.subr.mxu0 %v1911
    %2065 = vmatpush1.msra.mxu0 %v1910
    %2066 = vmatprep.subr.mxu0 %v1915
    %2067 = vmatpush1.msra.mxu0 %v1914
    %2068 = vmatprep.subr.mxu0 %v1919
    %2069 = vmatpush1.msra.mxu0 %v1918
    %2070 = vmatprep.subr.mxu0 %v1923
    %2071 = vmatpush1.msra.mxu0 %v1922
    %2072 = vmatprep.subr.mxu0 %v1927
    %2073 = vmatpush1.msra.mxu0 %v1926
    %2074 = vmatprep.subr.mxu0 %v1931
    %2075 = vmatpush1.msra.mxu0 %v1930
    %2076 = vmatprep.subr.mxu0 %v1935
    %2077 = vmatpush1.msra.mxu0 %v1934
    %2078 = vmatprep.subr.mxu0 %v1939
    %2079 = vmatpush1.msra.mxu0 %v1938
    %2080 = vmatprep.subr.mxu0 %v1943
    %2081 = vmatpush1.msra.mxu0 %v1942
    %2082 = vmatprep.subr.mxu0 %v1947
    %2083 = vmatpush1.msra.mxu0 %v1946
    %2084 = vmatprep.subr.mxu0 %v1951
    %2085 = vmatpush1.msra.mxu0 %v1950
    %2086 = vmatprep.subr.mxu0 %v1955
    %2087 = vmatpush1.msra.mxu0 %v1954
    %2088 = vmatprep.subr.mxu0 %v1959
    %2089 = vmatpush1.msra.mxu0 %v1958
    %2090 = vmatprep.subr.mxu0 0.0
    %2091 = vmatpush1.msra.mxu0 0.0
    %2092 = vmatprep.subr.mxu0 0.0
    %2093 = vmatpush1.msra.mxu0 0.0
    %2094 = vmatprep.subr.mxu0 0.0
    %2095 = vmatpush1.msra.mxu0 0.0
    %2096 = vmatprep.subr.mxu0 0.0
    %2097 = vmatpush1.msra.mxu0 0.0
    %2098 = vmatprep.subr.mxu0 0.0
    %2099 = vmatpush1.msra.mxu0 0.0
    %2100 = vmatprep.subr.mxu0 0.0
    %2101 = vmatpush1.msra.mxu0 0.0
    %2102 = vmatprep.subr.mxu0 0.0
    %2103 = vmatpush1.msra.mxu0 0.0
    %2104 = vmatprep.subr.mxu0 0.0
    %2105 = vmatpush1.msra.mxu0 0.0
    %2106 = vmatprep.subr.mxu0 0.0
    %2107 = vmatpush1.msra.mxu0 0.0
    %2108 = vmatprep.subr.mxu0 0.0
    %2109 = vmatpush1.msra.mxu0 0.0
    %2110 = vmatprep.subr.mxu0 0.0
    %2111 = vmatpush1.msra.mxu0 0.0
    %2112 = vmatprep.subr.mxu0 0.0
    %2113 = vmatpush1.msra.mxu0 0.0
    %2114 = vmatprep.subr.mxu0 0.0
    %2115 = vmatpush1.msra.mxu0 0.0
    %2116 = vmatprep.subr.mxu0 0.0
    %2117 = vmatpush1.msra.mxu0 0.0
    %2118 = vmatprep.subr.mxu0 0.0
    %2119 = vmatpush1.msra.mxu0 0.0
    %2120 = vmatprep.subr.mxu0 0.0
    %2121 = vmatpush1.msra.mxu0 0.0
    %2122 = vmatprep.mubr.f32.mxu0 0.0
    %2123 = vmatmul.mubr.f32.gmra.mrb[0].mxu0 %v2029
    %v2124 = vpop.f32.mrb[0].mxu0
    %v2125 = vadd.f32 %v2041, %v2124
    %v2126 = vpop.f32.mrb[0].mxu0
    %v2127 = vadd.f32 %v2045, %v2126
    %2128 = vmatprep.mubr.f32.mxu0 0.0
    %2129 = vmatmul.mubr.f32.gmra.mrb[0].mxu0 %v2030
    %v2130 = vpop.f32.mrb[0].mxu0
    %v2131 = vadd.f32 %v2041, %v2130
    %v2132 = vpop.f32.mrb[0].mxu0
    %v2133 = vadd.f32 %v2045, %v2132
    %2134 = vmatprep.mubr.f32.mxu0 0.0
    %2135 = vmatmul.mubr.f32.gmra.mrb[0].mxu0 %v2031
    %v2136 = vpop.f32.mrb[0].mxu0
    %v2137 = vadd.f32 %v2041, %v2136
    %v2138 = vpop.f32.mrb[0].mxu0
    %v2139 = vadd.f32 %v2045, %v2138
    %2140 = vmatprep.mubr.f32.mxu0 0.0
    %2141 = vmatmul.mubr.f32.gmra.mrb[0].mxu0 %v2032
    %v2142 = vpop.f32.mrb[0].mxu0
    %v2143 = vadd.f32 %v2041, %v2142
    %v2144 = vpop.f32.mrb[0].mxu0
    %v2145 = vadd.f32 %v2045, %v2144
    %2146 = vmatprep.mubr.f32.mxu0 0.0
    %2147 = vmatmul.mubr.f32.gmra.mrb[0].mxu0 %v2033
    %v2148 = vpop.f32.mrb[0].mxu0
    %v2149 = vadd.f32 %v2041, %v2148
    %v2150 = vpop.f32.mrb[0].mxu0
    %v2151 = vadd.f32 %v2045, %v2150
    %2152 = vmatprep.mubr.f32.mxu0 0.0
    %2153 = vmatmul.mubr.f32.gmra.mrb[0].mxu0 %v2034
    %v2154 = vpop.f32.mrb[0].mxu0
    %v2155 = vadd.f32 %v2041, %v2154
    %v2156 = vpop.f32.mrb[0].mxu0
    %v2157 = vadd.f32 %v2045, %v2156
    %2158 = vmatprep.mubr.f32.mxu0 0.0
    %2159 = vmatmul.mubr.f32.gmra.mrb[0].mxu0 %v2035
    %v2160 = vpop.f32.mrb[0].mxu0
    %v2161 = vadd.f32 %v2041, %v2160
    %v2162 = vpop.f32.mrb[0].mxu0
    %v2163 = vadd.f32 %v2045, %v2162
    %2164 = vmatprep.mubr.f32.mxu0 0.0
    %2165 = vmatmul.mubr.f32.gmra.mrb[0].mxu0 %v2036
    %v2166 = vpop.f32.mrb[0].mxu0
    %v2167 = vadd.f32 %v2041, %v2166
    %v2168 = vpop.f32.mrb[0].mxu0
    %v2169 = vadd.f32 %v2045, %v2168
    %2170 = vdwg.mxu0
    %2171 = vmatprep.subr.mxu0 %v1901
    %2172 = vmatpush1.msra.mxu0 %v1900
    %2173 = vmatprep.subr.mxu0 %v1905
    %2174 = vmatpush1.msra.mxu0 %v1904
    %2175 = vmatprep.subr.mxu0 %v1909
    %2176 = vmatpush1.msra.mxu0 %v1908
    %2177 = vmatprep.subr.mxu0 %v1913
    %2178 = vmatpush1.msra.mxu0 %v1912
    %2179 = vmatprep.subr.mxu0 %v1917
    %2180 = vmatpush1.msra.mxu0 %v1916
    %2181 = vmatprep.subr.mxu0 %v1921
    %2182 = vmatpush1.msra.mxu0 %v1920
    %2183 = vmatprep.subr.mxu0 %v1925
    %2184 = vmatpush1.msra.mxu0 %v1924
    %2185 = vmatprep.subr.mxu0 %v1929
    %2186 = vmatpush1.msra.mxu0 %v1928
    %2187 = vmatprep.subr.mxu0 %v1933
    %2188 = vmatpush1.msra.mxu0 %v1932
    %2189 = vmatprep.subr.mxu0 %v1937
    %2190 = vmatpush1.msra.mxu0 %v1936
    %2191 = vmatprep.subr.mxu0 %v1941
    %2192 = vmatpush1.msra.mxu0 %v1940
    %2193 = vmatprep.subr.mxu0 %v1945
    %2194 = vmatpush1.msra.mxu0 %v1944
    %2195 = vmatprep.subr.mxu0 %v1949
    %2196 = vmatpush1.msra.mxu0 %v1948
    %2197 = vmatprep.subr.mxu0 %v1953
    %2198 = vmatpush1.msra.mxu0 %v1952
    %2199 = vmatprep.subr.mxu0 %v1957
    %2200 = vmatpush1.msra.mxu0 %v1956
    %2201 = vmatprep.subr.mxu0 %v1961
    %2202 = vmatpush1.msra.mxu0 %v1960
    %2203 = vmatprep.subr.mxu0 0.0
    %2204 = vmatpush1.msra.mxu0 0.0
    %2205 = vmatprep.subr.mxu0 0.0
    %2206 = vmatpush1.msra.mxu0 0.0
    %2207 = vmatprep.subr.mxu0 0.0
    %2208 = vmatpush1.msra.mxu0 0.0
    %2209 = vmatprep.subr.mxu0 0.0
    %2210 = vmatpush1.msra.mxu0 0.0
    %2211 = vmatprep.subr.mxu0 0.0
    %2212 = vmatpush1.msra.mxu0 0.0
    %2213 = vmatprep.subr.mxu0 0.0
    %2214 = vmatpush1.msra.mxu0 0.0
    %2215 = vmatprep.subr.mxu0 0.0
    %2216 = vmatpush1.msra.mxu0 0.0
    %2217 = vmatprep.subr.mxu0 0.0
    %2218 = vmatpush1.msra.mxu0 0.0
    %2219 = vmatprep.subr.mxu0 0.0
    %2220 = vmatpush1.msra.mxu0 0.0
    %2221 = vmatprep.subr.mxu0 0.0
    %2222 = vmatpush1.msra.mxu0 0.0
    %2223 = vmatprep.subr.mxu0 0.0
    %2224 = vmatpush1.msra.mxu0 0.0
    %2225 = vmatprep.subr.mxu0 0.0
    %2226 = vmatpush1.msra.mxu0 0.0
    %2227 = vmatprep.subr.mxu0 0.0
    %2228 = vmatpush1.msra.mxu0 0.0
    %2229 = vmatprep.subr.mxu0 0.0
    %2230 = vmatpush1.msra.mxu0 0.0
    %2231 = vmatprep.subr.mxu0 0.0
    %2232 = vmatpush1.msra.mxu0 0.0
    %2233 = vmatprep.subr.mxu0 0.0
    %2234 = vmatpush1.msra.mxu0 0.0
    %2235 = vmatprep.mubr.f32.mxu0 0.0
    %2236 = vmatmul.mubr.f32.gmra.mrb[0].mxu0 %v2029
    %v2237 = vpop.f32.mrb[0].mxu0
    %v2238 = vadd.f32 %v2049, %v2237
    %v2239 = vpop.f32.mrb[0].mxu0
    %v2240 = vadd.f32 %v2053, %v2239
    %2241 = vmatprep.mubr.f32.mxu0 0.0
    %2242 = vmatmul.mubr.f32.gmra.mrb[0].mxu0 %v2030
    %v2243 = vpop.f32.mrb[0].mxu0
    %v2244 = vadd.f32 %v2049, %v2243
    %v2245 = vpop.f32.mrb[0].mxu0
    %v2246 = vadd.f32 %v2053, %v2245
    %2247 = vmatprep.mubr.f32.mxu0 0.0
    %2248 = vmatmul.mubr.f32.gmra.mrb[0].mxu0 %v2031
    %v2249 = vpop.f32.mrb[0].mxu0
    %v2250 = vadd.f32 %v2049, %v2249
    %v2251 = vpop.f32.mrb[0].mxu0
    %v2252 = vadd.f32 %v2053, %v2251
    %2253 = vmatprep.mubr.f32.mxu0 0.0
    %2254 = vmatmul.mubr.f32.gmra.mrb[0].mxu0 %v2032
    %v2255 = vpop.f32.mrb[0].mxu0
    %v2256 = vadd.f32 %v2049, %v2255
    %v2257 = vpop.f32.mrb[0].mxu0
    %v2258 = vadd.f32 %v2053, %v2257
    %2259 = vmatprep.mubr.f32.mxu0 0.0
    %2260 = vmatmul.mubr.f32.gmra.mrb[0].mxu0 %v2033
    %v2261 = vpop.f32.mrb[0].mxu0
    %v2262 = vadd.f32 %v2049, %v2261
    %v2263 = vpop.f32.mrb[0].mxu0
    %v2264 = vadd.f32 %v2053, %v2263
    %2265 = vmatprep.mubr.f32.mxu0 0.0
    %2266 = vmatmul.mubr.f32.gmra.mrb[0].mxu0 %v2034
    %v2267 = vpop.f32.mrb[0].mxu0
    %v2268 = vadd.f32 %v2049, %v2267
    %v2269 = vpop.f32.mrb[0].mxu0
    %v2270 = vadd.f32 %v2053, %v2269
    %2271 = vmatprep.mubr.f32.mxu0 0.0
    %2272 = vmatmul.mubr.f32.gmra.mrb[0].mxu0 %v2035
    %v2273 = vpop.f32.mrb[0].mxu0
    %v2274 = vadd.f32 %v2049, %v2273
    %v2275 = vpop.f32.mrb[0].mxu0
    %v2276 = vadd.f32 %v2053, %v2275
    %2277 = vmatprep.mubr.f32.mxu0 0.0
    %2278 = vmatmul.mubr.f32.gmra.mrb[0].mxu0 %v2036
    %v2279 = vpop.f32.mrb[0].mxu0
    %v2280 = vadd.f32 %v2049, %v2279
    %v2281 = vpop.f32.mrb[0].mxu0
    %v2282 = vadd.f32 %v2053, %v2281
    %2283 = vdwg.mxu0
    %2284 = vst [vmem:[#allocation3] sm:$0xff] %v2125
    %2285 = vst [vmem:[#allocation3 + $0x8] sm:$0xff] %v2127
    %2286 = vst [vmem:[#allocation3 + $0x10] sm:$0xff] %v2238
    %2287 = vst [vmem:[#allocation3 + $0x18] sm:$0xff] %v2240
    %2288 = vst [vmem:[#allocation3 + $0x20] sm:$0xff] %v2131
    %2289 = vst [vmem:[#allocation3 + $0x28] sm:$0xff] %v2133
    %2290 = vst [vmem:[#allocation3 + $0x30] sm:$0xff] %v2244
    %2291 = vst [vmem:[#allocation3 + $0x38] sm:$0xff] %v2246
    %2292 = vst [vmem:[#allocation3 + $0x40] sm:$0xff] %v2137
    %2293 = vst [vmem:[#allocation3 + $0x48] sm:$0xff] %v2139
    %2294 = vst [vmem:[#allocation3 + $0x50] sm:$0xff] %v2250
    %2295 = vst [vmem:[#allocation3 + $0x58] sm:$0xff] %v2252
    %2296 = vst [vmem:[#allocation3 + $0x60] sm:$0xff] %v2143
    %2297 = vst [vmem:[#allocation3 + $0x68] sm:$0xff] %v2145
    %2298 = vst [vmem:[#allocation3 + $0x70] sm:$0xff] %v2256
    %2299 = vst [vmem:[#allocation3 + $0x78] sm:$0xff] %v2258
    %2300 = vst [vmem:[#allocation3 + $0x80] sm:$0xff] %v2149
    %2301 = vst [vmem:[#allocation3 + $0x88] sm:$0xff] %v2151
    %2302 = vst [vmem:[#allocation3 + $0x90] sm:$0xff] %v2262
    %2303 = vst [vmem:[#allocation3 + $0x98] sm:$0xff] %v2264
    %2304 = vst [vmem:[#allocation3 + $0xa0] sm:$0xff] %v2155
    %2305 = vst [vmem:[#allocation3 + $0xa8] sm:$0xff] %v2157
    %2306 = vst [vmem:[#allocation3 + $0xb0] sm:$0xff] %v2268
    %2307 = vst [vmem:[#allocation3 + $0xb8] sm:$0xff] %v2270
    %2308 = vst [vmem:[#allocation3 + $0xc0] sm:$0xff] %v2161
    %2309 = vst [vmem:[#allocation3 + $0xc8] sm:$0xff] %v2163
    %2310 = vst [vmem:[#allocation3 + $0xd0] sm:$0xff] %v2274
    %2311 = vst [vmem:[#allocation3 + $0xd8] sm:$0xff] %v2276
    %2312 = vst [vmem:[#allocation3 + $0xe0] sm:$0xff] %v2167
    %2313 = vst [vmem:[#allocation3 + $0xe8] sm:$0xff] %v2169
    %2314 = vst [vmem:[#allocation3 + $0xf0] sm:$0xff] %v2280
    %2315 = vst [vmem:[#allocation3 + $0xf8] sm:$0xff] %v2282
    %v2316 = vld [vmem:[#allocation3] sm:$0xff]
    %v2317 = vld [vmem:[#allocation3 + $0x8] sm:$0xff]
    %v2318 = vld [vmem:[#allocation3 + $0x10] sm:$0xff]
    %v2319 = vld [vmem:[#allocation3 + $0x18] sm:$0xff]
    %2320 = vmatprep.subr.mxu0 %v1964
    %2321 = vmatpush1.msra.mxu0 %v1963
    %2322 = vmatprep.subr.mxu0 %v1968
    %2323 = vmatpush1.msra.mxu0 %v1967
    %2324 = vmatprep.subr.mxu0 %v1972
    %2325 = vmatpush1.msra.mxu0 %v1971
    %2326 = vmatprep.subr.mxu0 %v1976
    %2327 = vmatpush1.msra.mxu0 %v1975
    %2328 = vmatprep.subr.mxu0 %v1980
    %2329 = vmatpush1.msra.mxu0 %v1979
    %2330 = vmatprep.subr.mxu0 %v1984
    %2331 = vmatpush1.msra.mxu0 %v1983
    %2332 = vmatprep.subr.mxu0 %v1988
    %2333 = vmatpush1.msra.mxu0 %v1987
    %2334 = vmatprep.subr.mxu0 %v1992
    %2335 = vmatpush1.msra.mxu0 %v1991
    %2336 = vmatprep.subr.mxu0 %v1996
    %2337 = vmatpush1.msra.mxu0 %v1995
    %2338 = vmatprep.subr.mxu0 %v2000
    %2339 = vmatpush1.msra.mxu0 %v1999
    %2340 = vmatprep.subr.mxu0 %v2004
    %2341 = vmatpush1.msra.mxu0 %v2003
    %2342 = vmatprep.subr.mxu0 %v2008
    %2343 = vmatpush1.msra.mxu0 %v2007
    %2344 = vmatprep.subr.mxu0 %v2012
    %2345 = vmatpush1.msra.mxu0 %v2011
    %2346 = vmatprep.subr.mxu0 %v2016
    %2347 = vmatpush1.msra.mxu0 %v2015
    %2348 = vmatprep.subr.mxu0 %v2020
    %2349 = vmatpush1.msra.mxu0 %v2019
    %2350 = vmatprep.subr.mxu0 %v2024
    %2351 = vmatpush1.msra.mxu0 %v2023
    %2352 = vmatprep.subr.mxu0 0.0
    %2353 = vmatpush1.msra.mxu0 0.0
    %2354 = vmatprep.subr.mxu0 0.0
    %2355 = vmatpush1.msra.mxu0 0.0
    %2356 = vmatprep.subr.mxu0 0.0
    %2357 = vmatpush1.msra.mxu0 0.0
    %2358 = vmatprep.subr.mxu0 0.0
    %2359 = vmatpush1.msra.mxu0 0.0
    %2360 = vmatprep.subr.mxu0 0.0
    %2361 = vmatpush1.msra.mxu0 0.0
    %2362 = vmatprep.subr.mxu0 0.0
    %2363 = vmatpush1.msra.mxu0 0.0
    %2364 = vmatprep.subr.mxu0 0.0
    %2365 = vmatpush1.msra.mxu0 0.0
    %2366 = vmatprep.subr.mxu0 0.0
    %2367 = vmatpush1.msra.mxu0 0.0
    %2368 = vmatprep.subr.mxu0 0.0
    %2369 = vmatpush1.msra.mxu0 0.0
    %2370 = vmatprep.subr.mxu0 0.0
    %2371 = vmatpush1.msra.mxu0 0.0
    %2372 = vmatprep.subr.mxu0 0.0
    %2373 = vmatpush1.msra.mxu0 0.0
    %2374 = vmatprep.subr.mxu0 0.0
    %2375 = vmatpush1.msra.mxu0 0.0
    %2376 = vmatprep.subr.mxu0 0.0
    %2377 = vmatpush1.msra.mxu0 0.0
    %2378 = vmatprep.subr.mxu0 0.0
    %2379 = vmatpush1.msra.mxu0 0.0
    %2380 = vmatprep.subr.mxu0 0.0
    %2381 = vmatpush1.msra.mxu0 0.0
    %2382 = vmatprep.subr.mxu0 0.0
    %2383 = vmatpush1.msra.mxu0 0.0
    %2384 = vmatprep.mubr.f32.mxu0 0.0
    %2385 = vmatmul.mubr.f32.gmra.mrb[0].mxu0 0.0
    %v2386 = vpop.f32.mrb[0].mxu0
    %v2387 = vadd.f32 0.0, %v2386
    %v2388 = vpop.f32.mrb[0].mxu0
    %v2389 = vadd.f32 0.0, %v2388
    %2390 = vdwg.mxu0
    %2391 = vmatprep.subr.mxu0 %v1966
    %2392 = vmatpush1.msra.mxu0 %v1965
    %2393 = vmatprep.subr.mxu0 %v1970
    %2394 = vmatpush1.msra.mxu0 %v1969
    %2395 = vmatprep.subr.mxu0 %v1974
    %2396 = vmatpush1.msra.mxu0 %v1973
    %2397 = vmatprep.subr.mxu0 %v1978
    %2398 = vmatpush1.msra.mxu0 %v1977
    %2399 = vmatprep.subr.mxu0 %v1982
    %2400 = vmatpush1.msra.mxu0 %v1981
    %2401 = vmatprep.subr.mxu0 %v1986
    %2402 = vmatpush1.msra.mxu0 %v1985
    %2403 = vmatprep.subr.mxu0 %v1990
    %2404 = vmatpush1.msra.mxu0 %v1989
    %2405 = vmatprep.subr.mxu0 %v1994
    %2406 = vmatpush1.msra.mxu0 %v1993
    %2407 = vmatprep.subr.mxu0 %v1998
    %2408 = vmatpush1.msra.mxu0 %v1997
    %2409 = vmatprep.subr.mxu0 %v2002
    %2410 = vmatpush1.msra.mxu0 %v2001
    %2411 = vmatprep.subr.mxu0 %v2006
    %2412 = vmatpush1.msra.mxu0 %v2005
    %2413 = vmatprep.subr.mxu0 %v2010
    %2414 = vmatpush1.msra.mxu0 %v2009
    %2415 = vmatprep.subr.mxu0 %v2014
    %2416 = vmatpush1.msra.mxu0 %v2013
    %2417 = vmatprep.subr.mxu0 %v2018
    %2418 = vmatpush1.msra.mxu0 %v2017
    %2419 = vmatprep.subr.mxu0 %v2022
    %2420 = vmatpush1.msra.mxu0 %v2021
    %2421 = vmatprep.subr.mxu0 %v2026
    %2422 = vmatpush1.msra.mxu0 %v2025
    %2423 = vmatprep.subr.mxu0 0.0
    %2424 = vmatpush1.msra.mxu0 0.0
    %2425 = vmatprep.subr.mxu0 0.0
    %2426 = vmatpush1.msra.mxu0 0.0
    %2427 = vmatprep.subr.mxu0 0.0
    %2428 = vmatpush1.msra.mxu0 0.0
    %2429 = vmatprep.subr.mxu0 0.0
    %2430 = vmatpush1.msra.mxu0 0.0
    %2431 = vmatprep.subr.mxu0 0.0
    %2432 = vmatpush1.msra.mxu0 0.0
    %2433 = vmatprep.subr.mxu0 0.0
    %2434 = vmatpush1.msra.mxu0 0.0
    %2435 = vmatprep.subr.mxu0 0.0
    %2436 = vmatpush1.msra.mxu0 0.0
    %2437 = vmatprep.subr.mxu0 0.0
    %2438 = vmatpush1.msra.mxu0 0.0
    %2439 = vmatprep.subr.mxu0 0.0
    %2440 = vmatpush1.msra.mxu0 0.0
    %2441 = vmatprep.subr.mxu0 0.0
    %2442 = vmatpush1.msra.mxu0 0.0
    %2443 = vmatprep.subr.mxu0 0.0
    %2444 = vmatpush1.msra.mxu0 0.0
    %2445 = vmatprep.subr.mxu0 0.0
    %2446 = vmatpush1.msra.mxu0 0.0
    %2447 = vmatprep.subr.mxu0 0.0
    %2448 = vmatpush1.msra.mxu0 0.0
    %2449 = vmatprep.subr.mxu0 0.0
    %2450 = vmatpush1.msra.mxu0 0.0
    %2451 = vmatprep.subr.mxu0 0.0
    %2452 = vmatpush1.msra.mxu0 0.0
    %2453 = vmatprep.subr.mxu0 0.0
    %2454 = vmatpush1.msra.mxu0 0.0
    %2455 = vmatprep.mubr.f32.mxu0 0.0
    %2456 = vmatmul.mubr.f32.gmra.mrb[0].mxu0 0.0
    %v2457 = vpop.f32.mrb[0].mxu0
    %v2458 = vadd.f32 0.0, %v2457
    %v2459 = vpop.f32.mrb[0].mxu0
    %v2460 = vadd.f32 0.0, %v2459
    %2461 = vdwg.mxu0
    %v2462 = vadd.f32 %v2316, %v2387
    %v2463 = vadd.f32 %v2317, %v2389
    %v2464 = vadd.f32 %v2318, %v2458
    %v2465 = vadd.f32 %v2319, %v2460
    %v2466 = vxor.u32 %v2462, 2147483648
    %v2467 = vmul.f32 %v2466, 1.442695
    %v2468 = vpow.pop %v2467
    %v2469 = vadd.f32 %v2468, 1.0
    %v2470 = vrcp.pop %v2469
    %v2471 = vmul.f32 1.0, %v2470
    %v2472 = vxor.u32 %v2463, 2147483648
    %v2473 = vmul.f32 %v2472, 1.442695
    %v2474 = vpow.pop %v2473
    %v2475 = vadd.f32 %v2474, 1.0
    %v2476 = vrcp.pop %v2475
    %v2477 = vmul.f32 1.0, %v2476
    %v2478 = vtanh.pop %v2464
    %v2479 = vxor.u32 %v2465, 2147483648
    %v2480 = vmul.f32 %v2479, 1.442695
    %v2481 = vpow.pop %v2480
    %v2482 = vadd.f32 %v2481, 1.0
    %v2483 = vrcp.pop %v2482
    %v2484 = vmul.f32 1.0, %v2483
    %v2485 = vmul.f32 %v2477, 0.0
    %v2486 = vmul.f32 %v2471, %v2478
    %v2487 = vadd.f32 %v2485, %v2486
    %v2488 = vtanh.pop %v2487
    %v2489 = vmul.f32 %v2484, %v2488
    %2490 = vst [vmem:[#allocation2] sm:$0xff] %v2489
    %v2491 = vld [vmem:[%s658] sm:$0xff]
    %v2492 = vld [vmem:[%s658 + $0x8] sm:$0xff]
    %v2493 = vld [vmem:[%s658 + $0x10] sm:$0xff]
    %v2494 = vld [vmem:[%s658 + $0x18] sm:$0xff]
    %2495 = vmatprep.subr.mxu0 %v1964
    %2496 = vmatpush1.msra.mxu0 %v1963
    %2497 = vmatprep.subr.mxu0 %v1968
    %2498 = vmatpush1.msra.mxu0 %v1967
    %2499 = vmatprep.subr.mxu0 %v1972
    %2500 = vmatpush1.msra.mxu0 %v1971
    %2501 = vmatprep.subr.mxu0 %v1976
    %2502 = vmatpush1.msra.mxu0 %v1975
    %2503 = vmatprep.subr.mxu0 %v1980
    %2504 = vmatpush1.msra.mxu0 %v1979
    %2505 = vmatprep.subr.mxu0 %v1984
    %2506 = vmatpush1.msra.mxu0 %v1983
    %2507 = vmatprep.subr.mxu0 %v1988
    %2508 = vmatpush1.msra.mxu0 %v1987
    %2509 = vmatprep.subr.mxu0 %v1992
    %2510 = vmatpush1.msra.mxu0 %v1991
    %2511 = vmatprep.subr.mxu0 %v1996
    %2512 = vmatpush1.msra.mxu0 %v1995
    %2513 = vmatprep.subr.mxu0 %v2000
    %2514 = vmatpush1.msra.mxu0 %v1999
    %2515 = vmatprep.subr.mxu0 %v2004
    %2516 = vmatpush1.msra.mxu0 %v2003
    %2517 = vmatprep.subr.mxu0 %v2008
    %2518 = vmatpush1.msra.mxu0 %v2007
    %2519 = vmatprep.subr.mxu0 %v2012
    %2520 = vmatpush1.msra.mxu0 %v2011
    %2521 = vmatprep.subr.mxu0 %v2016
    %2522 = vmatpush1.msra.mxu0 %v2015
    %2523 = vmatprep.subr.mxu0 %v2020
    %2524 = vmatpush1.msra.mxu0 %v2019
    %2525 = vmatprep.subr.mxu0 %v2024
    %2526 = vmatpush1.msra.mxu0 %v2023
    %2527 = vmatprep.subr.mxu0 0.0
    %2528 = vmatpush1.msra.mxu0 0.0
    %2529 = vmatprep.subr.mxu0 0.0
    %2530 = vmatpush1.msra.mxu0 0.0
    %2531 = vmatprep.subr.mxu0 0.0
    %2532 = vmatpush1.msra.mxu0 0.0
    %2533 = vmatprep.subr.mxu0 0.0
    %2534 = vmatpush1.msra.mxu0 0.0
    %2535 = vmatprep.subr.mxu0 0.0
    %2536 = vmatpush1.msra.mxu0 0.0
    %2537 = vmatprep.subr.mxu0 0.0
    %2538 = vmatpush1.msra.mxu0 0.0
    %2539 = vmatprep.subr.mxu0 0.0
    %2540 = vmatpush1.msra.mxu0 0.0
    %2541 = vmatprep.subr.mxu0 0.0
    %2542 = vmatpush1.msra.mxu0 0.0
    %2543 = vmatprep.subr.mxu0 0.0
    %2544 = vmatpush1.msra.mxu0 0.0
    %2545 = vmatprep.subr.mxu0 0.0
    %2546 = vmatpush1.msra.mxu0 0.0
    %2547 = vmatprep.subr.mxu0 0.0
    %2548 = vmatpush1.msra.mxu0 0.0
    %2549 = vmatprep.subr.mxu0 0.0
    %2550 = vmatpush1.msra.mxu0 0.0
    %2551 = vmatprep.subr.mxu0 0.0
    %2552 = vmatpush1.msra.mxu0 0.0
    %2553 = vmatprep.subr.mxu0 0.0
    %2554 = vmatpush1.msra.mxu0 0.0
    %2555 = vmatprep.subr.mxu0 0.0
    %2556 = vmatpush1.msra.mxu0 0.0
    %2557 = vmatprep.subr.mxu0 0.0
    %2558 = vmatpush1.msra.mxu0 0.0
    %2559 = vmatprep.mubr.f32.mxu0 0.0
    %2560 = vmatmul.mubr.f32.gmra.mrb[0].mxu0 %v2489
    %v2561 = vpop.f32.mrb[0].mxu0
    %v2562 = vadd.f32 0.0, %v2561
    %v2563 = vpop.f32.mrb[0].mxu0
    %v2564 = vadd.f32 0.0, %v2563
    %2565 = vdwg.mxu0
    %2566 = vmatprep.subr.mxu0 %v1966
    %2567 = vmatpush1.msra.mxu0 %v1965
    %2568 = vmatprep.subr.mxu0 %v1970
    %2569 = vmatpush1.msra.mxu0 %v1969
    %2570 = vmatprep.subr.mxu0 %v1974
    %2571 = vmatpush1.msra.mxu0 %v1973
    %2572 = vmatprep.subr.mxu0 %v1978
    %2573 = vmatpush1.msra.mxu0 %v1977
    %2574 = vmatprep.subr.mxu0 %v1982
    %2575 = vmatpush1.msra.mxu0 %v1981
    %2576 = vmatprep.subr.mxu0 %v1986
    %2577 = vmatpush1.msra.mxu0 %v1985
    %2578 = vmatprep.subr.mxu0 %v1990
    %2579 = vmatpush1.msra.mxu0 %v1989
    %2580 = vmatprep.subr.mxu0 %v1994
    %2581 = vmatpush1.msra.mxu0 %v1993
    %2582 = vmatprep.subr.mxu0 %v1998
    %2583 = vmatpush1.msra.mxu0 %v1997
    %2584 = vmatprep.subr.mxu0 %v2002
    %2585 = vmatpush1.msra.mxu0 %v2001
    %2586 = vmatprep.subr.mxu0 %v2006
    %2587 = vmatpush1.msra.mxu0 %v2005
    %2588 = vmatprep.subr.mxu0 %v2010
    %2589 = vmatpush1.msra.mxu0 %v2009
    %2590 = vmatprep.subr.mxu0 %v2014
    %2591 = vmatpush1.msra.mxu0 %v2013
    %2592 = vmatprep.subr.mxu0 %v2018
    %2593 = vmatpush1.msra.mxu0 %v2017
    %2594 = vmatprep.subr.mxu0 %v2022
    %2595 = vmatpush1.msra.mxu0 %v2021
    %2596 = vmatprep.subr.mxu0 %v2026
    %2597 = vmatpush1.msra.mxu0 %v2025
    %2598 = vmatprep.subr.mxu0 0.0
    %2599 = vmatpush1.msra.mxu0 0.0
    %2600 = vmatprep.subr.mxu0 0.0
    %2601 = vmatpush1.msra.mxu0 0.0
    %2602 = vmatprep.subr.mxu0 0.0
    %2603 = vmatpush1.msra.mxu0 0.0
    %2604 = vmatprep.subr.mxu0 0.0
    %2605 = vmatpush1.msra.mxu0 0.0
    %2606 = vmatprep.subr.mxu0 0.0
    %2607 = vmatpush1.msra.mxu0 0.0
    %2608 = vmatprep.subr.mxu0 0.0
    %2609 = vmatpush1.msra.mxu0 0.0
    %2610 = vmatprep.subr.mxu0 0.0
    %2611 = vmatpush1.msra.mxu0 0.0
    %2612 = vmatprep.subr.mxu0 0.0
    %2613 = vmatpush1.msra.mxu0 0.0
    %2614 = vmatprep.subr.mxu0 0.0
    %2615 = vmatpush1.msra.mxu0 0.0
    %2616 = vmatprep.subr.mxu0 0.0
    %2617 = vmatpush1.msra.mxu0 0.0
    %2618 = vmatprep.subr.mxu0 0.0
    %2619 = vmatpush1.msra.mxu0 0.0
    %2620 = vmatprep.subr.mxu0 0.0
    %2621 = vmatpush1.msra.mxu0 0.0
    %2622 = vmatprep.subr.mxu0 0.0
    %2623 = vmatpush1.msra.mxu0 0.0
    %2624 = vmatprep.subr.mxu0 0.0
    %2625 = vmatpush1.msra.mxu0 0.0
    %2626 = vmatprep.subr.mxu0 0.0
    %2627 = vmatpush1.msra.mxu0 0.0
    %2628 = vmatprep.subr.mxu0 0.0
    %2629 = vmatpush1.msra.mxu0 0.0
    %2630 = vmatprep.mubr.f32.mxu0 0.0
    %2631 = vmatmul.mubr.f32.gmra.mrb[0].mxu0 %v2489
    %v2632 = vpop.f32.mrb[0].mxu0
    %v2633 = vadd.f32 0.0, %v2632
    %v2634 = vpop.f32.mrb[0].mxu0
    %v2635 = vadd.f32 0.0, %v2634
    %2636 = vdwg.mxu0
    %v2637 = vadd.f32 %v2491, %v2562
    %v2638 = vadd.f32 %v2492, %v2564
    %v2639 = vadd.f32 %v2493, %v2633
    %v2640 = vadd.f32 %v2494, %v2635
    %v2641 = vxor.u32 %v2637, 2147483648
    %v2642 = vmul.f32 %v2641, 1.442695
    %v2643 = vpow.pop %v2642
    %v2644 = vadd.f32 %v2643, 1.0
    %v2645 = vrcp.pop %v2644
    %v2646 = vmul.f32 1.0, %v2645
    %v2647 = vxor.u32 %v2638, 2147483648
    %v2648 = vmul.f32 %v2647, 1.442695
    %v2649 = vpow.pop %v2648
    %v2650 = vadd.f32 %v2649, 1.0
    %v2651 = vrcp.pop %v2650
    %v2652 = vmul.f32 1.0, %v2651
    %v2653 = vtanh.pop %v2639
    %v2654 = vxor.u32 %v2640, 2147483648
    %v2655 = vmul.f32 %v2654, 1.442695
    %v2656 = vpow.pop %v2655
    %v2657 = vadd.f32 %v2656, 1.0
    %v2658 = vrcp.pop %v2657
    %v2659 = vmul.f32 1.0, %v2658
    %v2660 = vmul.f32 %v2652, %v2487
    %v2661 = vmul.f32 %v2646, %v2653
    %v2662 = vadd.f32 %v2660, %v2661
    %v2663 = vtanh.pop %v2662
    %v2664 = vmul.f32 %v2659, %v2663
    %2665 = vst [vmem:[%s833] sm:$0xff] %v2664
    %v2666 = vld [vmem:[%s835] sm:$0xff]
    %v2667 = vld [vmem:[%s835 + $0x8] sm:$0xff]
    %v2668 = vld [vmem:[%s835 + $0x10] sm:$0xff]
    %v2669 = vld [vmem:[%s835 + $0x18] sm:$0xff]
    %2670 = vmatprep.subr.mxu0 %v1964
    %2671 = vmatpush1.msra.mxu0 %v1963
    %2672 = vmatprep.subr.mxu0 %v1968
    %2673 = vmatpush1.msra.mxu0 %v1967
    %2674 = vmatprep.subr.mxu0 %v1972
    %2675 = vmatpush1.msra.mxu0 %v1971
    %2676 = vmatprep.subr.mxu0 %v1976
    %2677 = vmatpush1.msra.mxu0 %v1975
    %2678 = vmatprep.subr.mxu0 %v1980
    %2679 = vmatpush1.msra.mxu0 %v1979
    %2680 = vmatprep.subr.mxu0 %v1984
    %2681 = vmatpush1.msra.mxu0 %v1983
    %2682 = vmatprep.subr.mxu0 %v1988
    %2683 = vmatpush1.msra.mxu0 %v1987
    %2684 = vmatprep.subr.mxu0 %v1992
    %2685 = vmatpush1.msra.mxu0 %v1991
    %2686 = vmatprep.subr.mxu0 %v1996
    %2687 = vmatpush1.msra.mxu0 %v1995
    %2688 = vmatprep.subr.mxu0 %v2000
    %2689 = vmatpush1.msra.mxu0 %v1999
    %2690 = vmatprep.subr.mxu0 %v2004
    %2691 = vmatpush1.msra.mxu0 %v2003
    %2692 = vmatprep.subr.mxu0 %v2008
    %2693 = vmatpush1.msra.mxu0 %v2007
    %2694 = vmatprep.subr.mxu0 %v2012
    %2695 = vmatpush1.msra.mxu0 %v2011
    %2696 = vmatprep.subr.mxu0 %v2016
    %2697 = vmatpush1.msra.mxu0 %v2015
    %2698 = vmatprep.subr.mxu0 %v2020
    %2699 = vmatpush1.msra.mxu0 %v2019
    %2700 = vmatprep.subr.mxu0 %v2024
    %2701 = vmatpush1.msra.mxu0 %v2023
    %2702 = vmatprep.subr.mxu0 0.0
    %2703 = vmatpush1.msra.mxu0 0.0
    %2704 = vmatprep.subr.mxu0 0.0
    %2705 = vmatpush1.msra.mxu0 0.0
    %2706 = vmatprep.subr.mxu0 0.0
    %2707 = vmatpush1.msra.mxu0 0.0
    %2708 = vmatprep.subr.mxu0 0.0
    %2709 = vmatpush1.msra.mxu0 0.0
    %2710 = vmatprep.subr.mxu0 0.0
    %2711 = vmatpush1.msra.mxu0 0.0
    %2712 = vmatprep.subr.mxu0 0.0
    %2713 = vmatpush1.msra.mxu0 0.0
    %2714 = vmatprep.subr.mxu0 0.0
    %2715 = vmatpush1.msra.mxu0 0.0
    %2716 = vmatprep.subr.mxu0 0.0
    %2717 = vmatpush1.msra.mxu0 0.0
    %2718 = vmatprep.subr.mxu0 0.0
    %2719 = vmatpush1.msra.mxu0 0.0
    %2720 = vmatprep.subr.mxu0 0.0
    %2721 = vmatpush1.msra.mxu0 0.0
    %2722 = vmatprep.subr.mxu0 0.0
    %2723 = vmatpush1.msra.mxu0 0.0
    %2724 = vmatprep.subr.mxu0 0.0
    %2725 = vmatpush1.msra.mxu0 0.0
    %2726 = vmatprep.subr.mxu0 0.0
    %2727 = vmatpush1.msra.mxu0 0.0
    %2728 = vmatprep.subr.mxu0 0.0
    %2729 = vmatpush1.msra.mxu0 0.0
    %2730 = vmatprep.subr.mxu0 0.0
    %2731 = vmatpush1.msra.mxu0 0.0
    %2732 = vmatprep.subr.mxu0 0.0
    %2733 = vmatpush1.msra.mxu0 0.0
    %2734 = vmatprep.mubr.f32.mxu0 0.0
    %2735 = vmatmul.mubr.f32.gmra.mrb[0].mxu0 %v2664
    %v2736 = vpop.f32.mrb[0].mxu0
    %v2737 = vadd.f32 0.0, %v2736
    %v2738 = vpop.f32.mrb[0].mxu0
    %v2739 = vadd.f32 0.0, %v2738
    %2740 = vdwg.mxu0
    %2741 = vmatprep.subr.mxu0 %v1966
    %2742 = vmatpush1.msra.mxu0 %v1965
    %2743 = vmatprep.subr.mxu0 %v1970
    %2744 = vmatpush1.msra.mxu0 %v1969
    %2745 = vmatprep.subr.mxu0 %v1974
    %2746 = vmatpush1.msra.mxu0 %v1973
    %2747 = vmatprep.subr.mxu0 %v1978
    %2748 = vmatpush1.msra.mxu0 %v1977
    %2749 = vmatprep.subr.mxu0 %v1982
    %2750 = vmatpush1.msra.mxu0 %v1981
    %2751 = vmatprep.subr.mxu0 %v1986
    %2752 = vmatpush1.msra.mxu0 %v1985
    %2753 = vmatprep.subr.mxu0 %v1990
    %2754 = vmatpush1.msra.mxu0 %v1989
    %2755 = vmatprep.subr.mxu0 %v1994
    %2756 = vmatpush1.msra.mxu0 %v1993
    %2757 = vmatprep.subr.mxu0 %v1998
    %2758 = vmatpush1.msra.mxu0 %v1997
    %2759 = vmatprep.subr.mxu0 %v2002
    %2760 = vmatpush1.msra.mxu0 %v2001
    %2761 = vmatprep.subr.mxu0 %v2006
    %2762 = vmatpush1.msra.mxu0 %v2005
    %2763 = vmatprep.subr.mxu0 %v2010
    %2764 = vmatpush1.msra.mxu0 %v2009
    %2765 = vmatprep.subr.mxu0 %v2014
    %2766 = vmatpush1.msra.mxu0 %v2013
    %2767 = vmatprep.subr.mxu0 %v2018
    %2768 = vmatpush1.msra.mxu0 %v2017
    %2769 = vmatprep.subr.mxu0 %v2022
    %2770 = vmatpush1.msra.mxu0 %v2021
    %2771 = vmatprep.subr.mxu0 %v2026
    %2772 = vmatpush1.msra.mxu0 %v2025
    %2773 = vmatprep.subr.mxu0 0.0
    %2774 = vmatpush1.msra.mxu0 0.0
    %2775 = vmatprep.subr.mxu0 0.0
    %2776 = vmatpush1.msra.mxu0 0.0
    %2777 = vmatprep.subr.mxu0 0.0
    %2778 = vmatpush1.msra.mxu0 0.0
    %2779 = vmatprep.subr.mxu0 0.0
    %2780 = vmatpush1.msra.mxu0 0.0
    %2781 = vmatprep.subr.mxu0 0.0
    %2782 = vmatpush1.msra.mxu0 0.0
    %2783 = vmatprep.subr.mxu0 0.0
    %2784 = vmatpush1.msra.mxu0 0.0
    %2785 = vmatprep.subr.mxu0 0.0
    %2786 = vmatpush1.msra.mxu0 0.0
    %2787 = vmatprep.subr.mxu0 0.0
    %2788 = vmatpush1.msra.mxu0 0.0
    %2789 = vmatprep.subr.mxu0 0.0
    %2790 = vmatpush1.msra.mxu0 0.0
    %2791 = vmatprep.subr.mxu0 0.0
    %2792 = vmatpush1.msra.mxu0 0.0
    %2793 = vmatprep.subr.mxu0 0.0
    %2794 = vmatpush1.msra.mxu0 0.0
    %2795 = vmatprep.subr.mxu0 0.0
    %2796 = vmatpush1.msra.mxu0 0.0
    %2797 = vmatprep.subr.mxu0 0.0
    %2798 = vmatpush1.msra.mxu0 0.0
    %2799 = vmatprep.subr.mxu0 0.0
    %2800 = vmatpush1.msra.mxu0 0.0
    %2801 = vmatprep.subr.mxu0 0.0
    %2802 = vmatpush1.msra.mxu0 0.0
    %2803 = vmatprep.subr.mxu0 0.0
    %2804 = vmatpush1.msra.mxu0 0.0
    %2805 = vmatprep.mubr.f32.mxu0 0.0
    %2806 = vmatmul.mubr.f32.gmra.mrb[0].mxu0 %v2664
    %v2807 = vpop.f32.mrb[0].mxu0
    %v2808 = vadd.f32 0.0, %v2807
    %v2809 = vpop.f32.mrb[0].mxu0
    %v2810 = vadd.f32 0.0, %v2809
    %2811 = vdwg.mxu0
    %v2812 = vadd.f32 %v2666, %v2737
    %v2813 = vadd.f32 %v2667, %v2739
    %v2814 = vadd.f32 %v2668, %v2808
    %v2815 = vadd.f32 %v2669, %v2810
    %v2816 = vxor.u32 %v2812, 2147483648
    %v2817 = vmul.f32 %v2816, 1.442695
    %v2818 = vpow.pop %v2817
    %v2819 = vadd.f32 %v2818, 1.0
    %v2820 = vrcp.pop %v2819
    %v2821 = vmul.f32 1.0, %v2820
    %v2822 = vxor.u32 %v2813, 2147483648
    %v2823 = vmul.f32 %v2822, 1.442695
    %v2824 = vpow.pop %v2823
    %v2825 = vadd.f32 %v2824, 1.0
    %v2826 = vrcp.pop %v2825
    %v2827 = vmul.f32 1.0, %v2826
    %v2828 = vtanh.pop %v2814
    %v2829 = vxor.u32 %v2815, 2147483648
    %v2830 = vmul.f32 %v2829, 1.442695
    %v2831 = vpow.pop %v2830
    %v2832 = vadd.f32 %v2831, 1.0
    %v2833 = vrcp.pop %v2832
    %v2834 = vmul.f32 1.0, %v2833
    %v2835 = vmul.f32 %v2827, %v2662
    %v2836 = vmul.f32 %v2821, %v2828
    %v2837 = vadd.f32 %v2835, %v2836
    %v2838 = vtanh.pop %v2837
    %v2839 = vmul.f32 %v2834, %v2838
    %2840 = vst [vmem:[%s1010] sm:$0xff] %v2839
    %v2841 = vld [vmem:[%s1012] sm:$0xff]
    %v2842 = vld [vmem:[%s1012 + $0x8] sm:$0xff]
    %v2843 = vld [vmem:[%s1012 + $0x10] sm:$0xff]
    %v2844 = vld [vmem:[%s1012 + $0x18] sm:$0xff]
    %2845 = vmatprep.subr.mxu0 %v1964
    %2846 = vmatpush1.msra.mxu0 %v1963
    %2847 = vmatprep.subr.mxu0 %v1968
    %2848 = vmatpush1.msra.mxu0 %v1967
    %2849 = vmatprep.subr.mxu0 %v1972
    %2850 = vmatpush1.msra.mxu0 %v1971
    %2851 = vmatprep.subr.mxu0 %v1976
    %2852 = vmatpush1.msra.mxu0 %v1975
    %2853 = vmatprep.subr.mxu0 %v1980
    %2854 = vmatpush1.msra.mxu0 %v1979
    %2855 = vmatprep.subr.mxu0 %v1984
    %2856 = vmatpush1.msra.mxu0 %v1983
    %2857 = vmatprep.subr.mxu0 %v1988
    %2858 = vmatpush1.msra.mxu0 %v1987
    %2859 = vmatprep.subr.mxu0 %v1992
    %2860 = vmatpush1.msra.mxu0 %v1991
    %2861 = vmatprep.subr.mxu0 %v1996
    %2862 = vmatpush1.msra.mxu0 %v1995
    %2863 = vmatprep.subr.mxu0 %v2000
    %2864 = vmatpush1.msra.mxu0 %v1999
    %2865 = vmatprep.subr.mxu0 %v2004
    %2866 = vmatpush1.msra.mxu0 %v2003
    %2867 = vmatprep.subr.mxu0 %v2008
    %2868 = vmatpush1.msra.mxu0 %v2007
    %2869 = vmatprep.subr.mxu0 %v2012
    %2870 = vmatpush1.msra.mxu0 %v2011
    %2871 = vmatprep.subr.mxu0 %v2016
    %2872 = vmatpush1.msra.mxu0 %v2015
    %2873 = vmatprep.subr.mxu0 %v2020
    %2874 = vmatpush1.msra.mxu0 %v2019
    %2875 = vmatprep.subr.mxu0 %v2024
    %2876 = vmatpush1.msra.mxu0 %v2023
    %2877 = vmatprep.subr.mxu0 0.0
    %2878 = vmatpush1.msra.mxu0 0.0
    %2879 = vmatprep.subr.mxu0 0.0
    %2880 = vmatpush1.msra.mxu0 0.0
    %2881 = vmatprep.subr.mxu0 0.0
    %2882 = vmatpush1.msra.mxu0 0.0
    %2883 = vmatprep.subr.mxu0 0.0
    %2884 = vmatpush1.msra.mxu0 0.0
    %2885 = vmatprep.subr.mxu0 0.0
    %2886 = vmatpush1.msra.mxu0 0.0
    %2887 = vmatprep.subr.mxu0 0.0
    %2888 = vmatpush1.msra.mxu0 0.0
    %2889 = vmatprep.subr.mxu0 0.0
    %2890 = vmatpush1.msra.mxu0 0.0
    %2891 = vmatprep.subr.mxu0 0.0
    %2892 = vmatpush1.msra.mxu0 0.0
    %2893 = vmatprep.subr.mxu0 0.0
    %2894 = vmatpush1.msra.mxu0 0.0
    %2895 = vmatprep.subr.mxu0 0.0
    %2896 = vmatpush1.msra.mxu0 0.0
    %2897 = vmatprep.subr.mxu0 0.0
    %2898 = vmatpush1.msra.mxu0 0.0
    %2899 = vmatprep.subr.mxu0 0.0
    %2900 = vmatpush1.msra.mxu0 0.0
    %2901 = vmatprep.subr.mxu0 0.0
    %2902 = vmatpush1.msra.mxu0 0.0
    %2903 = vmatprep.subr.mxu0 0.0
    %2904 = vmatpush1.msra.mxu0 0.0
    %2905 = vmatprep.subr.mxu0 0.0
    %2906 = vmatpush1.msra.mxu0 0.0
    %2907 = vmatprep.subr.mxu0 0.0
    %2908 = vmatpush1.msra.mxu0 0.0
    %2909 = vmatprep.mubr.f32.mxu0 0.0
    %2910 = vmatmul.mubr.f32.gmra.mrb[0].mxu0 %v2839
    %v2911 = vpop.f32.mrb[0].mxu0
    %v2912 = vadd.f32 0.0, %v2911
    %v2913 = vpop.f32.mrb[0].mxu0
    %v2914 = vadd.f32 0.0, %v2913
    %2915 = vdwg.mxu0
    %2916 = vmatprep.subr.mxu0 %v1966
    %2917 = vmatpush1.msra.mxu0 %v1965
    %2918 = vmatprep.subr.mxu0 %v1970
    %2919 = vmatpush1.msra.mxu0 %v1969
    %2920 = vmatprep.subr.mxu0 %v1974
    %2921 = vmatpush1.msra.mxu0 %v1973
    %2922 = vmatprep.subr.mxu0 %v1978
    %2923 = vmatpush1.msra.mxu0 %v1977
    %2924 = vmatprep.subr.mxu0 %v1982
    %2925 = vmatpush1.msra.mxu0 %v1981
    %2926 = vmatprep.subr.mxu0 %v1986
    %2927 = vmatpush1.msra.mxu0 %v1985
    %2928 = vmatprep.subr.mxu0 %v1990
    %2929 = vmatpush1.msra.mxu0 %v1989
    %2930 = vmatprep.subr.mxu0 %v1994
    %2931 = vmatpush1.msra.mxu0 %v1993
    %2932 = vmatprep.subr.mxu0 %v1998
    %2933 = vmatpush1.msra.mxu0 %v1997
    %2934 = vmatprep.subr.mxu0 %v2002
    %2935 = vmatpush1.msra.mxu0 %v2001
    %2936 = vmatprep.subr.mxu0 %v2006
    %2937 = vmatpush1.msra.mxu0 %v2005
    %2938 = vmatprep.subr.mxu0 %v2010
    %2939 = vmatpush1.msra.mxu0 %v2009
    %2940 = vmatprep.subr.mxu0 %v2014
    %2941 = vmatpush1.msra.mxu0 %v2013
    %2942 = vmatprep.subr.mxu0 %v2018
    %2943 = vmatpush1.msra.mxu0 %v2017
    %2944 = vmatprep.subr.mxu0 %v2022
    %2945 = vmatpush1.msra.mxu0 %v2021
    %2946 = vmatprep.subr.mxu0 %v2026
    %2947 = vmatpush1.msra.mxu0 %v2025
    %2948 = vmatprep.subr.mxu0 0.0
    %2949 = vmatpush1.msra.mxu0 0.0
    %2950 = vmatprep.subr.mxu0 0.0
    %2951 = vmatpush1.msra.mxu0 0.0
    %2952 = vmatprep.subr.mxu0 0.0
    %2953 = vmatpush1.msra.mxu0 0.0
    %2954 = vmatprep.subr.mxu0 0.0
    %2955 = vmatpush1.msra.mxu0 0.0
    %2956 = vmatprep.subr.mxu0 0.0
    %2957 = vmatpush1.msra.mxu0 0.0
    %2958 = vmatprep.subr.mxu0 0.0
    %2959 = vmatpush1.msra.mxu0 0.0
    %2960 = vmatprep.subr.mxu0 0.0
    %2961 = vmatpush1.msra.mxu0 0.0
    %2962 = vmatprep.subr.mxu0 0.0
    %2963 = vmatpush1.msra.mxu0 0.0
    %2964 = vmatprep.subr.mxu0 0.0
    %2965 = vmatpush1.msra.mxu0 0.0
    %2966 = vmatprep.subr.mxu0 0.0
    %2967 = vmatpush1.msra.mxu0 0.0
    %2968 = vmatprep.subr.mxu0 0.0
    %2969 = vmatpush1.msra.mxu0 0.0
    %2970 = vmatprep.subr.mxu0 0.0
    %2971 = vmatpush1.msra.mxu0 0.0
    %2972 = vmatprep.subr.mxu0 0.0
    %2973 = vmatpush1.msra.mxu0 0.0
    %2974 = vmatprep.subr.mxu0 0.0
    %2975 = vmatpush1.msra.mxu0 0.0
    %2976 = vmatprep.subr.mxu0 0.0
    %2977 = vmatpush1.msra.mxu0 0.0
    %2978 = vmatprep.subr.mxu0 0.0
    %2979 = vmatpush1.msra.mxu0 0.0
    %2980 = vmatprep.mubr.f32.mxu0 0.0
    %2981 = vmatmul.mubr.f32.gmra.mrb[0].mxu0 %v2839
    %v2982 = vpop.f32.mrb[0].mxu0
    %v2983 = vadd.f32 0.0, %v2982
    %v2984 = vpop.f32.mrb[0].mxu0
    %v2985 = vadd.f32 0.0, %v2984
    %2986 = vdwg.mxu0
    %v2987 = vadd.f32 %v2841, %v2912
    %v2988 = vadd.f32 %v2842, %v2914
    %v2989 = vadd.f32 %v2843, %v2983
    %v2990 = vadd.f32 %v2844, %v2985
    %v2991 = vxor.u32 %v2987, 2147483648
    %v2992 = vmul.f32 %v2991, 1.442695
    %v2993 = vpow.pop %v2992
    %v2994 = vadd.f32 %v2993, 1.0
    %v2995 = vrcp.pop %v2994
    %v2996 = vmul.f32 1.0, %v2995
    %v2997 = vxor.u32 %v2988, 2147483648
    %v2998 = vmul.f32 %v2997, 1.442695
    %v2999 = vpow.pop %v2998
    %v3000 = vadd.f32 %v2999, 1.0
    %v3001 = vrcp.pop %v3000
    %v3002 = vmul.f32 1.0, %v3001
    %v3003 = vtanh.pop %v2989
    %v3004 = vxor.u32 %v2990, 2147483648
    %v3005 = vmul.f32 %v3004, 1.442695
    %v3006 = vpow.pop %v3005
    %v3007 = vadd.f32 %v3006, 1.0
    %v3008 = vrcp.pop %v3007
    %v3009 = vmul.f32 1.0, %v3008
    %v3010 = vmul.f32 %v3002, %v2837
    %v3011 = vmul.f32 %v2996, %v3003
    %v3012 = vadd.f32 %v3010, %v3011
    %v3013 = vtanh.pop %v3012
    %v3014 = vmul.f32 %v3009, %v3013
    %3015 = vst [vmem:[%s1187] sm:$0xff] %v3014
    %v3016 = vld [vmem:[%s1189] sm:$0xff]
    %v3017 = vld [vmem:[%s1189 + $0x8] sm:$0xff]
    %v3018 = vld [vmem:[%s1189 + $0x10] sm:$0xff]
    %v3019 = vld [vmem:[%s1189 + $0x18] sm:$0xff]
    %3020 = vmatprep.subr.mxu0 %v1964
    %3021 = vmatpush1.msra.mxu0 %v1963
    %3022 = vmatprep.subr.mxu0 %v1968
    %3023 = vmatpush1.msra.mxu0 %v1967
    %3024 = vmatprep.subr.mxu0 %v1972
    %3025 = vmatpush1.msra.mxu0 %v1971
    %3026 = vmatprep.subr.mxu0 %v1976
    %3027 = vmatpush1.msra.mxu0 %v1975
    %3028 = vmatprep.subr.mxu0 %v1980
    %3029 = vmatpush1.msra.mxu0 %v1979
    %3030 = vmatprep.subr.mxu0 %v1984
    %3031 = vmatpush1.msra.mxu0 %v1983
    %3032 = vmatprep.subr.mxu0 %v1988
    %3033 = vmatpush1.msra.mxu0 %v1987
    %3034 = vmatprep.subr.mxu0 %v1992
    %3035 = vmatpush1.msra.mxu0 %v1991
    %3036 = vmatprep.subr.mxu0 %v1996
    %3037 = vmatpush1.msra.mxu0 %v1995
    %3038 = vmatprep.subr.mxu0 %v2000
    %3039 = vmatpush1.msra.mxu0 %v1999
    %3040 = vmatprep.subr.mxu0 %v2004
    %3041 = vmatpush1.msra.mxu0 %v2003
    %3042 = vmatprep.subr.mxu0 %v2008
    %3043 = vmatpush1.msra.mxu0 %v2007
    %3044 = vmatprep.subr.mxu0 %v2012
    %3045 = vmatpush1.msra.mxu0 %v2011
    %3046 = vmatprep.subr.mxu0 %v2016
    %3047 = vmatpush1.msra.mxu0 %v2015
    %3048 = vmatprep.subr.mxu0 %v2020
    %3049 = vmatpush1.msra.mxu0 %v2019
    %3050 = vmatprep.subr.mxu0 %v2024
    %3051 = vmatpush1.msra.mxu0 %v2023
    %3052 = vmatprep.subr.mxu0 0.0
    %3053 = vmatpush1.msra.mxu0 0.0
    %3054 = vmatprep.subr.mxu0 0.0
    %3055 = vmatpush1.msra.mxu0 0.0
    %3056 = vmatprep.subr.mxu0 0.0
    %3057 = vmatpush1.msra.mxu0 0.0
    %3058 = vmatprep.subr.mxu0 0.0
    %3059 = vmatpush1.msra.mxu0 0.0
    %3060 = vmatprep.subr.mxu0 0.0
    %3061 = vmatpush1.msra.mxu0 0.0
    %3062 = vmatprep.subr.mxu0 0.0
    %3063 = vmatpush1.msra.mxu0 0.0
    %3064 = vmatprep.subr.mxu0 0.0
    %3065 = vmatpush1.msra.mxu0 0.0
    %3066 = vmatprep.subr.mxu0 0.0
    %3067 = vmatpush1.msra.mxu0 0.0
    %3068 = vmatprep.subr.mxu0 0.0
    %3069 = vmatpush1.msra.mxu0 0.0
    %3070 = vmatprep.subr.mxu0 0.0
    %3071 = vmatpush1.msra.mxu0 0.0
    %3072 = vmatprep.subr.mxu0 0.0
    %3073 = vmatpush1.msra.mxu0 0.0
    %3074 = vmatprep.subr.mxu0 0.0
    %3075 = vmatpush1.msra.mxu0 0.0
    %3076 = vmatprep.subr.mxu0 0.0
    %3077 = vmatpush1.msra.mxu0 0.0
    %3078 = vmatprep.subr.mxu0 0.0
    %3079 = vmatpush1.msra.mxu0 0.0
    %3080 = vmatprep.subr.mxu0 0.0
    %3081 = vmatpush1.msra.mxu0 0.0
    %3082 = vmatprep.subr.mxu0 0.0
    %3083 = vmatpush1.msra.mxu0 0.0
    %3084 = vmatprep.mubr.f32.mxu0 0.0
    %3085 = vmatmul.mubr.f32.gmra.mrb[0].mxu0 %v3014
    %v3086 = vpop.f32.mrb[0].mxu0
    %v3087 = vadd.f32 0.0, %v3086
    %v3088 = vpop.f32.mrb[0].mxu0
    %v3089 = vadd.f32 0.0, %v3088
    %3090 = vdwg.mxu0
    %3091 = vmatprep.subr.mxu0 %v1966
    %3092 = vmatpush1.msra.mxu0 %v1965
    %3093 = vmatprep.subr.mxu0 %v1970
    %3094 = vmatpush1.msra.mxu0 %v1969
    %3095 = vmatprep.subr.mxu0 %v1974
    %3096 = vmatpush1.msra.mxu0 %v1973
    %3097 = vmatprep.subr.mxu0 %v1978
    %3098 = vmatpush1.msra.mxu0 %v1977
    %3099 = vmatprep.subr.mxu0 %v1982
    %3100 = vmatpush1.msra.mxu0 %v1981
    %3101 = vmatprep.subr.mxu0 %v1986
    %3102 = vmatpush1.msra.mxu0 %v1985
    %3103 = vmatprep.subr.mxu0 %v1990
    %3104 = vmatpush1.msra.mxu0 %v1989
    %3105 = vmatprep.subr.mxu0 %v1994
    %3106 = vmatpush1.msra.mxu0 %v1993
    %3107 = vmatprep.subr.mxu0 %v1998
    %3108 = vmatpush1.msra.mxu0 %v1997
    %3109 = vmatprep.subr.mxu0 %v2002
    %3110 = vmatpush1.msra.mxu0 %v2001
    %3111 = vmatprep.subr.mxu0 %v2006
    %3112 = vmatpush1.msra.mxu0 %v2005
    %3113 = vmatprep.subr.mxu0 %v2010
    %3114 = vmatpush1.msra.mxu0 %v2009
    %3115 = vmatprep.subr.mxu0 %v2014
    %3116 = vmatpush1.msra.mxu0 %v2013
    %3117 = vmatprep.subr.mxu0 %v2018
    %3118 = vmatpush1.msra.mxu0 %v2017
    %3119 = vmatprep.subr.mxu0 %v2022
    %3120 = vmatpush1.msra.mxu0 %v2021
    %3121 = vmatprep.subr.mxu0 %v2026
    %3122 = vmatpush1.msra.mxu0 %v2025
    %3123 = vmatprep.subr.mxu0 0.0
    %3124 = vmatpush1.msra.mxu0 0.0
    %3125 = vmatprep.subr.mxu0 0.0
    %3126 = vmatpush1.msra.mxu0 0.0
    %3127 = vmatprep.subr.mxu0 0.0
    %3128 = vmatpush1.msra.mxu0 0.0
    %3129 = vmatprep.subr.mxu0 0.0
    %3130 = vmatpush1.msra.mxu0 0.0
    %3131 = vmatprep.subr.mxu0 0.0
    %3132 = vmatpush1.msra.mxu0 0.0
    %3133 = vmatprep.subr.mxu0 0.0
    %3134 = vmatpush1.msra.mxu0 0.0
    %3135 = vmatprep.subr.mxu0 0.0
    %3136 = vmatpush1.msra.mxu0 0.0
    %3137 = vmatprep.subr.mxu0 0.0
    %3138 = vmatpush1.msra.mxu0 0.0
    %3139 = vmatprep.subr.mxu0 0.0
    %3140 = vmatpush1.msra.mxu0 0.0
    %3141 = vmatprep.subr.mxu0 0.0
    %3142 = vmatpush1.msra.mxu0 0.0
    %3143 = vmatprep.subr.mxu0 0.0
    %3144 = vmatpush1.msra.mxu0 0.0
    %3145 = vmatprep.subr.mxu0 0.0
    %3146 = vmatpush1.msra.mxu0 0.0
    %3147 = vmatprep.subr.mxu0 0.0
    %3148 = vmatpush1.msra.mxu0 0.0
    %3149 = vmatprep.subr.mxu0 0.0
    %3150 = vmatpush1.msra.mxu0 0.0
    %3151 = vmatprep.subr.mxu0 0.0
    %3152 = vmatpush1.msra.mxu0 0.0
    %3153 = vmatprep.subr.mxu0 0.0
    %3154 = vmatpush1.msra.mxu0 0.0
    %3155 = vmatprep.mubr.f32.mxu0 0.0
    %3156 = vmatmul.mubr.f32.gmra.mrb[0].mxu0 %v3014
    %v3157 = vpop.f32.mrb[0].mxu0
    %v3158 = vadd.f32 0.0, %v3157
    %v3159 = vpop.f32.mrb[0].mxu0
    %v3160 = vadd.f32 0.0, %v3159
    %3161 = vdwg.mxu0
    %v3162 = vadd.f32 %v3016, %v3087
    %v3163 = vadd.f32 %v3017, %v3089
    %v3164 = vadd.f32 %v3018, %v3158
    %v3165 = vadd.f32 %v3019, %v3160
    %v3166 = vxor.u32 %v3162, 2147483648
    %v3167 = vmul.f32 %v3166, 1.442695
    %v3168 = vpow.pop %v3167
    %v3169 = vadd.f32 %v3168, 1.0
    %v3170 = vrcp.pop %v3169
    %v3171 = vmul.f32 1.0, %v3170
    %v3172 = vxor.u32 %v3163, 2147483648
    %v3173 = vmul.f32 %v3172, 1.442695
    %v3174 = vpow.pop %v3173
    %v3175 = vadd.f32 %v3174, 1.0
    %v3176 = vrcp.pop %v3175
    %v3177 = vmul.f32 1.0, %v3176
    %v3178 = vtanh.pop %v3164
    %v3179 = vxor.u32 %v3165, 2147483648
    %v3180 = vmul.f32 %v3179, 1.442695
    %v3181 = vpow.pop %v3180
    %v3182 = vadd.f32 %v3181, 1.0
    %v3183 = vrcp.pop %v3182
    %v3184 = vmul.f32 1.0, %v3183
    %v3185 = vmul.f32 %v3177, %v3012
    %v3186 = vmul.f32 %v3171, %v3178
    %v3187 = vadd.f32 %v3185, %v3186
    %v3188 = vtanh.pop %v3187
    %v3189 = vmul.f32 %v3184, %v3188
    %3190 = vst [vmem:[%s1364] sm:$0xff] %v3189
    %v3191 = vld [vmem:[%s1366] sm:$0xff]
    %v3192 = vld [vmem:[%s1366 + $0x8] sm:$0xff]
    %v3193 = vld [vmem:[%s1366 + $0x10] sm:$0xff]
    %v3194 = vld [vmem:[%s1366 + $0x18] sm:$0xff]
    %3195 = vmatprep.subr.mxu0 %v1964
    %3196 = vmatpush1.msra.mxu0 %v1963
    %3197 = vmatprep.subr.mxu0 %v1968
    %3198 = vmatpush1.msra.mxu0 %v1967
    %3199 = vmatprep.subr.mxu0 %v1972
    %3200 = vmatpush1.msra.mxu0 %v1971
    %3201 = vmatprep.subr.mxu0 %v1976
    %3202 = vmatpush1.msra.mxu0 %v1975
    %3203 = vmatprep.subr.mxu0 %v1980
    %3204 = vmatpush1.msra.mxu0 %v1979
    %3205 = vmatprep.subr.mxu0 %v1984
    %3206 = vmatpush1.msra.mxu0 %v1983
    %3207 = vmatprep.subr.mxu0 %v1988
    %3208 = vmatpush1.msra.mxu0 %v1987
    %3209 = vmatprep.subr.mxu0 %v1992
    %3210 = vmatpush1.msra.mxu0 %v1991
    %3211 = vmatprep.subr.mxu0 %v1996
    %3212 = vmatpush1.msra.mxu0 %v1995
    %3213 = vmatprep.subr.mxu0 %v2000
    %3214 = vmatpush1.msra.mxu0 %v1999
    %3215 = vmatprep.subr.mxu0 %v2004
    %3216 = vmatpush1.msra.mxu0 %v2003
    %3217 = vmatprep.subr.mxu0 %v2008
    %3218 = vmatpush1.msra.mxu0 %v2007
    %3219 = vmatprep.subr.mxu0 %v2012
    %3220 = vmatpush1.msra.mxu0 %v2011
    %3221 = vmatprep.subr.mxu0 %v2016
    %3222 = vmatpush1.msra.mxu0 %v2015
    %3223 = vmatprep.subr.mxu0 %v2020
    %3224 = vmatpush1.msra.mxu0 %v2019
    %3225 = vmatprep.subr.mxu0 %v2024
    %3226 = vmatpush1.msra.mxu0 %v2023
    %3227 = vmatprep.subr.mxu0 0.0
    %3228 = vmatpush1.msra.mxu0 0.0
    %3229 = vmatprep.subr.mxu0 0.0
    %3230 = vmatpush1.msra.mxu0 0.0
    %3231 = vmatprep.subr.mxu0 0.0
    %3232 = vmatpush1.msra.mxu0 0.0
    %3233 = vmatprep.subr.mxu0 0.0
    %3234 = vmatpush1.msra.mxu0 0.0
    %3235 = vmatprep.subr.mxu0 0.0
    %3236 = vmatpush1.msra.mxu0 0.0
    %3237 = vmatprep.subr.mxu0 0.0
    %3238 = vmatpush1.msra.mxu0 0.0
    %3239 = vmatprep.subr.mxu0 0.0
    %3240 = vmatpush1.msra.mxu0 0.0
    %3241 = vmatprep.subr.mxu0 0.0
    %3242 = vmatpush1.msra.mxu0 0.0
    %3243 = vmatprep.subr.mxu0 0.0
    %3244 = vmatpush1.msra.mxu0 0.0
    %3245 = vmatprep.subr.mxu0 0.0
    %3246 = vmatpush1.msra.mxu0 0.0
    %3247 = vmatprep.subr.mxu0 0.0
    %3248 = vmatpush1.msra.mxu0 0.0
    %3249 = vmatprep.subr.mxu0 0.0
    %3250 = vmatpush1.msra.mxu0 0.0
    %3251 = vmatprep.subr.mxu0 0.0
    %3252 = vmatpush1.msra.mxu0 0.0
    %3253 = vmatprep.subr.mxu0 0.0
    %3254 = vmatpush1.msra.mxu0 0.0
    %3255 = vmatprep.subr.mxu0 0.0
    %3256 = vmatpush1.msra.mxu0 0.0
    %3257 = vmatprep.subr.mxu0 0.0
    %3258 = vmatpush1.msra.mxu0 0.0
    %3259 = vmatprep.mubr.f32.mxu0 0.0
    %3260 = vmatmul.mubr.f32.gmra.mrb[0].mxu0 %v3189
    %v3261 = vpop.f32.mrb[0].mxu0
    %v3262 = vadd.f32 0.0, %v3261
    %v3263 = vpop.f32.mrb[0].mxu0
    %v3264 = vadd.f32 0.0, %v3263
    %3265 = vdwg.mxu0
    %3266 = vmatprep.subr.mxu0 %v1966
    %3267 = vmatpush1.msra.mxu0 %v1965
    %3268 = vmatprep.subr.mxu0 %v1970
    %3269 = vmatpush1.msra.mxu0 %v1969
    %3270 = vmatprep.subr.mxu0 %v1974
    %3271 = vmatpush1.msra.mxu0 %v1973
    %3272 = vmatprep.subr.mxu0 %v1978
    %3273 = vmatpush1.msra.mxu0 %v1977
    %3274 = vmatprep.subr.mxu0 %v1982
    %3275 = vmatpush1.msra.mxu0 %v1981
    %3276 = vmatprep.subr.mxu0 %v1986
    %3277 = vmatpush1.msra.mxu0 %v1985
    %3278 = vmatprep.subr.mxu0 %v1990
    %3279 = vmatpush1.msra.mxu0 %v1989
    %3280 = vmatprep.subr.mxu0 %v1994
    %3281 = vmatpush1.msra.mxu0 %v1993
    %3282 = vmatprep.subr.mxu0 %v1998
    %3283 = vmatpush1.msra.mxu0 %v1997
    %3284 = vmatprep.subr.mxu0 %v2002
    %3285 = vmatpush1.msra.mxu0 %v2001
    %3286 = vmatprep.subr.mxu0 %v2006
    %3287 = vmatpush1.msra.mxu0 %v2005
    %3288 = vmatprep.subr.mxu0 %v2010
    %3289 = vmatpush1.msra.mxu0 %v2009
    %3290 = vmatprep.subr.mxu0 %v2014
    %3291 = vmatpush1.msra.mxu0 %v2013
    %3292 = vmatprep.subr.mxu0 %v2018
    %3293 = vmatpush1.msra.mxu0 %v2017
    %3294 = vmatprep.subr.mxu0 %v2022
    %3295 = vmatpush1.msra.mxu0 %v2021
    %3296 = vmatprep.subr.mxu0 %v2026
    %3297 = vmatpush1.msra.mxu0 %v2025
    %3298 = vmatprep.subr.mxu0 0.0
    %3299 = vmatpush1.msra.mxu0 0.0
    %3300 = vmatprep.subr.mxu0 0.0
    %3301 = vmatpush1.msra.mxu0 0.0
    %3302 = vmatprep.subr.mxu0 0.0
    %3303 = vmatpush1.msra.mxu0 0.0
    %3304 = vmatprep.subr.mxu0 0.0
    %3305 = vmatpush1.msra.mxu0 0.0
    %3306 = vmatprep.subr.mxu0 0.0
    %3307 = vmatpush1.msra.mxu0 0.0
    %3308 = vmatprep.subr.mxu0 0.0
    %3309 = vmatpush1.msra.mxu0 0.0
    %3310 = vmatprep.subr.mxu0 0.0
    %3311 = vmatpush1.msra.mxu0 0.0
    %3312 = vmatprep.subr.mxu0 0.0
    %3313 = vmatpush1.msra.mxu0 0.0
    %3314 = vmatprep.subr.mxu0 0.0
    %3315 = vmatpush1.msra.mxu0 0.0
    %3316 = vmatprep.subr.mxu0 0.0
    %3317 = vmatpush1.msra.mxu0 0.0
    %3318 = vmatprep.subr.mxu0 0.0
    %3319 = vmatpush1.msra.mxu0 0.0
    %3320 = vmatprep.subr.mxu0 0.0
    %3321 = vmatpush1.msra.mxu0 0.0
    %3322 = vmatprep.subr.mxu0 0.0
    %3323 = vmatpush1.msra.mxu0 0.0
    %3324 = vmatprep.subr.mxu0 0.0
    %3325 = vmatpush1.msra.mxu0 0.0
    %3326 = vmatprep.subr.mxu0 0.0
    %3327 = vmatpush1.msra.mxu0 0.0
    %3328 = vmatprep.subr.mxu0 0.0
    %3329 = vmatpush1.msra.mxu0 0.0
    %3330 = vmatprep.mubr.f32.mxu0 0.0
    %3331 = vmatmul.mubr.f32.gmra.mrb[0].mxu0 %v3189
    %v3332 = vpop.f32.mrb[0].mxu0
    %v3333 = vadd.f32 0.0, %v3332
    %v3334 = vpop.f32.mrb[0].mxu0
    %v3335 = vadd.f32 0.0, %v3334
    %3336 = vdwg.mxu0
    %v3337 = vadd.f32 %v3191, %v3262
    %v3338 = vadd.f32 %v3192, %v3264
    %v3339 = vadd.f32 %v3193, %v3333
    %v3340 = vadd.f32 %v3194, %v3335
    %v3341 = vxor.u32 %v3337, 2147483648
    %v3342 = vmul.f32 %v3341, 1.442695
    %v3343 = vpow.pop %v3342
    %v3344 = vadd.f32 %v3343, 1.0
    %v3345 = vrcp.pop %v3344
    %v3346 = vmul.f32 1.0, %v3345
    %v3347 = vxor.u32 %v3338, 2147483648
    %v3348 = vmul.f32 %v3347, 1.442695
    %v3349 = vpow.pop %v3348
    %v3350 = vadd.f32 %v3349, 1.0
    %v3351 = vrcp.pop %v3350
    %v3352 = vmul.f32 1.0, %v3351
    %v3353 = vtanh.pop %v3339
    %v3354 = vxor.u32 %v3340, 2147483648
    %v3355 = vmul.f32 %v3354, 1.442695
    %v3356 = vpow.pop %v3355
    %v3357 = vadd.f32 %v3356, 1.0
    %v3358 = vrcp.pop %v3357
    %v3359 = vmul.f32 1.0, %v3358
    %v3360 = vmul.f32 %v3352, %v3187
    %v3361 = vmul.f32 %v3346, %v3353
    %v3362 = vadd.f32 %v3360, %v3361
    %v3363 = vtanh.pop %v3362
    %v3364 = vmul.f32 %v3359, %v3363
    %3365 = vst [vmem:[%s1541] sm:$0xff] %v3364
    %v3366 = vld [vmem:[%s1543] sm:$0xff]
    %v3367 = vld [vmem:[%s1543 + $0x8] sm:$0xff]
    %v3368 = vld [vmem:[%s1543 + $0x10] sm:$0xff]
    %v3369 = vld [vmem:[%s1543 + $0x18] sm:$0xff]
    %3370 = vmatprep.subr.mxu0 %v1964
    %3371 = vmatpush1.msra.mxu0 %v1963
    %3372 = vmatprep.subr.mxu0 %v1968
    %3373 = vmatpush1.msra.mxu0 %v1967
    %3374 = vmatprep.subr.mxu0 %v1972
    %3375 = vmatpush1.msra.mxu0 %v1971
    %3376 = vmatprep.subr.mxu0 %v1976
    %3377 = vmatpush1.msra.mxu0 %v1975
    %3378 = vmatprep.subr.mxu0 %v1980
    %3379 = vmatpush1.msra.mxu0 %v1979
    %3380 = vmatprep.subr.mxu0 %v1984
    %3381 = vmatpush1.msra.mxu0 %v1983
    %3382 = vmatprep.subr.mxu0 %v1988
    %3383 = vmatpush1.msra.mxu0 %v1987
    %3384 = vmatprep.subr.mxu0 %v1992
    %3385 = vmatpush1.msra.mxu0 %v1991
    %3386 = vmatprep.subr.mxu0 %v1996
    %3387 = vmatpush1.msra.mxu0 %v1995
    %3388 = vmatprep.subr.mxu0 %v2000
    %3389 = vmatpush1.msra.mxu0 %v1999
    %3390 = vmatprep.subr.mxu0 %v2004
    %3391 = vmatpush1.msra.mxu0 %v2003
    %3392 = vmatprep.subr.mxu0 %v2008
    %3393 = vmatpush1.msra.mxu0 %v2007
    %3394 = vmatprep.subr.mxu0 %v2012
    %3395 = vmatpush1.msra.mxu0 %v2011
    %3396 = vmatprep.subr.mxu0 %v2016
    %3397 = vmatpush1.msra.mxu0 %v2015
    %3398 = vmatprep.subr.mxu0 %v2020
    %3399 = vmatpush1.msra.mxu0 %v2019
    %3400 = vmatprep.subr.mxu0 %v2024
    %3401 = vmatpush1.msra.mxu0 %v2023
    %3402 = vmatprep.subr.mxu0 0.0
    %3403 = vmatpush1.msra.mxu0 0.0
    %3404 = vmatprep.subr.mxu0 0.0
    %3405 = vmatpush1.msra.mxu0 0.0
    %3406 = vmatprep.subr.mxu0 0.0
    %3407 = vmatpush1.msra.mxu0 0.0
    %3408 = vmatprep.subr.mxu0 0.0
    %3409 = vmatpush1.msra.mxu0 0.0
    %3410 = vmatprep.subr.mxu0 0.0
    %3411 = vmatpush1.msra.mxu0 0.0
    %3412 = vmatprep.subr.mxu0 0.0
    %3413 = vmatpush1.msra.mxu0 0.0
    %3414 = vmatprep.subr.mxu0 0.0
    %3415 = vmatpush1.msra.mxu0 0.0
    %3416 = vmatprep.subr.mxu0 0.0
    %3417 = vmatpush1.msra.mxu0 0.0
    %3418 = vmatprep.subr.mxu0 0.0
    %3419 = vmatpush1.msra.mxu0 0.0
    %3420 = vmatprep.subr.mxu0 0.0
    %3421 = vmatpush1.msra.mxu0 0.0
    %3422 = vmatprep.subr.mxu0 0.0
    %3423 = vmatpush1.msra.mxu0 0.0
    %3424 = vmatprep.subr.mxu0 0.0
    %3425 = vmatpush1.msra.mxu0 0.0
    %3426 = vmatprep.subr.mxu0 0.0
    %3427 = vmatpush1.msra.mxu0 0.0
    %3428 = vmatprep.subr.mxu0 0.0
    %3429 = vmatpush1.msra.mxu0 0.0
    %3430 = vmatprep.subr.mxu0 0.0
    %3431 = vmatpush1.msra.mxu0 0.0
    %3432 = vmatprep.subr.mxu0 0.0
    %3433 = vmatpush1.msra.mxu0 0.0
    %3434 = vmatprep.mubr.f32.mxu0 0.0
    %3435 = vmatmul.mubr.f32.gmra.mrb[0].mxu0 %v3364
    %v3436 = vpop.f32.mrb[0].mxu0
    %v3437 = vadd.f32 0.0, %v3436
    %v3438 = vpop.f32.mrb[0].mxu0
    %v3439 = vadd.f32 0.0, %v3438
    %3440 = vdwg.mxu0
    %3441 = vmatprep.subr.mxu0 %v1966
    %3442 = vmatpush1.msra.mxu0 %v1965
    %3443 = vmatprep.subr.mxu0 %v1970
    %3444 = vmatpush1.msra.mxu0 %v1969
    %3445 = vmatprep.subr.mxu0 %v1974
    %3446 = vmatpush1.msra.mxu0 %v1973
    %3447 = vmatprep.subr.mxu0 %v1978
    %3448 = vmatpush1.msra.mxu0 %v1977
    %3449 = vmatprep.subr.mxu0 %v1982
    %3450 = vmatpush1.msra.mxu0 %v1981
    %3451 = vmatprep.subr.mxu0 %v1986
    %3452 = vmatpush1.msra.mxu0 %v1985
    %3453 = vmatprep.subr.mxu0 %v1990
    %3454 = vmatpush1.msra.mxu0 %v1989
    %3455 = vmatprep.subr.mxu0 %v1994
    %3456 = vmatpush1.msra.mxu0 %v1993
    %3457 = vmatprep.subr.mxu0 %v1998
    %3458 = vmatpush1.msra.mxu0 %v1997
    %3459 = vmatprep.subr.mxu0 %v2002
    %3460 = vmatpush1.msra.mxu0 %v2001
    %3461 = vmatprep.subr.mxu0 %v2006
    %3462 = vmatpush1.msra.mxu0 %v2005
    %3463 = vmatprep.subr.mxu0 %v2010
    %3464 = vmatpush1.msra.mxu0 %v2009
    %3465 = vmatprep.subr.mxu0 %v2014
    %3466 = vmatpush1.msra.mxu0 %v2013
    %3467 = vmatprep.subr.mxu0 %v2018
    %3468 = vmatpush1.msra.mxu0 %v2017
    %3469 = vmatprep.subr.mxu0 %v2022
    %3470 = vmatpush1.msra.mxu0 %v2021
    %3471 = vmatprep.subr.mxu0 %v2026
    %3472 = vmatpush1.msra.mxu0 %v2025
    %3473 = vmatprep.subr.mxu0 0.0
    %3474 = vmatpush1.msra.mxu0 0.0
    %3475 = vmatprep.subr.mxu0 0.0
    %3476 = vmatpush1.msra.mxu0 0.0
    %3477 = vmatprep.subr.mxu0 0.0
    %3478 = vmatpush1.msra.mxu0 0.0
    %3479 = vmatprep.subr.mxu0 0.0
    %3480 = vmatpush1.msra.mxu0 0.0
    %3481 = vmatprep.subr.mxu0 0.0
    %3482 = vmatpush1.msra.mxu0 0.0
    %3483 = vmatprep.subr.mxu0 0.0
    %3484 = vmatpush1.msra.mxu0 0.0
    %3485 = vmatprep.subr.mxu0 0.0
    %3486 = vmatpush1.msra.mxu0 0.0
    %3487 = vmatprep.subr.mxu0 0.0
    %3488 = vmatpush1.msra.mxu0 0.0
    %3489 = vmatprep.subr.mxu0 0.0
    %3490 = vmatpush1.msra.mxu0 0.0
    %3491 = vmatprep.subr.mxu0 0.0
    %3492 = vmatpush1.msra.mxu0 0.0
    %3493 = vmatprep.subr.mxu0 0.0
    %3494 = vmatpush1.msra.mxu0 0.0
    %3495 = vmatprep.subr.mxu0 0.0
    %3496 = vmatpush1.msra.mxu0 0.0
    %3497 = vmatprep.subr.mxu0 0.0
    %3498 = vmatpush1.msra.mxu0 0.0
    %3499 = vmatprep.subr.mxu0 0.0
    %3500 = vmatpush1.msra.mxu0 0.0
    %3501 = vmatprep.subr.mxu0 0.0
    %3502 = vmatpush1.msra.mxu0 0.0
    %3503 = vmatprep.subr.mxu0 0.0
    %3504 = vmatpush1.msra.mxu0 0.0
    %3505 = vmatprep.mubr.f32.mxu0 0.0
    %3506 = vmatmul.mubr.f32.gmra.mrb[0].mxu0 %v3364
    %v3507 = vpop.f32.mrb[0].mxu0
    %v3508 = vadd.f32 0.0, %v3507
    %v3509 = vpop.f32.mrb[0].mxu0
    %v3510 = vadd.f32 0.0, %v3509
    %3511 = vdwg.mxu0
    %v3512 = vadd.f32 %v3366, %v3437
    %v3513 = vadd.f32 %v3367, %v3439
    %v3514 = vadd.f32 %v3368, %v3508
    %v3515 = vadd.f32 %v3369, %v3510
    %v3516 = vxor.u32 %v3512, 2147483648
    %v3517 = vmul.f32 %v3516, 1.442695
    %v3518 = vpow.pop %v3517
    %v3519 = vadd.f32 %v3518, 1.0
    %v3520 = vrcp.pop %v3519
    %v3521 = vmul.f32 1.0, %v3520
    %v3522 = vxor.u32 %v3513, 2147483648
    %v3523 = vmul.f32 %v3522, 1.442695
    %v3524 = vpow.pop %v3523
    %v3525 = vadd.f32 %v3524, 1.0
    %v3526 = vrcp.pop %v3525
    %v3527 = vmul.f32 1.0, %v3526
    %v3528 = vtanh.pop %v3514
    %v3529 = vxor.u32 %v3515, 2147483648
    %v3530 = vmul.f32 %v3529, 1.442695
    %v3531 = vpow.pop %v3530
    %v3532 = vadd.f32 %v3531, 1.0
    %v3533 = vrcp.pop %v3532
    %v3534 = vmul.f32 1.0, %v3533
    %v3535 = vmul.f32 %v3527, %v3362
    %v3536 = vmul.f32 %v3521, %v3528
    %v3537 = vadd.f32 %v3535, %v3536
    %v3538 = vtanh.pop %v3537
    %v3539 = vmul.f32 %v3534, %v3538
    %3540 = vst [vmem:[%s1718] sm:$0xff] %v3539
    %v3541 = vld [vmem:[%s1720] sm:$0xff]
    %v3542 = vld [vmem:[%s1720 + $0x8] sm:$0xff]
    %v3543 = vld [vmem:[%s1720 + $0x10] sm:$0xff]
    %v3544 = vld [vmem:[%s1720 + $0x18] sm:$0xff]
    %3545 = vmatprep.subr.mxu0 %v1964
    %3546 = vmatpush1.msra.mxu0 %v1963
    %3547 = vmatprep.subr.mxu0 %v1968
    %3548 = vmatpush1.msra.mxu0 %v1967
    %3549 = vmatprep.subr.mxu0 %v1972
    %3550 = vmatpush1.msra.mxu0 %v1971
    %3551 = vmatprep.subr.mxu0 %v1976
    %3552 = vmatpush1.msra.mxu0 %v1975
    %3553 = vmatprep.subr.mxu0 %v1980
    %3554 = vmatpush1.msra.mxu0 %v1979
    %3555 = vmatprep.subr.mxu0 %v1984
    %3556 = vmatpush1.msra.mxu0 %v1983
    %3557 = vmatprep.subr.mxu0 %v1988
    %3558 = vmatpush1.msra.mxu0 %v1987
    %3559 = vmatprep.subr.mxu0 %v1992
    %3560 = vmatpush1.msra.mxu0 %v1991
    %3561 = vmatprep.subr.mxu0 %v1996
    %3562 = vmatpush1.msra.mxu0 %v1995
    %3563 = vmatprep.subr.mxu0 %v2000
    %3564 = vmatpush1.msra.mxu0 %v1999
    %3565 = vmatprep.subr.mxu0 %v2004
    %3566 = vmatpush1.msra.mxu0 %v2003
    %3567 = vmatprep.subr.mxu0 %v2008
    %3568 = vmatpush1.msra.mxu0 %v2007
    %3569 = vmatprep.subr.mxu0 %v2012
    %3570 = vmatpush1.msra.mxu0 %v2011
    %3571 = vmatprep.subr.mxu0 %v2016
    %3572 = vmatpush1.msra.mxu0 %v2015
    %3573 = vmatprep.subr.mxu0 %v2020
    %3574 = vmatpush1.msra.mxu0 %v2019
    %3575 = vmatprep.subr.mxu0 %v2024
    %3576 = vmatpush1.msra.mxu0 %v2023
    %3577 = vmatprep.subr.mxu0 0.0
    %3578 = vmatpush1.msra.mxu0 0.0
    %3579 = vmatprep.subr.mxu0 0.0
    %3580 = vmatpush1.msra.mxu0 0.0
    %3581 = vmatprep.subr.mxu0 0.0
    %3582 = vmatpush1.msra.mxu0 0.0
    %3583 = vmatprep.subr.mxu0 0.0
    %3584 = vmatpush1.msra.mxu0 0.0
    %3585 = vmatprep.subr.mxu0 0.0
    %3586 = vmatpush1.msra.mxu0 0.0
    %3587 = vmatprep.subr.mxu0 0.0
    %3588 = vmatpush1.msra.mxu0 0.0
    %3589 = vmatprep.subr.mxu0 0.0
    %3590 = vmatpush1.msra.mxu0 0.0
    %3591 = vmatprep.subr.mxu0 0.0
    %3592 = vmatpush1.msra.mxu0 0.0
    %3593 = vmatprep.subr.mxu0 0.0
    %3594 = vmatpush1.msra.mxu0 0.0
    %3595 = vmatprep.subr.mxu0 0.0
    %3596 = vmatpush1.msra.mxu0 0.0
    %3597 = vmatprep.subr.mxu0 0.0
    %3598 = vmatpush1.msra.mxu0 0.0
    %3599 = vmatprep.subr.mxu0 0.0
    %3600 = vmatpush1.msra.mxu0 0.0
    %3601 = vmatprep.subr.mxu0 0.0
    %3602 = vmatpush1.msra.mxu0 0.0
    %3603 = vmatprep.subr.mxu0 0.0
    %3604 = vmatpush1.msra.mxu0 0.0
    %3605 = vmatprep.subr.mxu0 0.0
    %3606 = vmatpush1.msra.mxu0 0.0
    %3607 = vmatprep.subr.mxu0 0.0
    %3608 = vmatpush1.msra.mxu0 0.0
    %3609 = vmatprep.mubr.f32.mxu0 0.0
    %3610 = vmatmul.mubr.f32.gmra.mrb[0].mxu0 %v3539
    %v3611 = vpop.f32.mrb[0].mxu0
    %v3612 = vadd.f32 0.0, %v3611
    %v3613 = vpop.f32.mrb[0].mxu0
    %v3614 = vadd.f32 0.0, %v3613
    %3615 = vdwg.mxu0
    %3616 = vmatprep.subr.mxu0 %v1966
    %3617 = vmatpush1.msra.mxu0 %v1965
    %3618 = vmatprep.subr.mxu0 %v1970
    %3619 = vmatpush1.msra.mxu0 %v1969
    %3620 = vmatprep.subr.mxu0 %v1974
    %3621 = vmatpush1.msra.mxu0 %v1973
    %3622 = vmatprep.subr.mxu0 %v1978
    %3623 = vmatpush1.msra.mxu0 %v1977
    %3624 = vmatprep.subr.mxu0 %v1982
    %3625 = vmatpush1.msra.mxu0 %v1981
    %3626 = vmatprep.subr.mxu0 %v1986
    %3627 = vmatpush1.msra.mxu0 %v1985
    %3628 = vmatprep.subr.mxu0 %v1990
    %3629 = vmatpush1.msra.mxu0 %v1989
    %3630 = vmatprep.subr.mxu0 %v1994
    %3631 = vmatpush1.msra.mxu0 %v1993
    %3632 = vmatprep.subr.mxu0 %v1998
    %3633 = vmatpush1.msra.mxu0 %v1997
    %3634 = vmatprep.subr.mxu0 %v2002
    %3635 = vmatpush1.msra.mxu0 %v2001
    %3636 = vmatprep.subr.mxu0 %v2006
    %3637 = vmatpush1.msra.mxu0 %v2005
    %3638 = vmatprep.subr.mxu0 %v2010
    %3639 = vmatpush1.msra.mxu0 %v2009
    %3640 = vmatprep.subr.mxu0 %v2014
    %3641 = vmatpush1.msra.mxu0 %v2013
    %3642 = vmatprep.subr.mxu0 %v2018
    %3643 = vmatpush1.msra.mxu0 %v2017
    %3644 = vmatprep.subr.mxu0 %v2022
    %3645 = vmatpush1.msra.mxu0 %v2021
    %3646 = vmatprep.subr.mxu0 %v2026
    %3647 = vmatpush1.msra.mxu0 %v2025
    %3648 = vmatprep.subr.mxu0 0.0
    %3649 = vmatpush1.msra.mxu0 0.0
    %3650 = vmatprep.subr.mxu0 0.0
    %3651 = vmatpush1.msra.mxu0 0.0
    %3652 = vmatprep.subr.mxu0 0.0
    %3653 = vmatpush1.msra.mxu0 0.0
    %3654 = vmatprep.subr.mxu0 0.0
    %3655 = vmatpush1.msra.mxu0 0.0
    %3656 = vmatprep.subr.mxu0 0.0
    %3657 = vmatpush1.msra.mxu0 0.0
    %3658 = vmatprep.subr.mxu0 0.0
    %3659 = vmatpush1.msra.mxu0 0.0
    %3660 = vmatprep.subr.mxu0 0.0
    %3661 = vmatpush1.msra.mxu0 0.0
    %3662 = vmatprep.subr.mxu0 0.0
    %3663 = vmatpush1.msra.mxu0 0.0
    %3664 = vmatprep.subr.mxu0 0.0
    %3665 = vmatpush1.msra.mxu0 0.0
    %3666 = vmatprep.subr.mxu0 0.0
    %3667 = vmatpush1.msra.mxu0 0.0
    %3668 = vmatprep.subr.mxu0 0.0
    %3669 = vmatpush1.msra.mxu0 0.0
    %3670 = vmatprep.subr.mxu0 0.0
    %3671 = vmatpush1.msra.mxu0 0.0
    %3672 = vmatprep.subr.mxu0 0.0
    %3673 = vmatpush1.msra.mxu0 0.0
    %3674 = vmatprep.subr.mxu0 0.0
    %3675 = vmatpush1.msra.mxu0 0.0
    %3676 = vmatprep.subr.mxu0 0.0
    %3677 = vmatpush1.msra.mxu0 0.0
    %3678 = vmatprep.subr.mxu0 0.0
    %3679 = vmatpush1.msra.mxu0 0.0
    %3680 = vmatprep.mubr.f32.mxu0 0.0
    %3681 = vmatmul.mubr.f32.gmra.mrb[0].mxu0 %v3539
    %v3682 = vpop.f32.mrb[0].mxu0
    %v3683 = vadd.f32 0.0, %v3682
    %v3684 = vpop.f32.mrb[0].mxu0
    %v3685 = vadd.f32 0.0, %v3684
    %3686 = vdwg.mxu0
    %v3687 = vadd.f32 %v3541, %v3612
    %v3688 = vadd.f32 %v3542, %v3614
    %v3689 = vadd.f32 %v3543, %v3683
    %v3690 = vadd.f32 %v3544, %v3685
    %v3691 = vxor.u32 %v3687, 2147483648
    %v3692 = vmul.f32 %v3691, 1.442695
    %v3693 = vpow.pop %v3692
    %v3694 = vadd.f32 %v3693, 1.0
    %v3695 = vrcp.pop %v3694
    %v3696 = vmul.f32 1.0, %v3695
    %v3697 = vxor.u32 %v3688, 2147483648
    %v3698 = vmul.f32 %v3697, 1.442695
    %v3699 = vpow.pop %v3698
    %v3700 = vadd.f32 %v3699, 1.0
    %v3701 = vrcp.pop %v3700
    %v3702 = vmul.f32 1.0, %v3701
    %v3703 = vtanh.pop %v3689
    %v3704 = vxor.u32 %v3690, 2147483648
    %v3705 = vmul.f32 %v3704, 1.442695
    %v3706 = vpow.pop %v3705
    %v3707 = vadd.f32 %v3706, 1.0
    %v3708 = vrcp.pop %v3707
    %v3709 = vmul.f32 1.0, %v3708
    %v3710 = vmul.f32 %v3702, %v3537
    %v3711 = vmul.f32 %v3696, %v3703
    %v3712 = vadd.f32 %v3710, %v3711
    %v3713 = vtanh.pop %v3712
    %v3714 = vmul.f32 %v3709, %v3713
    %3715 = vst [vmem:[%s1895] sm:$0xff] %v3714
    %v3716 = vld [vmem:[#allocation2] sm:$0xff]
    %v3717 = vld [vmem:[#allocation2 + $0x8] sm:$0xff]
    %v3718 = vld [vmem:[#allocation2 + $0x10] sm:$0xff]
    %v3719 = vld [vmem:[#allocation2 + $0x18] sm:$0xff]
    %v3720 = vld [vmem:[#allocation2 + $0x20] sm:$0xff]
    %v3721 = vld [vmem:[#allocation2 + $0x28] sm:$0xff]
    %v3722 = vld [vmem:[#allocation2 + $0x30] sm:$0xff]
    %v3723 = vld [vmem:[#allocation2 + $0x38] sm:$0xff]
    %v3724 = vld [vmem:[%s4] sm:$0xff]
    %v3725 = vld [vmem:[%s4 + $0x8] sm:$0xff]
    %v3726 = vld [vmem:[%s4 + $0x10] sm:$0xff]
    %v3727 = vld [vmem:[%s4 + $0x18] sm:$0xff]
    %v3728 = vld [vmem:[%s4 + $0x20] sm:$0xff]
    %v3729 = vld [vmem:[%s4 + $0x28] sm:$0xff]
    %v3730 = vld [vmem:[%s4 + $0x30] sm:$0xff]
    %v3731 = vld [vmem:[%s4 + $0x38] sm:$0xff]
    %v3732 = vld [vmem:[%s4 + $0x40] sm:$0xff]
    %v3733 = vld [vmem:[%s4 + $0x48] sm:$0xff]
    %v3734 = vld [vmem:[%s4 + $0x50] sm:$0xff]
    %v3735 = vld [vmem:[%s4 + $0x58] sm:$0xff]
    %v3736 = vld [vmem:[%s4 + $0x60] sm:$0xff]
    %v3737 = vld [vmem:[%s4 + $0x68] sm:$0xff]
    %v3738 = vld [vmem:[%s4 + $0x70] sm:$0xff]
    %v3739 = vld [vmem:[%s4 + $0x78] sm:$0xff]
    %v3740 = vld [vmem:[%s5] sm:$0x1]
    %v3742 = vlaneseq
    %v3743 = vshrl.u32 %v3742, 7
    %v3744 = vsub.s32 0, %v3743
    %v3745 = vrot.slane %v3740, %v3744
    %3747 = vmatprep.subr.mxu0 0.0
    %3748 = vmatpush1.msra.mxu0 %v3724
    %3749 = vmatprep.subr.mxu0 0.0
    %3750 = vmatpush1.msra.mxu0 %v3725
    %3751 = vmatprep.subr.mxu0 0.0
    %3752 = vmatpush1.msra.mxu0 %v3726
    %3753 = vmatprep.subr.mxu0 0.0
    %3754 = vmatpush1.msra.mxu0 %v3727
    %3755 = vmatprep.subr.mxu0 0.0
    %3756 = vmatpush1.msra.mxu0 %v3728
    %3757 = vmatprep.subr.mxu0 0.0
    %3758 = vmatpush1.msra.mxu0 %v3729
    %3759 = vmatprep.subr.mxu0 0.0
    %3760 = vmatpush1.msra.mxu0 %v3730
    %3761 = vmatprep.subr.mxu0 0.0
    %3762 = vmatpush1.msra.mxu0 %v3731
    %3763 = vmatprep.subr.mxu0 0.0
    %3764 = vmatpush1.msra.mxu0 %v3732
    %3765 = vmatprep.subr.mxu0 0.0
    %3766 = vmatpush1.msra.mxu0 %v3733
    %3767 = vmatprep.subr.mxu0 0.0
    %3768 = vmatpush1.msra.mxu0 %v3734
    %3769 = vmatprep.subr.mxu0 0.0
    %3770 = vmatpush1.msra.mxu0 %v3735
    %3771 = vmatprep.subr.mxu0 0.0
    %3772 = vmatpush1.msra.mxu0 %v3736
    %3773 = vmatprep.subr.mxu0 0.0
    %3774 = vmatpush1.msra.mxu0 %v3737
    %3775 = vmatprep.subr.mxu0 0.0
    %3776 = vmatpush1.msra.mxu0 %v3738
    %3777 = vmatprep.subr.mxu0 0.0
    %3778 = vmatpush1.msra.mxu0 %v3739
    %3779 = vmatprep.subr.mxu0 0.0
    %3780 = vmatpush1.msra.mxu0 0.0
    %3781 = vmatprep.subr.mxu0 0.0
    %3782 = vmatpush1.msra.mxu0 0.0
    %3783 = vmatprep.subr.mxu0 0.0
    %3784 = vmatpush1.msra.mxu0 0.0
    %3785 = vmatprep.subr.mxu0 0.0
    %3786 = vmatpush1.msra.mxu0 0.0
    %3787 = vmatprep.subr.mxu0 0.0
    %3788 = vmatpush1.msra.mxu0 0.0
    %3789 = vmatprep.subr.mxu0 0.0
    %3790 = vmatpush1.msra.mxu0 0.0
    %3791 = vmatprep.subr.mxu0 0.0
    %3792 = vmatpush1.msra.mxu0 0.0
    %3793 = vmatprep.subr.mxu0 0.0
    %3794 = vmatpush1.msra.mxu0 0.0
    %3795 = vmatprep.subr.mxu0 0.0
    %3796 = vmatpush1.msra.mxu0 0.0
    %3797 = vmatprep.subr.mxu0 0.0
    %3798 = vmatpush1.msra.mxu0 0.0
    %3799 = vmatprep.subr.mxu0 0.0
    %3800 = vmatpush1.msra.mxu0 0.0
    %3801 = vmatprep.subr.mxu0 0.0
    %3802 = vmatpush1.msra.mxu0 0.0
    %3803 = vmatprep.subr.mxu0 0.0
    %3804 = vmatpush1.msra.mxu0 0.0
    %3805 = vmatprep.subr.mxu0 0.0
    %3806 = vmatpush1.msra.mxu0 0.0
    %3807 = vmatprep.subr.mxu0 0.0
    %3808 = vmatpush1.msra.mxu0 0.0
    %3809 = vmatprep.subr.mxu0 0.0
    %3810 = vmatpush1.msra.mxu0 0.0
    %3811 = vmatprep.mubr.f32.mxu0 0.0
    %3812 = vmatmul.mubr.f32.gmra.mrb[0].mxu0 %v3716
    %v3813 = vpop.f32.mrb[0].mxu0
    %v3814 = vadd.f32 %v3745, %v3813
    %v3815 = vpop.f32.mrb[0].mxu0
    %3816 = vmatprep.mubr.f32.mxu0 0.0
    %3817 = vmatmul.mubr.f32.gmra.mrb[0].mxu0 %v3717
    %v3818 = vpop.f32.mrb[0].mxu0
    %v3819 = vadd.f32 %v3745, %v3818
    %v3820 = vpop.f32.mrb[0].mxu0
    %3821 = vmatprep.mubr.f32.mxu0 0.0
    %3822 = vmatmul.mubr.f32.gmra.mrb[0].mxu0 %v3718
    %v3823 = vpop.f32.mrb[0].mxu0
    %v3824 = vadd.f32 %v3745, %v3823
    %v3825 = vpop.f32.mrb[0].mxu0
    %3826 = vmatprep.mubr.f32.mxu0 0.0
    %3827 = vmatmul.mubr.f32.gmra.mrb[0].mxu0 %v3719
    %v3828 = vpop.f32.mrb[0].mxu0
    %v3829 = vadd.f32 %v3745, %v3828
    %v3830 = vpop.f32.mrb[0].mxu0
    %3831 = vmatprep.mubr.f32.mxu0 0.0
    %3832 = vmatmul.mubr.f32.gmra.mrb[0].mxu0 %v3720
    %v3833 = vpop.f32.mrb[0].mxu0
    %v3834 = vadd.f32 %v3745, %v3833
    %v3835 = vpop.f32.mrb[0].mxu0
    %3836 = vmatprep.mubr.f32.mxu0 0.0
    %3837 = vmatmul.mubr.f32.gmra.mrb[0].mxu0 %v3721
    %v3838 = vpop.f32.mrb[0].mxu0
    %v3839 = vadd.f32 %v3745, %v3838
    %v3840 = vpop.f32.mrb[0].mxu0
    %3841 = vmatprep.mubr.f32.mxu0 0.0
    %3842 = vmatmul.mubr.f32.gmra.mrb[0].mxu0 %v3722
    %v3843 = vpop.f32.mrb[0].mxu0
    %v3844 = vadd.f32 %v3745, %v3843
    %v3845 = vpop.f32.mrb[0].mxu0
    %3846 = vmatprep.mubr.f32.mxu0 0.0
    %3847 = vmatmul.mubr.f32.gmra.mrb[0].mxu0 %v3723
    %v3848 = vpop.f32.mrb[0].mxu0
    %v3849 = vadd.f32 %v3745, %v3848
    %v3850 = vpop.f32.mrb[0].mxu0
    %3851 = vdwg.mxu0
    %3852 = vst [vmem:[%s6] sm:$0xff] %v3814
    %3853 = vst [vmem:[%s6 + $0x8] sm:$0xff] %v3819
    %3854 = vst [vmem:[%s6 + $0x10] sm:$0xff] %v3824
    %3855 = vst [vmem:[%s6 + $0x18] sm:$0xff] %v3829
    %3856 = vst [vmem:[%s6 + $0x20] sm:$0xff] %v3834
    %3857 = vst [vmem:[%s6 + $0x28] sm:$0xff] %v3839
    %3858 = vst [vmem:[%s6 + $0x30] sm:$0xff] %v3844
    %3859 = vst [vmem:[%s6 + $0x38] sm:$0xff] %v3849
    // Predicated region
    $region34: #{decoder_forward.1} parent=1 // pred_check
      _
    $region35: #{decoder_forward.1} parent=1 // pred_check_branch
      %3861 = sbr.rel (0) target = $region37
    $region36: #{decoder_forward.1} parent=1 // pred_region
      _
    $region37: #{decoder_forward.1} parent=1 // pred_fallthru
      _
    // Predicated region
    $region38: #{decoder_forward.1} parent=1 // pred_check
      _
    $region39: #{decoder_forward.1} parent=1 // pred_check_branch
      %3863 = sbr.rel (0) target = $region41
    $region40: #{decoder_forward.1} parent=1 // pred_region
      _
    $region41: #{decoder_forward.1} parent=1 // pred_fallthru
      _
    %3864 = vsyncpa [#allocation5], 1
    %3865 = vsyncpa [#allocation7], 1

</llo_original>
